<compile_context>
chip_gen: v7x
topology: tpu7x:2x2x1
jax: 0.10.0
libtpu: 0.0.40
codegen_flags: <defaults>
</compile_context>

<pallas_src>
import functools
import math

import jax
import jax.numpy as jnp
from jax.experimental import pallas as pl
from jax.experimental.pallas import tpu as pltpu

# Matmul operand dtype (accumulation is always f32 via preferred_element_type).
_MM_DTYPE = jnp.bfloat16

# Whether single-buffered weight BlockSpecs (pipeline_mode=pl.Buffered(1)) are
# usable with the installed jax; flipped to False on first failure.
_WEIGHT_SINGLE_BUFFER = [True]


# ----------------------------- in-kernel helpers ----------------------------


def _dot(a, b):
    """MXU matmul with bf16 operands and f32 accumulation."""
    return jax.lax.dot_general(
        a.astype(_MM_DTYPE), b.astype(_MM_DTYPE),
        (((1,), (0,)), ((), ())), preferred_element_type=jnp.float32)


def _mha(q, k, v, wo, bo, *, n_head, mask):
    """Multi-head attention including the output projection.

    q: (Sq, D), k/v: (Sk, D).  Instead of concatenating per-head outputs along
    the lane dim, each head's attention output is accumulated directly through
    the matching dh rows of W_o:
        out = sum_h softmax(q_h k_h^T / sqrt(dh)) v_h @ W_o[h*dh:(h+1)*dh] + b_o
    which is algebraically identical (same FLOPs, no lane concat).  The K
    transpose is hoisted out of the head loop (one XLU transpose per call).
    """
    sq, d_model = q.shape
    dh = d_model // n_head
    scale = 1.0 / math.sqrt(dh)
    kt = k.astype(_MM_DTYPE).T                       # (D, Sk): single transpose
    acc = jnp.zeros((sq, d_model), jnp.float32)
    for h in range(n_head):
        sl = slice(h * dh, (h + 1) * dh)
        s = _dot(q[:, sl], kt[sl, :]) * scale        # (Sq, Sk) f32
        if mask is not None:
            s = jnp.where(mask, s, -1e9)
        s = s - jnp.max(s, axis=-1, keepdims=True)
        p = jnp.exp(s)
        p = p * pl.reciprocal(jnp.sum(p, axis=-1, keepdims=True), approx=True)
        o_h = _dot(p, v[:, sl])                      # (Sq, dh) f32
        acc = acc + _dot(o_h, wo[sl, :])             # (Sq, D)  f32
    return acc + bo


def _add_layernorm(x, y, g, b, eps):
    """LayerNorm(x + y) over the last dim; all math in f32."""
    h = x + y
    mu = jnp.mean(h, axis=-1, keepdims=True)
    var = jnp.mean(jnp.square(h - mu), axis=-1, keepdims=True)
    return (h - mu) * jax.lax.rsqrt(var + eps) * g + b


# ------------------------------ stack kernels -------------------------------


def _encoder_stack_kernel(x_ref, wqkv_ref, bqkv_ref, wo_ref, bo_ref,
                          ln1g_ref, ln1b_ref, w1_ref, b1_ref, w2_ref, b2_ref,
                          ln2g_ref, ln2b_ref, out_ref, *, n_head, eps):
    # Layer carry: out_ref (same block across the layer axis) holds the running
    # activations; seed it from the input on the first layer.
    @pl.when(pl.program_id(1) == 0)
    def _():
        out_ref[...] = x_ref[...]

    x = out_ref[...].astype(jnp.float32)             # (S, D)
    d_model = x.shape[-1]

    # --- self-attention (fused QKV, unmasked) + residual + LayerNorm ---------
    qkv = _dot(x, wqkv_ref[...]) + bqkv_ref[...]
    a = _mha(qkv[:, :d_model], qkv[:, d_model:2 * d_model],
             qkv[:, 2 * d_model:], wo_ref[...], bo_ref[...],
             n_head=n_head, mask=None)
    x = _add_layernorm(x, a, ln1g_ref[...], ln1b_ref[...], eps)

    # --- feed-forward (hidden never leaves VMEM) + residual + LayerNorm ------
    h = jnp.maximum(_dot(x, w1_ref[...]) + b1_ref[...], 0.0)
    f = _dot(h, w2_ref[...]) + b2_ref[...]
    x = _add_layernorm(x, f, ln2g_ref[...], ln2b_ref[...], eps)

    out_ref[...] = x.astype(out_ref.dtype)


def _decoder_stack_kernel(*refs, n_head, eps, has_mask, causal):
    trg_ref, mem_ref = refs[0], refs[1]
    mask_ref = refs[2] if has_mask else None
    w_off = 3 if has_mask else 2
    (sa_wqkv, sa_bqkv, sa_wo, sa_bo, ln1g, ln1b,
     ca_wq, ca_bq, ca_wkv, ca_bkv, ca_wo, ca_bo, ln2g, ln2b,
     w1, b1, w2, b2, ln3g, ln3b) = refs[w_off:w_off + 20]
    out_ref = refs[w_off + 20]          # output (layer carry)
    kv_ref = refs[w_off + 21]           # VMEM scratch: cached cross-attn K/V

    d_model = sa_wo.shape[0]

    # Layer-0 prologue: seed the activation carry AND cache the layer-invariant
    # cross-attention K/V projection of the encoder memory (weights shared
    # across layers, mem layer-invariant -> identical for every layer).
    @pl.when(pl.program_id(1) == 0)
    def _():
        out_ref[...] = trg_ref[...]
        mem = mem_ref[...].astype(jnp.float32)       # (S_src, D)
        kv_ref[...] = (_dot(mem, ca_wkv[...]) + ca_bkv[...]).astype(kv_ref.dtype)

    x = out_ref[...].astype(jnp.float32)             # (S_trg, D)
    s_trg = x.shape[0]

    if has_mask:
        mask = mask_ref[0] > 0                       # streamed bf16 mask
    elif causal:
        rows = jax.lax.broadcasted_iota(jnp.int32, (s_trg, s_trg), 0)
        cols = jax.lax.broadcasted_iota(jnp.int32, (s_trg, s_trg), 1)
        mask = rows >= cols                          # generated in-kernel
    else:
        mask = None

    # --- self-attention (fused QKV) + residual + LayerNorm -------------------
    qkv = _dot(x, sa_wqkv[...]) + sa_bqkv[...]
    a = _mha(qkv[:, :d_model], qkv[:, d_model:2 * d_model],
             qkv[:, 2 * d_model:], sa_wo[...], sa_bo[...],
             n_head=n_head, mask=mask)
    x = _add_layernorm(x, a, ln1g[...], ln1b[...], eps)

    # --- cross-attention over the cached encoder K/V -------------------------
    q = _dot(x, ca_wq[...]) + ca_bq[...]
    kv = kv_ref[...]
    a = _mha(q, kv[:, :d_model], kv[:, d_model:], ca_wo[...], ca_bo[...],
             n_head=n_head, mask=None)
    x = _add_layernorm(x, a, ln2g[...], ln2b[...], eps)

    # --- feed-forward + residual + LayerNorm ---------------------------------
    h = jnp.maximum(_dot(x, w1[...]) + b1[...], 0.0)
    f = _dot(h, w2[...]) + b2[...]
    x = _add_layernorm(x, f, ln3g[...], ln3b[...], eps)

    out_ref[...] = x.astype(out_ref.dtype)


# ------------------------------ stack wrappers -------------------------------


def _const_spec(shape, single_buffer):
    """BlockSpec for a weight-stationary operand (same block at every step)."""
    index_map = lambda b, l: (0,) * len(shape)
    if single_buffer:
        # One resident copy instead of the default double buffer.
        return pl.BlockSpec(shape, index_map, pipeline_mode=pl.Buffered(1))
    return pl.BlockSpec(shape, index_map)


def _vmem_limit_bytes(weight_bytes, act_bytes):
    """Scoped VMEM limit: weights (<=2 buffers) + activations + headroom."""
    est = 2 * weight_bytes + 8 * act_bytes + (4 << 20)
    return int(max(16 << 20, min(est, 64 << 20)))


def _fuse_qkv(p):
    wqkv = jnp.concatenate([p["wq"], p["wk"], p["wv"]], axis=1)
    bqkv = jnp.concatenate([p["bq"], p["bk"], p["bv"]], axis=0)
    return wqkv, bqkv


def encoder_stack(x, p, num_layers, n_head, eps=1e-5,
                  single_buffer_weights=True):
    """Apply the (shared-parameter) encoder layer `num_layers` times."""
    B, S, D = x.shape
    d_filter = p["ffn"]["w1"].shape[1]
    wqkv, bqkv = _fuse_qkv(p["attn"])
    weights = [
        wqkv.astype(_MM_DTYPE), bqkv.reshape(1, 3 * D),
        p["attn"]["wo"].astype(_MM_DTYPE), p["attn"]["bo"].reshape(1, D),
        p["ln1_g"].reshape(1, D), p["ln1_b"].reshape(1, D),
        p["ffn"]["w1"].astype(_MM_DTYPE), p["ffn"]["b1"].reshape(1, d_filter),
        p["ffn"]["w2"].astype(_MM_DTYPE), p["ffn"]["b2"].reshape(1, D),
        p["ln2_g"].reshape(1, D), p["ln2_b"].reshape(1, D),
    ]
    weight_bytes = sum(int(w.size) * w.dtype.itemsize for w in weights)
    act_bytes = (S * D + S * 3 * D + S * d_filter + S * S) * 4
    flops = B * num_layers * (8 * S * D * D + 4 * S * S * D + 4 * S * D * d_filter)
    transcendentals = B * num_layers * (n_head * S * S + 8 * S)
    bytes_accessed = 2 * B * S * D * x.dtype.itemsize + weight_bytes

    out = pl.pallas_call(
        functools.partial(_encoder_stack_kernel, n_head=n_head, eps=eps),
        out_shape=jax.ShapeDtypeStruct((B * S, D), x.dtype),
        grid=(B, num_layers),
        in_specs=[pl.BlockSpec((S, D), lambda b, l: (b, 0))]
                 + [_const_spec(w.shape, single_buffer_weights) for w in weights],
        out_specs=pl.BlockSpec((S, D), lambda b, l: (b, 0)),
        compiler_params=pltpu.CompilerParams(
            dimension_semantics=("parallel", "arbitrary"),
            vmem_limit_bytes=_vmem_limit_bytes(weight_bytes, act_bytes)),
        cost_estimate=pl.CostEstimate(flops=int(flops),
                                      transcendentals=int(transcendentals),
                                      bytes_accessed=int(bytes_accessed)),
    )(x.reshape(B * S, D), *weights)
    return out.reshape(B, S, D)


def decoder_stack(trg, mem, p, num_layers, n_head, target_mask=None,
                  causal=False, eps=1e-5, single_buffer_weights=True):
    """Apply the (shared-parameter) decoder layer `num_layers` times."""
    B, S_t, D = trg.shape
    S_s = mem.shape[1]
    d_filter = p["ffn"]["w1"].shape[1]
    sa_wqkv, sa_bqkv = _fuse_qkv(p["self_attn"])
    ca_wkv = jnp.concatenate([p["cross_attn"]["wk"], p["cross_attn"]["wv"]], axis=1)
    ca_bkv = jnp.concatenate([p["cross_attn"]["bk"], p["cross_attn"]["bv"]], axis=0)
    weights = [
        sa_wqkv.astype(_MM_DTYPE), sa_bqkv.reshape(1, 3 * D),
        p["self_attn"]["wo"].astype(_MM_DTYPE), p["self_attn"]["bo"].reshape(1, D),
        p["ln1_g"].reshape(1, D), p["ln1_b"].reshape(1, D),
        p["cross_attn"]["wq"].astype(_MM_DTYPE), p["cross_attn"]["bq"].reshape(1, D),
        ca_wkv.astype(_MM_DTYPE), ca_bkv.reshape(1, 2 * D),
        p["cross_attn"]["wo"].astype(_MM_DTYPE), p["cross_attn"]["bo"].reshape(1, D),
        p["ln2_g"].reshape(1, D), p["ln2_b"].reshape(1, D),
        p["ffn"]["w1"].astype(_MM_DTYPE), p["ffn"]["b1"].reshape(1, d_filter),
        p["ffn"]["w2"].astype(_MM_DTYPE), p["ffn"]["b2"].reshape(1, D),
        p["ln3_g"].reshape(1, D), p["ln3_b"].reshape(1, D),
    ]
    has_mask = target_mask is not None
    inputs = [trg.reshape(B * S_t, D), mem.reshape(B * S_s, D)]
    in_specs = [pl.BlockSpec((S_t, D), lambda b, l: (b, 0)),
                pl.BlockSpec((S_s, D), lambda b, l: (b, 0))]
    mask_bytes = 0
    if has_mask:
        m = target_mask
        if m.ndim == 4:               # accept [B, 1, S_t, S_t]
            m = m[:, 0]
        # Arbitrary masks are streamed as bf16 (not f32); causal masks should
        # use causal=True instead (generated in-kernel, nothing streamed).
        m = m.astype(jnp.bfloat16)    # (B, S_t, S_t); compared > 0 in-kernel
        inputs.append(m)
        in_specs.append(pl.BlockSpec((1, S_t, S_t), lambda b, l: (b, 0, 0)))
        mask_bytes = B * S_t * S_t * 2
    in_specs += [_const_spec(w.shape, single_buffer_weights) for w in weights]

    weight_bytes = sum(int(w.size) * w.dtype.itemsize for w in weights)
    act_bytes = (S_t * D + S_s * D + S_t * 3 * D + S_t * d_filter
                 + S_s * 2 * D + S_t * S_t) * 4
    flops = B * (num_layers * (12 * S_t * D * D + 4 * S_t * S_t * D
                               + 4 * S_t * S_s * D + 4 * S_t * D * d_filter)
                 + 4 * S_s * D * D)
    transcendentals = B * num_layers * (n_head * (S_t * S_t + S_t * S_s)
                                        + 12 * S_t)
    bytes_accessed = (B * (2 * S_t + S_s) * D * trg.dtype.itemsize
                      + weight_bytes + mask_bytes)

    out = pl.pallas_call(
        functools.partial(_decoder_stack_kernel, n_head=n_head, eps=eps,
                          has_mask=has_mask, causal=causal),
        out_shape=jax.ShapeDtypeStruct((B * S_t, D), trg.dtype),
        grid=(B, num_layers),
        in_specs=in_specs,
        out_specs=pl.BlockSpec((S_t, D), lambda b, l: (b, 0)),
        scratch_shapes=[pltpu.VMEM((S_s, 2 * D), _MM_DTYPE)],  # cached cross K/V
        compiler_params=pltpu.CompilerParams(
            dimension_semantics=("parallel", "arbitrary"),
            vmem_limit_bytes=_vmem_limit_bytes(weight_bytes, act_bytes)),
        cost_estimate=pl.CostEstimate(flops=int(flops),
                                      transcendentals=int(transcendentals),
                                      bytes_accessed=int(bytes_accessed)),
    )(*inputs, *weights)
    return out.reshape(B, S_t, D)


def transformer_core(params, src, trg, mask=None, causal=False,
                     num_encoder_layers=2, num_decoder_layers=2):
    """Pallas forward pass of TransformerCore.

    `mask` is an explicit decoder self-attention mask ([B, S_t, S_t] or
    [B, 1, S_t, S_t], nonzero = attend); `causal=True` generates a causal mask
    in-kernel instead (nothing streamed from HBM).  If both are given the
    explicit mask wins.
    """
    n_head = params["n_head"]
    last_err = None
    options = (True, False) if _WEIGHT_SINGLE_BUFFER[0] else (False,)
    for single_buffer in options:
        try:
            mem = encoder_stack(src, params["enc"], num_encoder_layers, n_head,
                                single_buffer_weights=single_buffer)
            out = decoder_stack(trg, mem, params["dec"], num_decoder_layers,
                                n_head, target_mask=mask, causal=causal,
                                single_buffer_weights=single_buffer)
            return jax.block_until_ready(out)
        except Exception as err:  # e.g. jax without BlockSpec.pipeline_mode
            last_err = err
            _WEIGHT_SINGLE_BUFFER[0] = False
    raise last_err


# --------------------------- pure-JAX f32 reference --------------------------


def _ref_mha(p, n_head, xq, xkv, mask=None):
    B, Sq, D = xq.shape
    Sk = xkv.shape[1]
    dh = D // n_head
    q = (xq @ p["wq"] + p["bq"]).reshape(B, Sq, n_head, dh).transpose(0, 2, 1, 3)
    k = (xkv @ p["wk"] + p["bk"]).reshape(B, Sk, n_head, dh).transpose(0, 2, 1, 3)
    v = (xkv @ p["wv"] + p["bv"]).reshape(B, Sk, n_head, dh).transpose(0, 2, 1, 3)
    s = jnp.einsum("bhqd,bhkd->bhqk", q, k) / math.sqrt(dh)
    if mask is not None:
        s = jnp.where(mask[:, None] > 0, s, -1e9)
    a = jax.nn.softmax(s, axis=-1)
    o = jnp.einsum("bhqk,bhkd->bhqd", a, v).transpose(0, 2, 1, 3).reshape(B, Sq, D)
    return o @ p["wo"] + p["bo"]


def _ref_ln(x, g, b, eps=1e-5):
    mu = x.mean(-1, keepdims=True)
    var = ((x - mu) ** 2).mean(-1, keepdims=True)
    return (x - mu) * jax.lax.rsqrt(var + eps) * g + b


def _ref_ffn(p, x):
    return jnp.maximum(x @ p["w1"] + p["b1"], 0.0) @ p["w2"] + p["b2"]


def transformer_core_reference(params, src, trg, mask=None,
                               num_encoder_layers=2, num_decoder_layers=2):
    n_head, enc, dec = params["n_head"], params["enc"], params["dec"]
    for _ in range(num_encoder_layers):
        src = _ref_ln(src + _ref_mha(enc["attn"], n_head, src, src, None),
                      enc["ln1_g"], enc["ln1_b"])
        src = _ref_ln(src + _ref_ffn(enc["ffn"], src), enc["ln2_g"], enc["ln2_b"])
    for _ in range(num_decoder_layers):
        trg = _ref_ln(trg + _ref_mha(dec["self_attn"], n_head, trg, trg, mask),
                      dec["ln1_g"], dec["ln1_b"])
        trg = _ref_ln(trg + _ref_mha(dec["cross_attn"], n_head, trg, src, None),
                      dec["ln2_g"], dec["ln2_b"])
        trg = _ref_ln(trg + _ref_ffn(dec["ffn"], trg), dec["ln3_g"], dec["ln3_b"])
    return trg


# -------------------------------- param init ---------------------------------


def _init_linear(key, d_in, d_out):
    kw, kb = jax.random.split(key)
    bound = 1.0 / math.sqrt(d_in)
    w = jax.random.uniform(kw, (d_in, d_out), jnp.float32, -bound, bound)
    b = jax.random.uniform(kb, (d_out,), jnp.float32, -bound, bound)
    return w, b


def _init_mha(key, d_model):
    ks = jax.random.split(key, 4)
    wq, bq = _init_linear(ks[0], d_model, d_model)
    wk, bk = _init_linear(ks[1], d_model, d_model)
    wv, bv = _init_linear(ks[2], d_model, d_model)
    wo, bo = _init_linear(ks[3], d_model, d_model)
    return dict(wq=wq, bq=bq, wk=wk, bk=bk, wv=wv, bv=bv, wo=wo, bo=bo)


def _init_ffn(key, d_model, d_filter):
    k1, k2 = jax.random.split(key)
    w1, b1 = _init_linear(k1, d_model, d_filter)
    w2, b2 = _init_linear(k2, d_filter, d_model)
    return dict(w1=w1, b1=b1, w2=w2, b2=b2)


def init_params(key, n_head, d_model, d_filter):
    ke, kd = jax.random.split(key)
    ke1, ke2 = jax.random.split(ke)
    kd1, kd2, kd3 = jax.random.split(kd, 3)
    ones = jnp.ones((d_model,), jnp.float32)
    zeros = jnp.zeros((d_model,), jnp.float32)
    enc = dict(attn=_init_mha(ke1, d_model), ffn=_init_ffn(ke2, d_model, d_filter),
               ln1_g=ones, ln1_b=zeros, ln2_g=ones, ln2_b=zeros)
    dec = dict(self_attn=_init_mha(kd1, d_model), cross_attn=_init_mha(kd2, d_model),
               ffn=_init_ffn(kd3, d_model, d_filter),
               ln1_g=ones, ln1_b=zeros, ln2_g=ones, ln2_b=zeros,
               ln3_g=ones, ln3_b=zeros)
    return dict(n_head=n_head, enc=enc, dec=dec)


# ----------------------------------- main -------------------------------------


if __name__ == "__main__":
    n_head = 4
    num_encoder_layers = 2
    num_decoder_layers = 2
    d_model = 128          # lane-aligned (multiple of 128): lane-dense blocks
    d_filter = 256
    B = 2
    S_src = 8
    S_trg = 8

    key = jax.random.PRNGKey(0)
    kp, ks, kt = jax.random.split(key, 3)
    params = init_params(kp, n_head, d_model, d_filter)
    src = jax.random.normal(ks, (B, S_src, d_model), jnp.float32)
    trg = jax.random.normal(kt, (B, S_trg, d_model), jnp.float32)

    # --- mask=None path (matches the reference default) ----------------------
    out = transformer_core(params, src, trg, mask=None,
                           num_encoder_layers=num_encoder_layers,
                           num_decoder_layers=num_decoder_layers)
    out = jax.block_until_ready(out)
    assert out.shape == (B, S_trg, d_model)
    assert bool(jnp.all(jnp.isfinite(out)))
    ref = transformer_core_reference(params, src, trg, mask=None,
                                     num_encoder_layers=num_encoder_layers,
                                     num_decoder_layers=num_decoder_layers)
    err = float(jnp.max(jnp.abs(out - ref)))
    assert err < 0.3, f"no-mask max abs err too large: {err}"

    # Reference causal mask (used by both masked paths below).
    causal_mask = jnp.broadcast_to(
        jnp.tril(jnp.ones((S_trg, S_trg), jnp.float32)), (B, S_trg, S_trg))
    ref_m = transformer_core_reference(params, src, trg, mask=causal_mask,
                                       num_encoder_layers=num_encoder_layers,
                                       num_decoder_layers=num_decoder_layers)

    # --- causal=True path: mask generated in-kernel (no HBM mask traffic) ----
    out_c = transformer_core(params, src, trg, mask=None, causal=True,
                             num_encoder_layers=num_encoder_layers,
                             num_decoder_layers=num_decoder_layers)
    out_c = jax.block_until_ready(out_c)
    assert bool(jnp.all(jnp.isfinite(out_c)))
    err_c = float(jnp.max(jnp.abs(out_c - ref_m)))
    assert err_c < 0.3, f"in-kernel-causal max abs err too large: {err_c}"

    # --- arbitrary streamed-mask path (same causal pattern via bf16 DMA) -----
    out_m = transformer_core(params, src, trg, mask=causal_mask,
                             num_encoder_layers=num_encoder_layers,
                             num_decoder_layers=num_decoder_layers)
    out_m = jax.block_until_ready(out_m)
    assert out_m.shape == (B, S_trg, d_model)
    assert bool(jnp.all(jnp.isfinite(out_m)))
    err_m = float(jnp.max(jnp.abs(out_m - ref_m)))
    assert err_m < 0.3, f"streamed-mask max abs err too large: {err_m}"

    print("KERNEL_OK")
</pallas_src>

<mosaic_0001>
module attributes {stable_mosaic.version = 11 : i64} {
  func.func @_encoder_stack_kernel(%arg0: i32, %arg1: i32, %arg2: memref<8x128xf32, #tpu.memory_space<vmem>>, %arg3: memref<128x384xbf16, #tpu.memory_space<vmem>>, %arg4: memref<1x384xf32, #tpu.memory_space<vmem>>, %arg5: memref<128x128xbf16, #tpu.memory_space<vmem>>, %arg6: memref<1x128xf32, #tpu.memory_space<vmem>>, %arg7: memref<1x128xf32, #tpu.memory_space<vmem>>, %arg8: memref<1x128xf32, #tpu.memory_space<vmem>>, %arg9: memref<128x256xbf16, #tpu.memory_space<vmem>>, %arg10: memref<1x256xf32, #tpu.memory_space<vmem>>, %arg11: memref<256x128xbf16, #tpu.memory_space<vmem>>, %arg12: memref<1x128xf32, #tpu.memory_space<vmem>>, %arg13: memref<1x128xf32, #tpu.memory_space<vmem>>, %arg14: memref<1x128xf32, #tpu.memory_space<vmem>>, %arg15: memref<8x128xf32, #tpu.memory_space<vmem>>) attributes {dimension_semantics = [#tpu.dimension_semantics<parallel>, #tpu.dimension_semantics<arbitrary>], iteration_bounds = array<i64: 2, 2>, scalar_prefetch = 0 : i64, scratch_operands = 0 : i64, tpu.core_type = #tpu.core_type<tc>, window_params = [{transform_indices = @transform_0, window_bounds = array<i64: 8, 128>}, {pipeline_mode = #tpu.pipeline_mode<synchronous>, transform_indices = @transform_1, window_bounds = array<i64: 128, 384>}, {pipeline_mode = #tpu.pipeline_mode<synchronous>, transform_indices = @transform_2, window_bounds = array<i64: 1, 384>}, {pipeline_mode = #tpu.pipeline_mode<synchronous>, transform_indices = @transform_3, window_bounds = array<i64: 128, 128>}, {pipeline_mode = #tpu.pipeline_mode<synchronous>, transform_indices = @transform_4, window_bounds = array<i64: 1, 128>}, {pipeline_mode = #tpu.pipeline_mode<synchronous>, transform_indices = @transform_5, window_bounds = array<i64: 1, 128>}, {pipeline_mode = #tpu.pipeline_mode<synchronous>, transform_indices = @transform_6, window_bounds = array<i64: 1, 128>}, {pipeline_mode = #tpu.pipeline_mode<synchronous>, transform_indices = @transform_7, window_bounds = array<i64: 128, 256>}, {pipeline_mode = #tpu.pipeline_mode<synchronous>, transform_indices = @transform_8, window_bounds = array<i64: 1, 256>}, {pipeline_mode = #tpu.pipeline_mode<synchronous>, transform_indices = @transform_9, window_bounds = array<i64: 256, 128>}, {pipeline_mode = #tpu.pipeline_mode<synchronous>, transform_indices = @transform_10, window_bounds = array<i64: 1, 128>}, {pipeline_mode = #tpu.pipeline_mode<synchronous>, transform_indices = @transform_11, window_bounds = array<i64: 1, 128>}, {pipeline_mode = #tpu.pipeline_mode<synchronous>, transform_indices = @transform_12, window_bounds = array<i64: 1, 128>}, {transform_indices = @transform_13, window_bounds = array<i64: 8, 128>}]} {
    %c0_i32 = arith.constant 0 : i32
    %0 = arith.cmpi eq, %arg1, %c0_i32 : i32
    %1 = arith.extui %0 : i1 to i32
    %c0_i32_0 = arith.constant 0 : i32
    %2 = arith.cmpi ne, %1, %c0_i32_0 : i32
    scf.if %2 {
      %c0_66 = arith.constant 0 : index
      %c0_67 = arith.constant 0 : index
      %181 = vector.load %arg2[%c0_66, %c0_67] : memref<8x128xf32, #tpu.memory_space<vmem>>, vector<8x128xf32>
      %c0_68 = arith.constant 0 : index
      %c0_69 = arith.constant 0 : index
      %182 = vector.load %arg15[%c0_68, %c0_69] : memref<8x128xf32, #tpu.memory_space<vmem>>, vector<8x128xf32>
      tpu.vector_store %arg15[%c0_68, %c0_69], %181 {strides = array<i32>} : memref<8x128xf32, #tpu.memory_space<vmem>>, vector<8x128xf32>,
    } else {
    }
    %c0 = arith.constant 0 : index
    %c0_1 = arith.constant 0 : index
    %3 = vector.load %arg15[%c0, %c0_1] : memref<8x128xf32, #tpu.memory_space<vmem>>, vector<8x128xf32>
    %c0_2 = arith.constant 0 : index
    %c0_3 = arith.constant 0 : index
    %4 = vector.load %arg3[%c0_2, %c0_3] : memref<128x384xbf16, #tpu.memory_space<vmem>>, vector<128x384xbf16>
    %5 = arith.truncf %3 : vector<8x128xf32> to vector<8x128xbf16>
    %cst = arith.constant dense<0.000000e+00> : vector<8x384xf32>
    %6 = tpu.matmul %5, %4, %cst {dimension_numbers = #tpu.dot_dimension_numbers<[1], [0], [0], [1], [0, 0, 1, 1], [], []>} : vector<8x128xbf16>, vector<128x384xbf16>, vector<8x384xf32> -> vector<8x384xf32>
    %c0_4 = arith.constant 0 : index
    %c0_5 = arith.constant 0 : index
    %7 = vector.load %arg4[%c0_4, %c0_5] : memref<1x384xf32, #tpu.memory_space<vmem>>, vector<1x384xf32>
    %8 = vector.broadcast %7 : vector<1x384xf32> to vector<8x384xf32>
    %9 = arith.addf %6, %8 : vector<8x384xf32>
    %10 = vector.extract_strided_slice %9 {offsets = [0, 0], sizes = [8, 128], strides = [1, 1]} : vector<8x384xf32> to vector<8x128xf32>
    %11 = vector.extract_strided_slice %9 {offsets = [0, 128], sizes = [8, 128], strides = [1, 1]} : vector<8x384xf32> to vector<8x128xf32>
    %12 = vector.extract_strided_slice %9 {offsets = [0, 256], sizes = [8, 128], strides = [1, 1]} : vector<8x384xf32> to vector<8x128xf32>
    %c0_6 = arith.constant 0 : index
    %c0_7 = arith.constant 0 : index
    %13 = vector.load %arg5[%c0_6, %c0_7] : memref<128x128xbf16, #tpu.memory_space<vmem>>, vector<128x128xbf16>
    %c0_8 = arith.constant 0 : index
    %c0_9 = arith.constant 0 : index
    %14 = vector.load %arg6[%c0_8, %c0_9] : memref<1x128xf32, #tpu.memory_space<vmem>>, vector<1x128xf32>
    %15 = arith.truncf %11 : vector<8x128xf32> to vector<8x128xbf16>
    %16 = tpu.transpose %15, [1, 0] : vector<8x128xbf16> -> vector<128x8xbf16>
    %cst_10 = arith.constant 0.000000e+00 : f32
    %17 = vector.broadcast %cst_10 : f32 to vector<8x128xf32>
    %18 = vector.extract_strided_slice %10 {offsets = [0, 0], sizes = [8, 32], strides = [1, 1]} : vector<8x128xf32> to vector<8x32xf32>
    %19 = vector.extract_strided_slice %16 {offsets = [0, 0], sizes = [32, 8], strides = [1, 1]} : vector<128x8xbf16> to vector<32x8xbf16>
    %20 = arith.truncf %18 : vector<8x32xf32> to vector<8x32xbf16>
    %cst_11 = arith.constant dense<0.000000e+00> : vector<8x8xf32>
    %21 = tpu.matmul %20, %19, %cst_11 {dimension_numbers = #tpu.dot_dimension_numbers<[1], [0], [0], [1], [0, 0, 1, 1], [], []>} : vector<8x32xbf16>, vector<32x8xbf16>, vector<8x8xf32> -> vector<8x8xf32>
    %cst_12 = arith.constant 0.176776692 : f32
    %22 = vector.broadcast %cst_12 : f32 to vector<8x8xf32>
    %23 = arith.mulf %21, %22 : vector<8x8xf32>
    %cst_13 = arith.constant dense<0xFF800000> : vector<8xf32>
    %24 = vector.multi_reduction <maximumf>, %23, %cst_13 [1] : vector<8x8xf32> to vector<8xf32>
    %25 = vector.shape_cast %24 : vector<8xf32> to vector<8x1xf32>
    %26 = vector.broadcast %25 : vector<8x1xf32> to vector<8x8xf32>
    %27 = arith.subf %23, %26 : vector<8x8xf32>
    %28 = math.exp %27 : vector<8x8xf32>
    %cst_14 = arith.constant dense<0.000000e+00> : vector<8xf32>
    %29 = vector.multi_reduction <add>, %28, %cst_14 [1] : vector<8x8xf32> to vector<8xf32>
    %30 = vector.shape_cast %29 : vector<8xf32> to vector<8x1xf32>
    %31 = tpu.reciprocal %30 {approx = true} : vector<8x1xf32> -> vector<8x1xf32>
    %32 = vector.broadcast %31 : vector<8x1xf32> to vector<8x8xf32>
    %33 = arith.mulf %28, %32 : vector<8x8xf32>
    %34 = vector.extract_strided_slice %12 {offsets = [0, 0], sizes = [8, 32], strides = [1, 1]} : vector<8x128xf32> to vector<8x32xf32>
    %35 = arith.truncf %33 : vector<8x8xf32> to vector<8x8xbf16>
    %36 = arith.truncf %34 : vector<8x32xf32> to vector<8x32xbf16>
    %cst_15 = arith.constant dense<0.000000e+00> : vector<8x32xf32>
    %37 = tpu.matmul %35, %36, %cst_15 {dimension_numbers = #tpu.dot_dimension_numbers<[1], [0], [0], [1], [0, 0, 1, 1], [], []>} : vector<8x8xbf16>, vector<8x32xbf16>, vector<8x32xf32> -> vector<8x32xf32>
    %38 = vector.extract_strided_slice %13 {offsets = [0, 0], sizes = [32, 128], strides = [1, 1]} : vector<128x128xbf16> to vector<32x128xbf16>
    %39 = arith.truncf %37 : vector<8x32xf32> to vector<8x32xbf16>
    %cst_16 = arith.constant dense<0.000000e+00> : vector<8x128xf32>
    %40 = tpu.matmul %39, %38, %cst_16 {dimension_numbers = #tpu.dot_dimension_numbers<[1], [0], [0], [1], [0, 0, 1, 1], [], []>} : vector<8x32xbf16>, vector<32x128xbf16>, vector<8x128xf32> -> vector<8x128xf32>
    %41 = arith.addf %17, %40 : vector<8x128xf32>
    %42 = vector.extract_strided_slice %10 {offsets = [0, 32], sizes = [8, 32], strides = [1, 1]} : vector<8x128xf32> to vector<8x32xf32>
    %43 = vector.extract_strided_slice %16 {offsets = [32, 0], sizes = [32, 8], strides = [1, 1]} : vector<128x8xbf16> to vector<32x8xbf16>
    %44 = arith.truncf %42 : vector<8x32xf32> to vector<8x32xbf16>
    %cst_17 = arith.constant dense<0.000000e+00> : vector<8x8xf32>
    %45 = tpu.matmul %44, %43, %cst_17 {dimension_numbers = #tpu.dot_dimension_numbers<[1], [0], [0], [1], [0, 0, 1, 1], [], []>} : vector<8x32xbf16>, vector<32x8xbf16>, vector<8x8xf32> -> vector<8x8xf32>
    %cst_18 = arith.constant 0.176776692 : f32
    %46 = vector.broadcast %cst_18 : f32 to vector<8x8xf32>
    %47 = arith.mulf %45, %46 : vector<8x8xf32>
    %cst_19 = arith.constant dense<0xFF800000> : vector<8xf32>
    %48 = vector.multi_reduction <maximumf>, %47, %cst_19 [1] : vector<8x8xf32> to vector<8xf32>
    %49 = vector.shape_cast %48 : vector<8xf32> to vector<8x1xf32>
    %50 = vector.broadcast %49 : vector<8x1xf32> to vector<8x8xf32>
    %51 = arith.subf %47, %50 : vector<8x8xf32>
    %52 = math.exp %51 : vector<8x8xf32>
    %cst_20 = arith.constant dense<0.000000e+00> : vector<8xf32>
    %53 = vector.multi_reduction <add>, %52, %cst_20 [1] : vector<8x8xf32> to vector<8xf32>
    %54 = vector.shape_cast %53 : vector<8xf32> to vector<8x1xf32>
    %55 = tpu.reciprocal %54 {approx = true} : vector<8x1xf32> -> vector<8x1xf32>
    %56 = vector.broadcast %55 : vector<8x1xf32> to vector<8x8xf32>
    %57 = arith.mulf %52, %56 : vector<8x8xf32>
    %58 = vector.extract_strided_slice %12 {offsets = [0, 32], sizes = [8, 32], strides = [1, 1]} : vector<8x128xf32> to vector<8x32xf32>
    %59 = arith.truncf %57 : vector<8x8xf32> to vector<8x8xbf16>
    %60 = arith.truncf %58 : vector<8x32xf32> to vector<8x32xbf16>
    %cst_21 = arith.constant dense<0.000000e+00> : vector<8x32xf32>
    %61 = tpu.matmul %59, %60, %cst_21 {dimension_numbers = #tpu.dot_dimension_numbers<[1], [0], [0], [1], [0, 0, 1, 1], [], []>} : vector<8x8xbf16>, vector<8x32xbf16>, vector<8x32xf32> -> vector<8x32xf32>
    %62 = vector.extract_strided_slice %13 {offsets = [32, 0], sizes = [32, 128], strides = [1, 1]} : vector<128x128xbf16> to vector<32x128xbf16>
    %63 = arith.truncf %61 : vector<8x32xf32> to vector<8x32xbf16>
    %cst_22 = arith.constant dense<0.000000e+00> : vector<8x128xf32>
    %64 = tpu.matmul %63, %62, %cst_22 {dimension_numbers = #tpu.dot_dimension_numbers<[1], [0], [0], [1], [0, 0, 1, 1], [], []>} : vector<8x32xbf16>, vector<32x128xbf16>, vector<8x128xf32> -> vector<8x128xf32>
    %65 = arith.addf %41, %64 : vector<8x128xf32>
    %66 = vector.extract_strided_slice %10 {offsets = [0, 64], sizes = [8, 32], strides = [1, 1]} : vector<8x128xf32> to vector<8x32xf32>
    %67 = vector.extract_strided_slice %16 {offsets = [64, 0], sizes = [32, 8], strides = [1, 1]} : vector<128x8xbf16> to vector<32x8xbf16>
    %68 = arith.truncf %66 : vector<8x32xf32> to vector<8x32xbf16>
    %cst_23 = arith.constant dense<0.000000e+00> : vector<8x8xf32>
    %69 = tpu.matmul %68, %67, %cst_23 {dimension_numbers = #tpu.dot_dimension_numbers<[1], [0], [0], [1], [0, 0, 1, 1], [], []>} : vector<8x32xbf16>, vector<32x8xbf16>, vector<8x8xf32> -> vector<8x8xf32>
    %cst_24 = arith.constant 0.176776692 : f32
    %70 = vector.broadcast %cst_24 : f32 to vector<8x8xf32>
    %71 = arith.mulf %69, %70 : vector<8x8xf32>
    %cst_25 = arith.constant dense<0xFF800000> : vector<8xf32>
    %72 = vector.multi_reduction <maximumf>, %71, %cst_25 [1] : vector<8x8xf32> to vector<8xf32>
    %73 = vector.shape_cast %72 : vector<8xf32> to vector<8x1xf32>
    %74 = vector.broadcast %73 : vector<8x1xf32> to vector<8x8xf32>
    %75 = arith.subf %71, %74 : vector<8x8xf32>
    %76 = math.exp %75 : vector<8x8xf32>
    %cst_26 = arith.constant dense<0.000000e+00> : vector<8xf32>
    %77 = vector.multi_reduction <add>, %76, %cst_26 [1] : vector<8x8xf32> to vector<8xf32>
    %78 = vector.shape_cast %77 : vector<8xf32> to vector<8x1xf32>
    %79 = tpu.reciprocal %78 {approx = true} : vector<8x1xf32> -> vector<8x1xf32>
    %80 = vector.broadcast %79 : vector<8x1xf32> to vector<8x8xf32>
    %81 = arith.mulf %76, %80 : vector<8x8xf32>
    %82 = vector.extract_strided_slice %12 {offsets = [0, 64], sizes = [8, 32], strides = [1, 1]} : vector<8x128xf32> to vector<8x32xf32>
    %83 = arith.truncf %81 : vector<8x8xf32> to vector<8x8xbf16>
    %84 = arith.truncf %82 : vector<8x32xf32> to vector<8x32xbf16>
    %cst_27 = arith.constant dense<0.000000e+00> : vector<8x32xf32>
    %85 = tpu.matmul %83, %84, %cst_27 {dimension_numbers = #tpu.dot_dimension_numbers<[1], [0], [0], [1], [0, 0, 1, 1], [], []>} : vector<8x8xbf16>, vector<8x32xbf16>, vector<8x32xf32> -> vector<8x32xf32>
    %86 = vector.extract_strided_slice %13 {offsets = [64, 0], sizes = [32, 128], strides = [1, 1]} : vector<128x128xbf16> to vector<32x128xbf16>
    %87 = arith.truncf %85 : vector<8x32xf32> to vector<8x32xbf16>
    %cst_28 = arith.constant dense<0.000000e+00> : vector<8x128xf32>
    %88 = tpu.matmul %87, %86, %cst_28 {dimension_numbers = #tpu.dot_dimension_numbers<[1], [0], [0], [1], [0, 0, 1, 1], [], []>} : vector<8x32xbf16>, vector<32x128xbf16>, vector<8x128xf32> -> vector<8x128xf32>
    %89 = arith.addf %65, %88 : vector<8x128xf32>
    %90 = vector.extract_strided_slice %10 {offsets = [0, 96], sizes = [8, 32], strides = [1, 1]} : vector<8x128xf32> to vector<8x32xf32>
    %91 = vector.extract_strided_slice %16 {offsets = [96, 0], sizes = [32, 8], strides = [1, 1]} : vector<128x8xbf16> to vector<32x8xbf16>
    %92 = arith.truncf %90 : vector<8x32xf32> to vector<8x32xbf16>
    %cst_29 = arith.constant dense<0.000000e+00> : vector<8x8xf32>
    %93 = tpu.matmul %92, %91, %cst_29 {dimension_numbers = #tpu.dot_dimension_numbers<[1], [0], [0], [1], [0, 0, 1, 1], [], []>} : vector<8x32xbf16>, vector<32x8xbf16>, vector<8x8xf32> -> vector<8x8xf32>
    %cst_30 = arith.constant 0.176776692 : f32
    %94 = vector.broadcast %cst_30 : f32 to vector<8x8xf32>
    %95 = arith.mulf %93, %94 : vector<8x8xf32>
    %cst_31 = arith.constant dense<0xFF800000> : vector<8xf32>
    %96 = vector.multi_reduction <maximumf>, %95, %cst_31 [1] : vector<8x8xf32> to vector<8xf32>
    %97 = vector.shape_cast %96 : vector<8xf32> to vector<8x1xf32>
    %98 = vector.broadcast %97 : vector<8x1xf32> to vector<8x8xf32>
    %99 = arith.subf %95, %98 : vector<8x8xf32>
    %100 = math.exp %99 : vector<8x8xf32>
    %cst_32 = arith.constant dense<0.000000e+00> : vector<8xf32>
    %101 = vector.multi_reduction <add>, %100, %cst_32 [1] : vector<8x8xf32> to vector<8xf32>
    %102 = vector.shape_cast %101 : vector<8xf32> to vector<8x1xf32>
    %103 = tpu.reciprocal %102 {approx = true} : vector<8x1xf32> -> vector<8x1xf32>
    %104 = vector.broadcast %103 : vector<8x1xf32> to vector<8x8xf32>
    %105 = arith.mulf %100, %104 : vector<8x8xf32>
    %106 = vector.extract_strided_slice %12 {offsets = [0, 96], sizes = [8, 32], strides = [1, 1]} : vector<8x128xf32> to vector<8x32xf32>
    %107 = arith.truncf %105 : vector<8x8xf32> to vector<8x8xbf16>
    %108 = arith.truncf %106 : vector<8x32xf32> to vector<8x32xbf16>
    %cst_33 = arith.constant dense<0.000000e+00> : vector<8x32xf32>
    %109 = tpu.matmul %107, %108, %cst_33 {dimension_numbers = #tpu.dot_dimension_numbers<[1], [0], [0], [1], [0, 0, 1, 1], [], []>} : vector<8x8xbf16>, vector<8x32xbf16>, vector<8x32xf32> -> vector<8x32xf32>
    %110 = vector.extract_strided_slice %13 {offsets = [96, 0], sizes = [32, 128], strides = [1, 1]} : vector<128x128xbf16> to vector<32x128xbf16>
    %111 = arith.truncf %109 : vector<8x32xf32> to vector<8x32xbf16>
    %cst_34 = arith.constant dense<0.000000e+00> : vector<8x128xf32>
    %112 = tpu.matmul %111, %110, %cst_34 {dimension_numbers = #tpu.dot_dimension_numbers<[1], [0], [0], [1], [0, 0, 1, 1], [], []>} : vector<8x32xbf16>, vector<32x128xbf16>, vector<8x128xf32> -> vector<8x128xf32>
    %113 = arith.addf %89, %112 : vector<8x128xf32>
    %114 = vector.broadcast %14 : vector<1x128xf32> to vector<8x128xf32>
    %115 = arith.addf %113, %114 : vector<8x128xf32>
    %c0_35 = arith.constant 0 : index
    %c0_36 = arith.constant 0 : index
    %116 = vector.load %arg7[%c0_35, %c0_36] : memref<1x128xf32, #tpu.memory_space<vmem>>, vector<1x128xf32>
    %c0_37 = arith.constant 0 : index
    %c0_38 = arith.constant 0 : index
    %117 = vector.load %arg8[%c0_37, %c0_38] : memref<1x128xf32, #tpu.memory_space<vmem>>, vector<1x128xf32>
    %118 = arith.addf %3, %115 : vector<8x128xf32>
    %cst_39 = arith.constant dense<0.000000e+00> : vector<8xf32>
    %119 = vector.multi_reduction <add>, %118, %cst_39 [1] : vector<8x128xf32> to vector<8xf32>
    %120 = vector.shape_cast %119 : vector<8xf32> to vector<8x1xf32>
    %cst_40 = arith.constant 1.280000e+02 : f32
    %121 = vector.broadcast %cst_40 : f32 to vector<8x1xf32>
    %122 = arith.divf %120, %121 : vector<8x1xf32>
    %123 = vector.broadcast %122 : vector<8x1xf32> to vector<8x128xf32>
    %124 = arith.subf %118, %123 : vector<8x128xf32>
    %125 = arith.mulf %124, %124 : vector<8x128xf32>
    %cst_41 = arith.constant dense<0.000000e+00> : vector<8xf32>
    %126 = vector.multi_reduction <add>, %125, %cst_41 [1] : vector<8x128xf32> to vector<8xf32>
    %127 = vector.shape_cast %126 : vector<8xf32> to vector<8x1xf32>
    %cst_42 = arith.constant 1.280000e+02 : f32
    %128 = vector.broadcast %cst_42 : f32 to vector<8x1xf32>
    %129 = arith.divf %127, %128 : vector<8x1xf32>
    %130 = vector.broadcast %122 : vector<8x1xf32> to vector<8x128xf32>
    %131 = arith.subf %118, %130 : vector<8x128xf32>
    %cst_43 = arith.constant 9.99999974E-6 : f32
    %132 = vector.broadcast %cst_43 : f32 to vector<8x1xf32>
    %133 = arith.addf %129, %132 : vector<8x1xf32>
    %134 = math.rsqrt %133 : vector<8x1xf32>
    %135 = vector.broadcast %134 : vector<8x1xf32> to vector<8x128xf32>
    %136 = arith.mulf %131, %135 : vector<8x128xf32>
    %137 = vector.broadcast %116 : vector<1x128xf32> to vector<8x128xf32>
    %138 = arith.mulf %136, %137 : vector<8x128xf32>
    %139 = vector.broadcast %117 : vector<1x128xf32> to vector<8x128xf32>
    %140 = arith.addf %138, %139 : vector<8x128xf32>
    %c0_44 = arith.constant 0 : index
    %c0_45 = arith.constant 0 : index
    %141 = vector.load %arg9[%c0_44, %c0_45] : memref<128x256xbf16, #tpu.memory_space<vmem>>, vector<128x256xbf16>
    %142 = arith.truncf %140 : vector<8x128xf32> to vector<8x128xbf16>
    %cst_46 = arith.constant dense<0.000000e+00> : vector<8x256xf32>
    %143 = tpu.matmul %142, %141, %cst_46 {dimension_numbers = #tpu.dot_dimension_numbers<[1], [0], [0], [1], [0, 0, 1, 1], [], []>} : vector<8x128xbf16>, vector<128x256xbf16>, vector<8x256xf32> -> vector<8x256xf32>
    %c0_47 = arith.constant 0 : index
    %c0_48 = arith.constant 0 : index
    %144 = vector.load %arg10[%c0_47, %c0_48] : memref<1x256xf32, #tpu.memory_space<vmem>>, vector<1x256xf32>
    %145 = vector.broadcast %144 : vector<1x256xf32> to vector<8x256xf32>
    %146 = arith.addf %143, %145 : vector<8x256xf32>
    %cst_49 = arith.constant 0.000000e+00 : f32
    %147 = vector.broadcast %cst_49 : f32 to vector<8x256xf32>
    %148 = arith.maximumf %146, %147 : vector<8x256xf32>
    %c0_50 = arith.constant 0 : index
    %c0_51 = arith.constant 0 : index
    %149 = vector.load %arg11[%c0_50, %c0_51] : memref<256x128xbf16, #tpu.memory_space<vmem>>, vector<256x128xbf16>
    %150 = arith.truncf %148 : vector<8x256xf32> to vector<8x256xbf16>
    %cst_52 = arith.constant dense<0.000000e+00> : vector<8x128xf32>
    %151 = tpu.matmul %150, %149, %cst_52 {dimension_numbers = #tpu.dot_dimension_numbers<[1], [0], [0], [1], [0, 0, 1, 1], [], []>} : vector<8x256xbf16>, vector<256x128xbf16>, vector<8x128xf32> -> vector<8x128xf32>
    %c0_53 = arith.constant 0 : index
    %c0_54 = arith.constant 0 : index
    %152 = vector.load %arg12[%c0_53, %c0_54] : memref<1x128xf32, #tpu.memory_space<vmem>>, vector<1x128xf32>
    %153 = vector.broadcast %152 : vector<1x128xf32> to vector<8x128xf32>
    %154 = arith.addf %151, %153 : vector<8x128xf32>
    %c0_55 = arith.constant 0 : index
    %c0_56 = arith.constant 0 : index
    %155 = vector.load %arg13[%c0_55, %c0_56] : memref<1x128xf32, #tpu.memory_space<vmem>>, vector<1x128xf32>
    %c0_57 = arith.constant 0 : index
    %c0_58 = arith.constant 0 : index
    %156 = vector.load %arg14[%c0_57, %c0_58] : memref<1x128xf32, #tpu.memory_space<vmem>>, vector<1x128xf32>
    %157 = arith.addf %140, %154 : vector<8x128xf32>
    %cst_59 = arith.constant dense<0.000000e+00> : vector<8xf32>
    %158 = vector.multi_reduction <add>, %157, %cst_59 [1] : vector<8x128xf32> to vector<8xf32>
    %159 = vector.shape_cast %158 : vector<8xf32> to vector<8x1xf32>
    %cst_60 = arith.constant 1.280000e+02 : f32
    %160 = vector.broadcast %cst_60 : f32 to vector<8x1xf32>
    %161 = arith.divf %159, %160 : vector<8x1xf32>
    %162 = vector.broadcast %161 : vector<8x1xf32> to vector<8x128xf32>
    %163 = arith.subf %157, %162 : vector<8x128xf32>
    %164 = arith.mulf %163, %163 : vector<8x128xf32>
    %cst_61 = arith.constant dense<0.000000e+00> : vector<8xf32>
    %165 = vector.multi_reduction <add>, %164, %cst_61 [1] : vector<8x128xf32> to vector<8xf32>
    %166 = vector.shape_cast %165 : vector<8xf32> to vector<8x1xf32>
    %cst_62 = arith.constant 1.280000e+02 : f32
    %167 = vector.broadcast %cst_62 : f32 to vector<8x1xf32>
    %168 = arith.divf %166, %167 : vector<8x1xf32>
    %169 = vector.broadcast %161 : vector<8x1xf32> to vector<8x128xf32>
    %170 = arith.subf %157, %169 : vector<8x128xf32>
    %cst_63 = arith.constant 9.99999974E-6 : f32
    %171 = vector.broadcast %cst_63 : f32 to vector<8x1xf32>
    %172 = arith.addf %168, %171 : vector<8x1xf32>
    %173 = math.rsqrt %172 : vector<8x1xf32>
    %174 = vector.broadcast %173 : vector<8x1xf32> to vector<8x128xf32>
    %175 = arith.mulf %170, %174 : vector<8x128xf32>
    %176 = vector.broadcast %155 : vector<1x128xf32> to vector<8x128xf32>
    %177 = arith.mulf %175, %176 : vector<8x128xf32>
    %178 = vector.broadcast %156 : vector<1x128xf32> to vector<8x128xf32>
    %179 = arith.addf %177, %178 : vector<8x128xf32>
    %c0_64 = arith.constant 0 : index
    %c0_65 = arith.constant 0 : index
    %180 = vector.load %arg15[%c0_64, %c0_65] : memref<8x128xf32, #tpu.memory_space<vmem>>, vector<8x128xf32>
    tpu.vector_store %arg15[%c0_64, %c0_65], %179 {strides = array<i32>} : memref<8x128xf32, #tpu.memory_space<vmem>>, vector<8x128xf32>,
    return
  }
  func.func @transform_0(%arg0: i32, %arg1: i32) -> (i32, i32) {
    %c0_i32 = arith.constant 0 : i32
    %c0_i32_0 = arith.constant 0 : i32
    return %arg0, %c0_i32 : i32, i32
  }
  func.func @transform_1(%arg0: i32, %arg1: i32) -> (i32, i32) {
    %c0_i32 = arith.constant 0 : i32
    %c0_i32_0 = arith.constant 0 : i32
    %c0_i32_1 = arith.constant 0 : i32
    return %c0_i32, %c0_i32_0 : i32, i32
  }
  func.func @transform_2(%arg0: i32, %arg1: i32) -> (i32, i32) {
    %c0_i32 = arith.constant 0 : i32
    %c0_i32_0 = arith.constant 0 : i32
    %c0_i32_1 = arith.constant 0 : i32
    return %c0_i32, %c0_i32_0 : i32, i32
  }
  func.func @transform_3(%arg0: i32, %arg1: i32) -> (i32, i32) {
    %c0_i32 = arith.constant 0 : i32
    %c0_i32_0 = arith.constant 0 : i32
    %c0_i32_1 = arith.constant 0 : i32
    return %c0_i32, %c0_i32_0 : i32, i32
  }
  func.func @transform_4(%arg0: i32, %arg1: i32) -> (i32, i32) {
    %c0_i32 = arith.constant 0 : i32
    %c0_i32_0 = arith.constant 0 : i32
    %c0_i32_1 = arith.constant 0 : i32
    return %c0_i32, %c0_i32_0 : i32, i32
  }
  func.func @transform_5(%arg0: i32, %arg1: i32) -> (i32, i32) {
    %c0_i32 = arith.constant 0 : i32
    %c0_i32_0 = arith.constant 0 : i32
    %c0_i32_1 = arith.constant 0 : i32
    return %c0_i32, %c0_i32_0 : i32, i32
  }
  func.func @transform_6(%arg0: i32, %arg1: i32) -> (i32, i32) {
    %c0_i32 = arith.constant 0 : i32
    %c0_i32_0 = arith.constant 0 : i32
    %c0_i32_1 = arith.constant 0 : i32
    return %c0_i32, %c0_i32_0 : i32, i32
  }
  func.func @transform_7(%arg0: i32, %arg1: i32) -> (i32, i32) {
    %c0_i32 = arith.constant 0 : i32
    %c0_i32_0 = arith.constant 0 : i32
    %c0_i32_1 = arith.constant 0 : i32
    return %c0_i32, %c0_i32_0 : i32, i32
  }
  func.func @transform_8(%arg0: i32, %arg1: i32) -> (i32, i32) {
    %c0_i32 = arith.constant 0 : i32
    %c0_i32_0 = arith.constant 0 : i32
    %c0_i32_1 = arith.constant 0 : i32
    return %c0_i32, %c0_i32_0 : i32, i32
  }
  func.func @transform_9(%arg0: i32, %arg1: i32) -> (i32, i32) {
    %c0_i32 = arith.constant 0 : i32
    %c0_i32_0 = arith.constant 0 : i32
    %c0_i32_1 = arith.constant 0 : i32
    return %c0_i32, %c0_i32_0 : i32, i32
  }
  func.func @transform_10(%arg0: i32, %arg1: i32) -> (i32, i32) {
    %c0_i32 = arith.constant 0 : i32
    %c0_i32_0 = arith.constant 0 : i32
    %c0_i32_1 = arith.constant 0 : i32
    return %c0_i32, %c0_i32_0 : i32, i32
  }
  func.func @transform_11(%arg0: i32, %arg1: i32) -> (i32, i32) {
    %c0_i32 = arith.constant 0 : i32
    %c0_i32_0 = arith.constant 0 : i32
    %c0_i32_1 = arith.constant 0 : i32
    return %c0_i32, %c0_i32_0 : i32, i32
  }
  func.func @transform_12(%arg0: i32, %arg1: i32) -> (i32, i32) {
    %c0_i32 = arith.constant 0 : i32
    %c0_i32_0 = arith.constant 0 : i32
    %c0_i32_1 = arith.constant 0 : i32
    return %c0_i32, %c0_i32_0 : i32, i32
  }
  func.func @transform_13(%arg0: i32, %arg1: i32) -> (i32, i32) {
    %c0_i32 = arith.constant 0 : i32
    %c0_i32_0 = arith.constant 0 : i32
    return %arg0, %c0_i32 : i32, i32
  }
}

module attributes {stable_mosaic.version = 11 : i64} {
  func.func @_encoder_stack_kernel(%arg0: i32, %arg1: i32, %arg2: memref<8x128xf32, #tpu.memory_space<vmem>>, %arg3: memref<128x384xbf16, #tpu.memory_space<vmem>>, %arg4: memref<1x384xf32, #tpu.memory_space<vmem>>, %arg5: memref<128x128xbf16, #tpu.memory_space<vmem>>, %arg6: memref<1x128xf32, #tpu.memory_space<vmem>>, %arg7: memref<1x128xf32, #tpu.memory_space<vmem>>, %arg8: memref<1x128xf32, #tpu.memory_space<vmem>>, %arg9: memref<128x256xbf16, #tpu.memory_space<vmem>>, %arg10: memref<1x256xf32, #tpu.memory_space<vmem>>, %arg11: memref<256x128xbf16, #tpu.memory_space<vmem>>, %arg12: memref<1x128xf32, #tpu.memory_space<vmem>>, %arg13: memref<1x128xf32, #tpu.memory_space<vmem>>, %arg14: memref<1x128xf32, #tpu.memory_space<vmem>>, %arg15: memref<8x128xf32, #tpu.memory_space<vmem>>) attributes {dimension_semantics = [#tpu.dimension_semantics<parallel>, #tpu.dimension_semantics<arbitrary>], iteration_bounds = array<i64: 2, 2>, scalar_prefetch = 0 : i64, scratch_operands = 0 : i64, tpu.core_type = #tpu.core_type<tc>, window_params = [{transform_indices = @transform_0, window_bounds = array<i64: 8, 128>}, {pipeline_mode = #tpu.pipeline_mode<synchronous>, transform_indices = @transform_1, window_bounds = array<i64: 128, 384>}, {pipeline_mode = #tpu.pipeline_mode<synchronous>, transform_indices = @transform_2, window_bounds = array<i64: 1, 384>}, {pipeline_mode = #tpu.pipeline_mode<synchronous>, transform_indices = @transform_3, window_bounds = array<i64: 128, 128>}, {pipeline_mode = #tpu.pipeline_mode<synchronous>, transform_indices = @transform_4, window_bounds = array<i64: 1, 128>}, {pipeline_mode = #tpu.pipeline_mode<synchronous>, transform_indices = @transform_5, window_bounds = array<i64: 1, 128>}, {pipeline_mode = #tpu.pipeline_mode<synchronous>, transform_indices = @transform_6, window_bounds = array<i64: 1, 128>}, {pipeline_mode = #tpu.pipeline_mode<synchronous>, transform_indices = @transform_7, window_bounds = array<i64: 128, 256>}, {pipeline_mode = #tpu.pipeline_mode<synchronous>, transform_indices = @transform_8, window_bounds = array<i64: 1, 256>}, {pipeline_mode = #tpu.pipeline_mode<synchronous>, transform_indices = @transform_9, window_bounds = array<i64: 256, 128>}, {pipeline_mode = #tpu.pipeline_mode<synchronous>, transform_indices = @transform_10, window_bounds = array<i64: 1, 128>}, {pipeline_mode = #tpu.pipeline_mode<synchronous>, transform_indices = @transform_11, window_bounds = array<i64: 1, 128>}, {pipeline_mode = #tpu.pipeline_mode<synchronous>, transform_indices = @transform_12, window_bounds = array<i64: 1, 128>}, {transform_indices = @transform_13, window_bounds = array<i64: 8, 128>}]} {
    %c0_i32 = arith.constant 0 : i32
    %0 = arith.cmpi eq, %arg1, %c0_i32 : i32
    %1 = arith.extui %0 : i1 to i32
    %c0_i32_0 = arith.constant 0 : i32
    %2 = arith.cmpi ne, %1, %c0_i32_0 : i32
    scf.if %2 {
      %c0_66 = arith.constant 0 : index
      %c0_67 = arith.constant 0 : index
      %181 = vector.load %arg2[%c0_66, %c0_67] : memref<8x128xf32, #tpu.memory_space<vmem>>, vector<8x128xf32>
      %c0_68 = arith.constant 0 : index
      %c0_69 = arith.constant 0 : index
      %182 = vector.load %arg15[%c0_68, %c0_69] : memref<8x128xf32, #tpu.memory_space<vmem>>, vector<8x128xf32>
      tpu.vector_store %arg15[%c0_68, %c0_69], %181 {strides = array<i32>} : memref<8x128xf32, #tpu.memory_space<vmem>>, vector<8x128xf32>,
    } else {
    }
    %c0 = arith.constant 0 : index
    %c0_1 = arith.constant 0 : index
    %3 = vector.load %arg15[%c0, %c0_1] : memref<8x128xf32, #tpu.memory_space<vmem>>, vector<8x128xf32>
    %c0_2 = arith.constant 0 : index
    %c0_3 = arith.constant 0 : index
    %4 = vector.load %arg3[%c0_2, %c0_3] : memref<128x384xbf16, #tpu.memory_space<vmem>>, vector<128x384xbf16>
    %5 = arith.truncf %3 : vector<8x128xf32> to vector<8x128xbf16>
    %cst = arith.constant dense<0.000000e+00> : vector<8x384xf32>
    %6 = tpu.matmul %5, %4, %cst {dimension_numbers = #tpu.dot_dimension_numbers<[1], [0], [0], [1], [0, 0, 1, 1], [], []>} : vector<8x128xbf16>, vector<128x384xbf16>, vector<8x384xf32> -> vector<8x384xf32>
    %c0_4 = arith.constant 0 : index
    %c0_5 = arith.constant 0 : index
    %7 = vector.load %arg4[%c0_4, %c0_5] : memref<1x384xf32, #tpu.memory_space<vmem>>, vector<1x384xf32>
    %8 = vector.broadcast %7 : vector<1x384xf32> to vector<8x384xf32>
    %9 = arith.addf %6, %8 : vector<8x384xf32>
    %10 = vector.extract_strided_slice %9 {offsets = [0, 0], sizes = [8, 128], strides = [1, 1]} : vector<8x384xf32> to vector<8x128xf32>
    %11 = vector.extract_strided_slice %9 {offsets = [0, 128], sizes = [8, 128], strides = [1, 1]} : vector<8x384xf32> to vector<8x128xf32>
    %12 = vector.extract_strided_slice %9 {offsets = [0, 256], sizes = [8, 128], strides = [1, 1]} : vector<8x384xf32> to vector<8x128xf32>
    %c0_6 = arith.constant 0 : index
    %c0_7 = arith.constant 0 : index
    %13 = vector.load %arg5[%c0_6, %c0_7] : memref<128x128xbf16, #tpu.memory_space<vmem>>, vector<128x128xbf16>
    %c0_8 = arith.constant 0 : index
    %c0_9 = arith.constant 0 : index
    %14 = vector.load %arg6[%c0_8, %c0_9] : memref<1x128xf32, #tpu.memory_space<vmem>>, vector<1x128xf32>
    %15 = arith.truncf %11 : vector<8x128xf32> to vector<8x128xbf16>
    %16 = tpu.transpose %15, [1, 0] : vector<8x128xbf16> -> vector<128x8xbf16>
    %cst_10 = arith.constant 0.000000e+00 : f32
    %17 = vector.broadcast %cst_10 : f32 to vector<8x128xf32>
    %18 = vector.extract_strided_slice %10 {offsets = [0, 0], sizes = [8, 32], strides = [1, 1]} : vector<8x128xf32> to vector<8x32xf32>
    %19 = vector.extract_strided_slice %16 {offsets = [0, 0], sizes = [32, 8], strides = [1, 1]} : vector<128x8xbf16> to vector<32x8xbf16>
    %20 = arith.truncf %18 : vector<8x32xf32> to vector<8x32xbf16>
    %cst_11 = arith.constant dense<0.000000e+00> : vector<8x8xf32>
    %21 = tpu.matmul %20, %19, %cst_11 {dimension_numbers = #tpu.dot_dimension_numbers<[1], [0], [0], [1], [0, 0, 1, 1], [], []>} : vector<8x32xbf16>, vector<32x8xbf16>, vector<8x8xf32> -> vector<8x8xf32>
    %cst_12 = arith.constant 0.176776692 : f32
    %22 = vector.broadcast %cst_12 : f32 to vector<8x8xf32>
    %23 = arith.mulf %21, %22 : vector<8x8xf32>
    %cst_13 = arith.constant dense<0xFF800000> : vector<8xf32>
    %24 = vector.multi_reduction <maximumf>, %23, %cst_13 [1] : vector<8x8xf32> to vector<8xf32>
    %25 = vector.shape_cast %24 : vector<8xf32> to vector<8x1xf32>
    %26 = vector.broadcast %25 : vector<8x1xf32> to vector<8x8xf32>
    %27 = arith.subf %23, %26 : vector<8x8xf32>
    %28 = math.exp %27 : vector<8x8xf32>
    %cst_14 = arith.constant dense<0.000000e+00> : vector<8xf32>
    %29 = vector.multi_reduction <add>, %28, %cst_14 [1] : vector<8x8xf32> to vector<8xf32>
    %30 = vector.shape_cast %29 : vector<8xf32> to vector<8x1xf32>
    %31 = tpu.reciprocal %30 {approx = true} : vector<8x1xf32> -> vector<8x1xf32>
    %32 = vector.broadcast %31 : vector<8x1xf32> to vector<8x8xf32>
    %33 = arith.mulf %28, %32 : vector<8x8xf32>
    %34 = vector.extract_strided_slice %12 {offsets = [0, 0], sizes = [8, 32], strides = [1, 1]} : vector<8x128xf32> to vector<8x32xf32>
    %35 = arith.truncf %33 : vector<8x8xf32> to vector<8x8xbf16>
    %36 = arith.truncf %34 : vector<8x32xf32> to vector<8x32xbf16>
    %cst_15 = arith.constant dense<0.000000e+00> : vector<8x32xf32>
    %37 = tpu.matmul %35, %36, %cst_15 {dimension_numbers = #tpu.dot_dimension_numbers<[1], [0], [0], [1], [0, 0, 1, 1], [], []>} : vector<8x8xbf16>, vector<8x32xbf16>, vector<8x32xf32> -> vector<8x32xf32>
    %38 = vector.extract_strided_slice %13 {offsets = [0, 0], sizes = [32, 128], strides = [1, 1]} : vector<128x128xbf16> to vector<32x128xbf16>
    %39 = arith.truncf %37 : vector<8x32xf32> to vector<8x32xbf16>
    %cst_16 = arith.constant dense<0.000000e+00> : vector<8x128xf32>
    %40 = tpu.matmul %39, %38, %cst_16 {dimension_numbers = #tpu.dot_dimension_numbers<[1], [0], [0], [1], [0, 0, 1, 1], [], []>} : vector<8x32xbf16>, vector<32x128xbf16>, vector<8x128xf32> -> vector<8x128xf32>
    %41 = arith.addf %17, %40 : vector<8x128xf32>
    %42 = vector.extract_strided_slice %10 {offsets = [0, 32], sizes = [8, 32], strides = [1, 1]} : vector<8x128xf32> to vector<8x32xf32>
    %43 = vector.extract_strided_slice %16 {offsets = [32, 0], sizes = [32, 8], strides = [1, 1]} : vector<128x8xbf16> to vector<32x8xbf16>
    %44 = arith.truncf %42 : vector<8x32xf32> to vector<8x32xbf16>
    %cst_17 = arith.constant dense<0.000000e+00> : vector<8x8xf32>
    %45 = tpu.matmul %44, %43, %cst_17 {dimension_numbers = #tpu.dot_dimension_numbers<[1], [0], [0], [1], [0, 0, 1, 1], [], []>} : vector<8x32xbf16>, vector<32x8xbf16>, vector<8x8xf32> -> vector<8x8xf32>
    %cst_18 = arith.constant 0.176776692 : f32
    %46 = vector.broadcast %cst_18 : f32 to vector<8x8xf32>
    %47 = arith.mulf %45, %46 : vector<8x8xf32>
    %cst_19 = arith.constant dense<0xFF800000> : vector<8xf32>
    %48 = vector.multi_reduction <maximumf>, %47, %cst_19 [1] : vector<8x8xf32> to vector<8xf32>
    %49 = vector.shape_cast %48 : vector<8xf32> to vector<8x1xf32>
    %50 = vector.broadcast %49 : vector<8x1xf32> to vector<8x8xf32>
    %51 = arith.subf %47, %50 : vector<8x8xf32>
    %52 = math.exp %51 : vector<8x8xf32>
    %cst_20 = arith.constant dense<0.000000e+00> : vector<8xf32>
    %53 = vector.multi_reduction <add>, %52, %cst_20 [1] : vector<8x8xf32> to vector<8xf32>
    %54 = vector.shape_cast %53 : vector<8xf32> to vector<8x1xf32>
    %55 = tpu.reciprocal %54 {approx = true} : vector<8x1xf32> -> vector<8x1xf32>
    %56 = vector.broadcast %55 : vector<8x1xf32> to vector<8x8xf32>
    %57 = arith.mulf %52, %56 : vector<8x8xf32>
    %58 = vector.extract_strided_slice %12 {offsets = [0, 32], sizes = [8, 32], strides = [1, 1]} : vector<8x128xf32> to vector<8x32xf32>
    %59 = arith.truncf %57 : vector<8x8xf32> to vector<8x8xbf16>
    %60 = arith.truncf %58 : vector<8x32xf32> to vector<8x32xbf16>
    %cst_21 = arith.constant dense<0.000000e+00> : vector<8x32xf32>
    %61 = tpu.matmul %59, %60, %cst_21 {dimension_numbers = #tpu.dot_dimension_numbers<[1], [0], [0], [1], [0, 0, 1, 1], [], []>} : vector<8x8xbf16>, vector<8x32xbf16>, vector<8x32xf32> -> vector<8x32xf32>
    %62 = vector.extract_strided_slice %13 {offsets = [32, 0], sizes = [32, 128], strides = [1, 1]} : vector<128x128xbf16> to vector<32x128xbf16>
    %63 = arith.truncf %61 : vector<8x32xf32> to vector<8x32xbf16>
    %cst_22 = arith.constant dense<0.000000e+00> : vector<8x128xf32>
    %64 = tpu.matmul %63, %62, %cst_22 {dimension_numbers = #tpu.dot_dimension_numbers<[1], [0], [0], [1], [0, 0, 1, 1], [], []>} : vector<8x32xbf16>, vector<32x128xbf16>, vector<8x128xf32> -> vector<8x128xf32>
    %65 = arith.addf %41, %64 : vector<8x128xf32>
    %66 = vector.extract_strided_slice %10 {offsets = [0, 64], sizes = [8, 32], strides = [1, 1]} : vector<8x128xf32> to vector<8x32xf32>
    %67 = vector.extract_strided_slice %16 {offsets = [64, 0], sizes = [32, 8], strides = [1, 1]} : vector<128x8xbf16> to vector<32x8xbf16>
    %68 = arith.truncf %66 : vector<8x32xf32> to vector<8x32xbf16>
    %cst_23 = arith.constant dense<0.000000e+00> : vector<8x8xf32>
    %69 = tpu.matmul %68, %67, %cst_23 {dimension_numbers = #tpu.dot_dimension_numbers<[1], [0], [0], [1], [0, 0, 1, 1], [], []>} : vector<8x32xbf16>, vector<32x8xbf16>, vector<8x8xf32> -> vector<8x8xf32>
    %cst_24 = arith.constant 0.176776692 : f32
    %70 = vector.broadcast %cst_24 : f32 to vector<8x8xf32>
    %71 = arith.mulf %69, %70 : vector<8x8xf32>
    %cst_25 = arith.constant dense<0xFF800000> : vector<8xf32>
    %72 = vector.multi_reduction <maximumf>, %71, %cst_25 [1] : vector<8x8xf32> to vector<8xf32>
    %73 = vector.shape_cast %72 : vector<8xf32> to vector<8x1xf32>
    %74 = vector.broadcast %73 : vector<8x1xf32> to vector<8x8xf32>
    %75 = arith.subf %71, %74 : vector<8x8xf32>
    %76 = math.exp %75 : vector<8x8xf32>
    %cst_26 = arith.constant dense<0.000000e+00> : vector<8xf32>
    %77 = vector.multi_reduction <add>, %76, %cst_26 [1] : vector<8x8xf32> to vector<8xf32>
    %78 = vector.shape_cast %77 : vector<8xf32> to vector<8x1xf32>
    %79 = tpu.reciprocal %78 {approx = true} : vector<8x1xf32> -> vector<8x1xf32>
    %80 = vector.broadcast %79 : vector<8x1xf32> to vector<8x8xf32>
    %81 = arith.mulf %76, %80 : vector<8x8xf32>
    %82 = vector.extract_strided_slice %12 {offsets = [0, 64], sizes = [8, 32], strides = [1, 1]} : vector<8x128xf32> to vector<8x32xf32>
    %83 = arith.truncf %81 : vector<8x8xf32> to vector<8x8xbf16>
    %84 = arith.truncf %82 : vector<8x32xf32> to vector<8x32xbf16>
    %cst_27 = arith.constant dense<0.000000e+00> : vector<8x32xf32>
    %85 = tpu.matmul %83, %84, %cst_27 {dimension_numbers = #tpu.dot_dimension_numbers<[1], [0], [0], [1], [0, 0, 1, 1], [], []>} : vector<8x8xbf16>, vector<8x32xbf16>, vector<8x32xf32> -> vector<8x32xf32>
    %86 = vector.extract_strided_slice %13 {offsets = [64, 0], sizes = [32, 128], strides = [1, 1]} : vector<128x128xbf16> to vector<32x128xbf16>
    %87 = arith.truncf %85 : vector<8x32xf32> to vector<8x32xbf16>
    %cst_28 = arith.constant dense<0.000000e+00> : vector<8x128xf32>
    %88 = tpu.matmul %87, %86, %cst_28 {dimension_numbers = #tpu.dot_dimension_numbers<[1], [0], [0], [1], [0, 0, 1, 1], [], []>} : vector<8x32xbf16>, vector<32x128xbf16>, vector<8x128xf32> -> vector<8x128xf32>
    %89 = arith.addf %65, %88 : vector<8x128xf32>
    %90 = vector.extract_strided_slice %10 {offsets = [0, 96], sizes = [8, 32], strides = [1, 1]} : vector<8x128xf32> to vector<8x32xf32>
    %91 = vector.extract_strided_slice %16 {offsets = [96, 0], sizes = [32, 8], strides = [1, 1]} : vector<128x8xbf16> to vector<32x8xbf16>
    %92 = arith.truncf %90 : vector<8x32xf32> to vector<8x32xbf16>
    %cst_29 = arith.constant dense<0.000000e+00> : vector<8x8xf32>
    %93 = tpu.matmul %92, %91, %cst_29 {dimension_numbers = #tpu.dot_dimension_numbers<[1], [0], [0], [1], [0, 0, 1, 1], [], []>} : vector<8x32xbf16>, vector<32x8xbf16>, vector<8x8xf32> -> vector<8x8xf32>
    %cst_30 = arith.constant 0.176776692 : f32
    %94 = vector.broadcast %cst_30 : f32 to vector<8x8xf32>
    %95 = arith.mulf %93, %94 : vector<8x8xf32>
    %cst_31 = arith.constant dense<0xFF800000> : vector<8xf32>
    %96 = vector.multi_reduction <maximumf>, %95, %cst_31 [1] : vector<8x8xf32> to vector<8xf32>
    %97 = vector.shape_cast %96 : vector<8xf32> to vector<8x1xf32>
    %98 = vector.broadcast %97 : vector<8x1xf32> to vector<8x8xf32>
    %99 = arith.subf %95, %98 : vector<8x8xf32>
    %100 = math.exp %99 : vector<8x8xf32>
    %cst_32 = arith.constant dense<0.000000e+00> : vector<8xf32>
    %101 = vector.multi_reduction <add>, %100, %cst_32 [1] : vector<8x8xf32> to vector<8xf32>
    %102 = vector.shape_cast %101 : vector<8xf32> to vector<8x1xf32>
    %103 = tpu.reciprocal %102 {approx = true} : vector<8x1xf32> -> vector<8x1xf32>
    %104 = vector.broadcast %103 : vector<8x1xf32> to vector<8x8xf32>
    %105 = arith.mulf %100, %104 : vector<8x8xf32>
    %106 = vector.extract_strided_slice %12 {offsets = [0, 96], sizes = [8, 32], strides = [1, 1]} : vector<8x128xf32> to vector<8x32xf32>
    %107 = arith.truncf %105 : vector<8x8xf32> to vector<8x8xbf16>
    %108 = arith.truncf %106 : vector<8x32xf32> to vector<8x32xbf16>
    %cst_33 = arith.constant dense<0.000000e+00> : vector<8x32xf32>
    %109 = tpu.matmul %107, %108, %cst_33 {dimension_numbers = #tpu.dot_dimension_numbers<[1], [0], [0], [1], [0, 0, 1, 1], [], []>} : vector<8x8xbf16>, vector<8x32xbf16>, vector<8x32xf32> -> vector<8x32xf32>
    %110 = vector.extract_strided_slice %13 {offsets = [96, 0], sizes = [32, 128], strides = [1, 1]} : vector<128x128xbf16> to vector<32x128xbf16>
    %111 = arith.truncf %109 : vector<8x32xf32> to vector<8x32xbf16>
    %cst_34 = arith.constant dense<0.000000e+00> : vector<8x128xf32>
    %112 = tpu.matmul %111, %110, %cst_34 {dimension_numbers = #tpu.dot_dimension_numbers<[1], [0], [0], [1], [0, 0, 1, 1], [], []>} : vector<8x32xbf16>, vector<32x128xbf16>, vector<8x128xf32> -> vector<8x128xf32>
    %113 = arith.addf %89, %112 : vector<8x128xf32>
    %114 = vector.broadcast %14 : vector<1x128xf32> to vector<8x128xf32>
    %115 = arith.addf %113, %114 : vector<8x128xf32>
    %c0_35 = arith.constant 0 : index
    %c0_36 = arith.constant 0 : index
    %116 = vector.load %arg7[%c0_35, %c0_36] : memref<1x128xf32, #tpu.memory_space<vmem>>, vector<1x128xf32>
    %c0_37 = arith.constant 0 : index
    %c0_38 = arith.constant 0 : index
    %117 = vector.load %arg8[%c0_37, %c0_38] : memref<1x128xf32, #tpu.memory_space<vmem>>, vector<1x128xf32>
    %118 = arith.addf %3, %115 : vector<8x128xf32>
    %cst_39 = arith.constant dense<0.000000e+00> : vector<8xf32>
    %119 = vector.multi_reduction <add>, %118, %cst_39 [1] : vector<8x128xf32> to vector<8xf32>
    %120 = vector.shape_cast %119 : vector<8xf32> to vector<8x1xf32>
    %cst_40 = arith.constant 1.280000e+02 : f32
    %121 = vector.broadcast %cst_40 : f32 to vector<8x1xf32>
    %122 = arith.divf %120, %121 : vector<8x1xf32>
    %123 = vector.broadcast %122 : vector<8x1xf32> to vector<8x128xf32>
    %124 = arith.subf %118, %123 : vector<8x128xf32>
    %125 = arith.mulf %124, %124 : vector<8x128xf32>
    %cst_41 = arith.constant dense<0.000000e+00> : vector<8xf32>
    %126 = vector.multi_reduction <add>, %125, %cst_41 [1] : vector<8x128xf32> to vector<8xf32>
    %127 = vector.shape_cast %126 : vector<8xf32> to vector<8x1xf32>
    %cst_42 = arith.constant 1.280000e+02 : f32
    %128 = vector.broadcast %cst_42 : f32 to vector<8x1xf32>
    %129 = arith.divf %127, %128 : vector<8x1xf32>
    %130 = vector.broadcast %122 : vector<8x1xf32> to vector<8x128xf32>
    %131 = arith.subf %118, %130 : vector<8x128xf32>
    %cst_43 = arith.constant 9.99999974E-6 : f32
    %132 = vector.broadcast %cst_43 : f32 to vector<8x1xf32>
    %133 = arith.addf %129, %132 : vector<8x1xf32>
    %134 = math.rsqrt %133 : vector<8x1xf32>
    %135 = vector.broadcast %134 : vector<8x1xf32> to vector<8x128xf32>
    %136 = arith.mulf %131, %135 : vector<8x128xf32>
    %137 = vector.broadcast %116 : vector<1x128xf32> to vector<8x128xf32>
    %138 = arith.mulf %136, %137 : vector<8x128xf32>
    %139 = vector.broadcast %117 : vector<1x128xf32> to vector<8x128xf32>
    %140 = arith.addf %138, %139 : vector<8x128xf32>
    %c0_44 = arith.constant 0 : index
    %c0_45 = arith.constant 0 : index
    %141 = vector.load %arg9[%c0_44, %c0_45] : memref<128x256xbf16, #tpu.memory_space<vmem>>, vector<128x256xbf16>
    %142 = arith.truncf %140 : vector<8x128xf32> to vector<8x128xbf16>
    %cst_46 = arith.constant dense<0.000000e+00> : vector<8x256xf32>
    %143 = tpu.matmul %142, %141, %cst_46 {dimension_numbers = #tpu.dot_dimension_numbers<[1], [0], [0], [1], [0, 0, 1, 1], [], []>} : vector<8x128xbf16>, vector<128x256xbf16>, vector<8x256xf32> -> vector<8x256xf32>
    %c0_47 = arith.constant 0 : index
    %c0_48 = arith.constant 0 : index
    %144 = vector.load %arg10[%c0_47, %c0_48] : memref<1x256xf32, #tpu.memory_space<vmem>>, vector<1x256xf32>
    %145 = vector.broadcast %144 : vector<1x256xf32> to vector<8x256xf32>
    %146 = arith.addf %143, %145 : vector<8x256xf32>
    %cst_49 = arith.constant 0.000000e+00 : f32
    %147 = vector.broadcast %cst_49 : f32 to vector<8x256xf32>
    %148 = arith.maximumf %146, %147 : vector<8x256xf32>
    %c0_50 = arith.constant 0 : index
    %c0_51 = arith.constant 0 : index
    %149 = vector.load %arg11[%c0_50, %c0_51] : memref<256x128xbf16, #tpu.memory_space<vmem>>, vector<256x128xbf16>
    %150 = arith.truncf %148 : vector<8x256xf32> to vector<8x256xbf16>
    %cst_52 = arith.constant dense<0.000000e+00> : vector<8x128xf32>
    %151 = tpu.matmul %150, %149, %cst_52 {dimension_numbers = #tpu.dot_dimension_numbers<[1], [0], [0], [1], [0, 0, 1, 1], [], []>} : vector<8x256xbf16>, vector<256x128xbf16>, vector<8x128xf32> -> vector<8x128xf32>
    %c0_53 = arith.constant 0 : index
    %c0_54 = arith.constant 0 : index
    %152 = vector.load %arg12[%c0_53, %c0_54] : memref<1x128xf32, #tpu.memory_space<vmem>>, vector<1x128xf32>
    %153 = vector.broadcast %152 : vector<1x128xf32> to vector<8x128xf32>
    %154 = arith.addf %151, %153 : vector<8x128xf32>
    %c0_55 = arith.constant 0 : index
    %c0_56 = arith.constant 0 : index
    %155 = vector.load %arg13[%c0_55, %c0_56] : memref<1x128xf32, #tpu.memory_space<vmem>>, vector<1x128xf32>
    %c0_57 = arith.constant 0 : index
    %c0_58 = arith.constant 0 : index
    %156 = vector.load %arg14[%c0_57, %c0_58] : memref<1x128xf32, #tpu.memory_space<vmem>>, vector<1x128xf32>
    %157 = arith.addf %140, %154 : vector<8x128xf32>
    %cst_59 = arith.constant dense<0.000000e+00> : vector<8xf32>
    %158 = vector.multi_reduction <add>, %157, %cst_59 [1] : vector<8x128xf32> to vector<8xf32>
    %159 = vector.shape_cast %158 : vector<8xf32> to vector<8x1xf32>
    %cst_60 = arith.constant 1.280000e+02 : f32
    %160 = vector.broadcast %cst_60 : f32 to vector<8x1xf32>
    %161 = arith.divf %159, %160 : vector<8x1xf32>
    %162 = vector.broadcast %161 : vector<8x1xf32> to vector<8x128xf32>
    %163 = arith.subf %157, %162 : vector<8x128xf32>
    %164 = arith.mulf %163, %163 : vector<8x128xf32>
    %cst_61 = arith.constant dense<0.000000e+00> : vector<8xf32>
    %165 = vector.multi_reduction <add>, %164, %cst_61 [1] : vector<8x128xf32> to vector<8xf32>
    %166 = vector.shape_cast %165 : vector<8xf32> to vector<8x1xf32>
    %cst_62 = arith.constant 1.280000e+02 : f32
    %167 = vector.broadcast %cst_62 : f32 to vector<8x1xf32>
    %168 = arith.divf %166, %167 : vector<8x1xf32>
    %169 = vector.broadcast %161 : vector<8x1xf32> to vector<8x128xf32>
    %170 = arith.subf %157, %169 : vector<8x128xf32>
    %cst_63 = arith.constant 9.99999974E-6 : f32
    %171 = vector.broadcast %cst_63 : f32 to vector<8x1xf32>
    %172 = arith.addf %168, %171 : vector<8x1xf32>
    %173 = math.rsqrt %172 : vector<8x1xf32>
    %174 = vector.broadcast %173 : vector<8x1xf32> to vector<8x128xf32>
    %175 = arith.mulf %170, %174 : vector<8x128xf32>
    %176 = vector.broadcast %155 : vector<1x128xf32> to vector<8x128xf32>
    %177 = arith.mulf %175, %176 : vector<8x128xf32>
    %178 = vector.broadcast %156 : vector<1x128xf32> to vector<8x128xf32>
    %179 = arith.addf %177, %178 : vector<8x128xf32>
    %c0_64 = arith.constant 0 : index
    %c0_65 = arith.constant 0 : index
    %180 = vector.load %arg15[%c0_64, %c0_65] : memref<8x128xf32, #tpu.memory_space<vmem>>, vector<8x128xf32>
    tpu.vector_store %arg15[%c0_64, %c0_65], %179 {strides = array<i32>} : memref<8x128xf32, #tpu.memory_space<vmem>>, vector<8x128xf32>,
    return
  }
  func.func @transform_0(%arg0: i32, %arg1: i32) -> (i32, i32) {
    %c0_i32 = arith.constant 0 : i32
    %c0_i32_0 = arith.constant 0 : i32
    return %arg0, %c0_i32 : i32, i32
  }
  func.func @transform_1(%arg0: i32, %arg1: i32) -> (i32, i32) {
    %c0_i32 = arith.constant 0 : i32
    %c0_i32_0 = arith.constant 0 : i32
    %c0_i32_1 = arith.constant 0 : i32
    return %c0_i32, %c0_i32_0 : i32, i32
  }
  func.func @transform_2(%arg0: i32, %arg1: i32) -> (i32, i32) {
    %c0_i32 = arith.constant 0 : i32
    %c0_i32_0 = arith.constant 0 : i32
    %c0_i32_1 = arith.constant 0 : i32
    return %c0_i32, %c0_i32_0 : i32, i32
  }
  func.func @transform_3(%arg0: i32, %arg1: i32) -> (i32, i32) {
    %c0_i32 = arith.constant 0 : i32
    %c0_i32_0 = arith.constant 0 : i32
    %c0_i32_1 = arith.constant 0 : i32
    return %c0_i32, %c0_i32_0 : i32, i32
  }
  func.func @transform_4(%arg0: i32, %arg1: i32) -> (i32, i32) {
    %c0_i32 = arith.constant 0 : i32
    %c0_i32_0 = arith.constant 0 : i32
    %c0_i32_1 = arith.constant 0 : i32
    return %c0_i32, %c0_i32_0 : i32, i32
  }
  func.func @transform_5(%arg0: i32, %arg1: i32) -> (i32, i32) {
    %c0_i32 = arith.constant 0 : i32
    %c0_i32_0 = arith.constant 0 : i32
    %c0_i32_1 = arith.constant 0 : i32
    return %c0_i32, %c0_i32_0 : i32, i32
  }
  func.func @transform_6(%arg0: i32, %arg1: i32) -> (i32, i32) {
    %c0_i32 = arith.constant 0 : i32
    %c0_i32_0 = arith.constant 0 : i32
    %c0_i32_1 = arith.constant 0 : i32
    return %c0_i32, %c0_i32_0 : i32, i32
  }
  func.func @transform_7(%arg0: i32, %arg1: i32) -> (i32, i32) {
    %c0_i32 = arith.constant 0 : i32
    %c0_i32_0 = arith.constant 0 : i32
    %c0_i32_1 = arith.constant 0 : i32
    return %c0_i32, %c0_i32_0 : i32, i32
  }
  func.func @transform_8(%arg0: i32, %arg1: i32) -> (i32, i32) {
    %c0_i32 = arith.constant 0 : i32
    %c0_i32_0 = arith.constant 0 : i32
    %c0_i32_1 = arith.constant 0 : i32
    return %c0_i32, %c0_i32_0 : i32, i32
  }
  func.func @transform_9(%arg0: i32, %arg1: i32) -> (i32, i32) {
    %c0_i32 = arith.constant 0 : i32
    %c0_i32_0 = arith.constant 0 : i32
    %c0_i32_1 = arith.constant 0 : i32
    return %c0_i32, %c0_i32_0 : i32, i32
  }
  func.func @transform_10(%arg0: i32, %arg1: i32) -> (i32, i32) {
    %c0_i32 = arith.constant 0 : i32
    %c0_i32_0 = arith.constant 0 : i32
    %c0_i32_1 = arith.constant 0 : i32
    return %c0_i32, %c0_i32_0 : i32, i32
  }
  func.func @transform_11(%arg0: i32, %arg1: i32) -> (i32, i32) {
    %c0_i32 = arith.constant 0 : i32
    %c0_i32_0 = arith.constant 0 : i32
    %c0_i32_1 = arith.constant 0 : i32
    return %c0_i32, %c0_i32_0 : i32, i32
  }
  func.func @transform_12(%arg0: i32, %arg1: i32) -> (i32, i32) {
    %c0_i32 = arith.constant 0 : i32
    %c0_i32_0 = arith.constant 0 : i32
    %c0_i32_1 = arith.constant 0 : i32
    return %c0_i32, %c0_i32_0 : i32, i32
  }
  func.func @transform_13(%arg0: i32, %arg1: i32) -> (i32, i32) {
    %c0_i32 = arith.constant 0 : i32
    %c0_i32_0 = arith.constant 0 : i32
    return %arg0, %c0_i32 : i32, i32
  }
}

</mosaic_0001>

<llo_original>
// kernel: tpu_custom_call.1
$region0: #{tpu_custom_call.1}
  #allocation0 [shape = 'u32[]', space=smem, size = 0x4, offset = 0x4, fixed_abs, tag = 'smem constant byte address 0x4 - core index']
  #allocation1 [shape = 'u32[144,128]{1,0:T(1,128)}', space=vmem, size = 0x12000, scoped, tag = 'internal scratch']
  %s0 = inlined_call_operand.hbm [shape: f32[16,128], index: 0, kind: input, shape index: {}]
  %s1 = inlined_call_operand.hbm [shape: bf16[128,384], index: 1, kind: input, shape index: {}]
  %s2 = inlined_call_operand.vmem [shape: f32[1,384], index: 2, kind: input, shape index: {}]
  %s3 = inlined_call_operand.hbm [shape: bf16[128,128], index: 3, kind: input, shape index: {}]
  %s4 = inlined_call_operand.vmem [shape: f32[1,128], index: 4, kind: input, shape index: {}]
  %s5 = inlined_call_operand.vmem [shape: f32[1,128], index: 5, kind: input, shape index: {}]
  %s6 = inlined_call_operand.vmem [shape: f32[1,128], index: 6, kind: input, shape index: {}]
  %s7 = inlined_call_operand.hbm [shape: bf16[128,256], index: 7, kind: input, shape index: {}]
  %s8 = inlined_call_operand.vmem [shape: f32[1,256], index: 8, kind: input, shape index: {}]
  %s9 = inlined_call_operand.hbm [shape: bf16[256,128], index: 9, kind: input, shape index: {}]
  %s10 = inlined_call_operand.vmem [shape: f32[1,128], index: 10, kind: input, shape index: {}]
  %s11 = inlined_call_operand.vmem [shape: f32[1,128], index: 11, kind: input, shape index: {}]
  %s12 = inlined_call_operand.vmem [shape: f32[1,128], index: 12, kind: input, shape index: {}]
  %s13 = inlined_call_operand.hbm [shape: f32[16,128], index: 13, kind: output, shape index: {}]
  %s14 = sld [smem:[#allocation0]]
  $region109: #{tpu_custom_call.1} parent=0
    _
  %s16 = ssub.s32 1, %s14
  %s17 = scalar_select 0, %s16, %s14
  $region1: #{tpu_custom_call.1} parent=0
    #allocation2 [shape = 'u8[8192]{0}', space=vmem, size = 0x2000, scoped, tag = 'input window, operand 0']
    #allocation3 [shape = 's32[2]{0}', space=sflag, size = 0x8, scoped, tag = 'scoped memory for tpu_custom_call.1']
    #allocation4 [shape = 's32[2]{0}', space=sflag, size = 0x8, scoped, tag = 'scoped memory for tpu_custom_call.1']
    #allocation5 [shape = 'u8[98304]{0}', space=vmem, size = 0x18000, scoped, tag = 'input window, operand 1, single buffered']
    #allocation6 [shape = 's32[1]{0}', space=sflag, size = 0x4, scoped, tag = 'scoped memory for tpu_custom_call.1']
    #allocation7 [shape = 'u8[32768]{0}', space=vmem, size = 0x8000, scoped, tag = 'input window, operand 3, single buffered']
    #allocation8 [shape = 'u8[65536]{0}', space=vmem, size = 0x10000, scoped, tag = 'input window, operand 7, single buffered']
    #allocation9 [shape = 's32[1]{0}', space=sflag, size = 0x4, scoped, tag = 'scoped memory for tpu_custom_call.1']
    #allocation10 [shape = 'u8[65536]{0}', space=vmem, size = 0x10000, scoped, tag = 'input window, operand 9, single buffered']
    #allocation11 [shape = 'u8[8192]{0}', space=vmem, size = 0x2000, scoped, tag = 'output window, operand 0']
    %18 = vsyncpa [#allocation3], 0
    %s19 = scalar_lea.sflag [#allocation3], 1
    %20 = vsyncpa %s19, 0
    %21 = vsyncpa [#allocation6], 0
    %22 = vsyncpa [#allocation9], 0
    %23 = vsyncpa [#allocation4], 0
    %s24 = scalar_lea.sflag [#allocation4], 1
    %25 = vsyncpa %s24, 0
    loop: start=0, step=1, limit=6
    $region2: #{tpu_custom_call.1} parent=1 // loop_pre_header
      _
    $region3: #{tpu_custom_call.1} parent=1 // loop_header
      %s27 = sphi 0, %s31
      %p28 = scmp.ge.s32.totalorder %s27, 6
      %s34 = sphi 0, %s46
      %s35 = sphi 0, %s42
      %s36 = sphi 0, %s34
      %s37 = sphi 0, %s35
      %s38 = sphi 0, %s36
      %s39 = sphi 0, %s37
      %s49 = sphi 0, %s51
      %s52 = sphi 0, %s49
      %s53 = sphi 0, %s52
      %s69 = sphi 0, %s53
      %s73 = sphi 0, %s73
      %s75 = sphi 0, %s73
      %s76 = sphi 0, %s75
      %s90 = sphi 0, %s76
      %s94 = sphi 0, %s94
      %s96 = sphi 0, %s94
      %s97 = sphi 0, %s96
      %s111 = sphi 0, %s97
      %s115 = sphi 0, %s115
      %s117 = sphi 0, %s115
      %s118 = sphi 0, %s117
      %s132 = sphi 0, %s118
      %s136 = sphi 0, %s136
      %s138 = sphi 0, %s136
      %s139 = sphi 0, %s138
      %s153 = sphi 0, %s139
      %s157 = sphi 0, %s157
      %s159 = sphi 0, %s157
      %s160 = sphi 0, %s159
      %s174 = sphi 0, %s160
      %s178 = sphi 0, %s178
      %s180 = sphi 0, %s178
      %s181 = sphi 0, %s180
      %s195 = sphi 0, %s181
      %s199 = sphi 0, %s199
      %s201 = sphi 0, %s199
      %s202 = sphi 0, %s201
      %s216 = sphi 0, %s202
      %s220 = sphi 0, %s220
      %s222 = sphi 0, %s220
      %s223 = sphi 0, %s222
      %s237 = sphi 0, %s223
      %s241 = sphi 0, %s241
      %s243 = sphi 0, %s241
      %s244 = sphi 0, %s243
      %s258 = sphi 0, %s244
      %s262 = sphi 0, %s262
      %s264 = sphi 0, %s262
      %s265 = sphi 0, %s264
      %s279 = sphi 0, %s265
      %s283 = sphi 0, %s283
      %s285 = sphi 0, %s283
      %s286 = sphi 0, %s285
      %s300 = sphi 0, %s286
      %s304 = sphi 0, %s304
      %s306 = sphi 0, %s304
      %s307 = sphi 0, %s306
      %s321 = sphi 0, %s307
      %s327 = sphi 0, %s329
      %s330 = sphi 0, %s327
      %s331 = sphi 0, %s330
      %s347 = sphi 0, %s331
    $region4: #{tpu_custom_call.1} parent=1 // loop_header_branch
      %30 = sbr.rel (%p28) target = $region8
    $region5: #{tpu_custom_call.1} parent=1 // loop_body
      %s32 = ssub.s32 %s27, 1
      %s33 = ssub.s32 %s27, 2
      %s40 = sadd.s32 1, %s35
      %p41 = scmp.ge.s32.totalorder %s40, 2
      %s42 = scalar_select %p41, 0, %s40
      %s43 = sadd.s32 1, %s34
      %s44 = scalar_select %p41, %s43, %s34
      %p45 = scmp.ge.s32.totalorder %s44, 2
      %s46 = scalar_select %p45, 0, %s44
      %s47 = ssub.s32 %s34, %s46
      %p48 = scmp.eq.s32.totalorder %s47, 0
      %s50 = sadd.s32 %s49, 1
      %s51 = scalar_select %p48, %s49, %s50
      %p54 = pneg %p48
      %p55 = scmp.eq.s32.totalorder %s27, 3
      %p56 = por %p54, %p55
      %p57 = scmp.ne.s32.totalorder %s49, %s52
      %p58 = scmp.eq.s32.totalorder %s27, 0
      %p59 = por %p57, %p58
      %p60 = scmp.ne.s32.totalorder %s49, %s52
      %p61 = scmp.eq.s32.totalorder %s32, 3
      %p62 = por %p60, %p61
      %p63 = scmp.ne.s32.totalorder %s52, %s53
      %p64 = scmp.eq.s32.totalorder %s32, 0
      %p65 = por %p63, %p64
      %p66 = scmp.ne.s32.totalorder %s52, %s53
      %p67 = scmp.eq.s32.totalorder %s33, 3
      %p68 = por %p66, %p67
      %p70 = scmp.ne.s32.totalorder %s53, %s69
      %p71 = scmp.eq.s32.totalorder %s33, 0
      %p72 = por %p70, %p71
      %s74 = sadd.s32 %s73, 1
      %p77 = scmp.eq.s32.totalorder %s27, 3
      %p78 = scmp.ne.s32.totalorder %s73, %s75
      %p79 = scmp.eq.s32.totalorder %s27, 0
      %p80 = por %p78, %p79
      %p81 = scmp.ne.s32.totalorder %s73, %s75
      %p82 = scmp.eq.s32.totalorder %s32, 3
      %p83 = por %p81, %p82
      %p84 = scmp.ne.s32.totalorder %s75, %s76
      %p85 = scmp.eq.s32.totalorder %s32, 0
      %p86 = por %p84, %p85
      %p87 = scmp.ne.s32.totalorder %s75, %s76
      %p88 = scmp.eq.s32.totalorder %s33, 3
      %p89 = por %p87, %p88
      %p91 = scmp.ne.s32.totalorder %s76, %s90
      %p92 = scmp.eq.s32.totalorder %s33, 0
      %p93 = por %p91, %p92
      %s95 = sadd.s32 %s94, 1
      %p98 = scmp.eq.s32.totalorder %s27, 3
      %p99 = scmp.ne.s32.totalorder %s94, %s96
      %p100 = scmp.eq.s32.totalorder %s27, 0
      %p101 = por %p99, %p100
      %p102 = scmp.ne.s32.totalorder %s94, %s96
      %p103 = scmp.eq.s32.totalorder %s32, 3
      %p104 = por %p102, %p103
      %p105 = scmp.ne.s32.totalorder %s96, %s97
      %p106 = scmp.eq.s32.totalorder %s32, 0
      %p107 = por %p105, %p106
      %p108 = scmp.ne.s32.totalorder %s96, %s97
      %p109 = scmp.eq.s32.totalorder %s33, 3
      %p110 = por %p108, %p109
      %p112 = scmp.ne.s32.totalorder %s97, %s111
      %p113 = scmp.eq.s32.totalorder %s33, 0
      %p114 = por %p112, %p113
      %s116 = sadd.s32 %s115, 1
      %p119 = scmp.eq.s32.totalorder %s27, 3
      %p120 = scmp.ne.s32.totalorder %s115, %s117
      %p121 = scmp.eq.s32.totalorder %s27, 0
      %p122 = por %p120, %p121
      %p123 = scmp.ne.s32.totalorder %s115, %s117
      %p124 = scmp.eq.s32.totalorder %s32, 3
      %p125 = por %p123, %p124
      %p126 = scmp.ne.s32.totalorder %s117, %s118
      %p127 = scmp.eq.s32.totalorder %s32, 0
      %p128 = por %p126, %p127
      %p129 = scmp.ne.s32.totalorder %s117, %s118
      %p130 = scmp.eq.s32.totalorder %s33, 3
      %p131 = por %p129, %p130
      %p133 = scmp.ne.s32.totalorder %s118, %s132
      %p134 = scmp.eq.s32.totalorder %s33, 0
      %p135 = por %p133, %p134
      %s137 = sadd.s32 %s136, 1
      %p140 = scmp.eq.s32.totalorder %s27, 3
      %p141 = scmp.ne.s32.totalorder %s136, %s138
      %p142 = scmp.eq.s32.totalorder %s27, 0
      %p143 = por %p141, %p142
      %p144 = scmp.ne.s32.totalorder %s136, %s138
      %p145 = scmp.eq.s32.totalorder %s32, 3
      %p146 = por %p144, %p145
      %p147 = scmp.ne.s32.totalorder %s138, %s139
      %p148 = scmp.eq.s32.totalorder %s32, 0
      %p149 = por %p147, %p148
      %p150 = scmp.ne.s32.totalorder %s138, %s139
      %p151 = scmp.eq.s32.totalorder %s33, 3
      %p152 = por %p150, %p151
      %p154 = scmp.ne.s32.totalorder %s139, %s153
      %p155 = scmp.eq.s32.totalorder %s33, 0
      %p156 = por %p154, %p155
      %s158 = sadd.s32 %s157, 1
      %p161 = scmp.eq.s32.totalorder %s27, 3
      %p162 = scmp.ne.s32.totalorder %s157, %s159
      %p163 = scmp.eq.s32.totalorder %s27, 0
      %p164 = por %p162, %p163
      %p165 = scmp.ne.s32.totalorder %s157, %s159
      %p166 = scmp.eq.s32.totalorder %s32, 3
      %p167 = por %p165, %p166
      %p168 = scmp.ne.s32.totalorder %s159, %s160
      %p169 = scmp.eq.s32.totalorder %s32, 0
      %p170 = por %p168, %p169
      %p171 = scmp.ne.s32.totalorder %s159, %s160
      %p172 = scmp.eq.s32.totalorder %s33, 3
      %p173 = por %p171, %p172
      %p175 = scmp.ne.s32.totalorder %s160, %s174
      %p176 = scmp.eq.s32.totalorder %s33, 0
      %p177 = por %p175, %p176
      %s179 = sadd.s32 %s178, 1
      %p182 = scmp.eq.s32.totalorder %s27, 3
      %p183 = scmp.ne.s32.totalorder %s178, %s180
      %p184 = scmp.eq.s32.totalorder %s27, 0
      %p185 = por %p183, %p184
      %p186 = scmp.ne.s32.totalorder %s178, %s180
      %p187 = scmp.eq.s32.totalorder %s32, 3
      %p188 = por %p186, %p187
      %p189 = scmp.ne.s32.totalorder %s180, %s181
      %p190 = scmp.eq.s32.totalorder %s32, 0
      %p191 = por %p189, %p190
      %p192 = scmp.ne.s32.totalorder %s180, %s181
      %p193 = scmp.eq.s32.totalorder %s33, 3
      %p194 = por %p192, %p193
      %p196 = scmp.ne.s32.totalorder %s181, %s195
      %p197 = scmp.eq.s32.totalorder %s33, 0
      %p198 = por %p196, %p197
      %s200 = sadd.s32 %s199, 1
      %p203 = scmp.eq.s32.totalorder %s27, 3
      %p204 = scmp.ne.s32.totalorder %s199, %s201
      %p205 = scmp.eq.s32.totalorder %s27, 0
      %p206 = por %p204, %p205
      %p207 = scmp.ne.s32.totalorder %s199, %s201
      %p208 = scmp.eq.s32.totalorder %s32, 3
      %p209 = por %p207, %p208
      %p210 = scmp.ne.s32.totalorder %s201, %s202
      %p211 = scmp.eq.s32.totalorder %s32, 0
      %p212 = por %p210, %p211
      %p213 = scmp.ne.s32.totalorder %s201, %s202
      %p214 = scmp.eq.s32.totalorder %s33, 3
      %p215 = por %p213, %p214
      %p217 = scmp.ne.s32.totalorder %s202, %s216
      %p218 = scmp.eq.s32.totalorder %s33, 0
      %p219 = por %p217, %p218
      %s221 = sadd.s32 %s220, 1
      %p224 = scmp.eq.s32.totalorder %s27, 3
      %p225 = scmp.ne.s32.totalorder %s220, %s222
      %p226 = scmp.eq.s32.totalorder %s27, 0
      %p227 = por %p225, %p226
      %p228 = scmp.ne.s32.totalorder %s220, %s222
      %p229 = scmp.eq.s32.totalorder %s32, 3
      %p230 = por %p228, %p229
      %p231 = scmp.ne.s32.totalorder %s222, %s223
      %p232 = scmp.eq.s32.totalorder %s32, 0
      %p233 = por %p231, %p232
      %p234 = scmp.ne.s32.totalorder %s222, %s223
      %p235 = scmp.eq.s32.totalorder %s33, 3
      %p236 = por %p234, %p235
      %p238 = scmp.ne.s32.totalorder %s223, %s237
      %p239 = scmp.eq.s32.totalorder %s33, 0
      %p240 = por %p238, %p239
      %s242 = sadd.s32 %s241, 1
      %p245 = scmp.eq.s32.totalorder %s27, 3
      %p246 = scmp.ne.s32.totalorder %s241, %s243
      %p247 = scmp.eq.s32.totalorder %s27, 0
      %p248 = por %p246, %p247
      %p249 = scmp.ne.s32.totalorder %s241, %s243
      %p250 = scmp.eq.s32.totalorder %s32, 3
      %p251 = por %p249, %p250
      %p252 = scmp.ne.s32.totalorder %s243, %s244
      %p253 = scmp.eq.s32.totalorder %s32, 0
      %p254 = por %p252, %p253
      %p255 = scmp.ne.s32.totalorder %s243, %s244
      %p256 = scmp.eq.s32.totalorder %s33, 3
      %p257 = por %p255, %p256
      %p259 = scmp.ne.s32.totalorder %s244, %s258
      %p260 = scmp.eq.s32.totalorder %s33, 0
      %p261 = por %p259, %p260
      %s263 = sadd.s32 %s262, 1
      %p266 = scmp.eq.s32.totalorder %s27, 3
      %p267 = scmp.ne.s32.totalorder %s262, %s264
      %p268 = scmp.eq.s32.totalorder %s27, 0
      %p269 = por %p267, %p268
      %p270 = scmp.ne.s32.totalorder %s262, %s264
      %p271 = scmp.eq.s32.totalorder %s32, 3
      %p272 = por %p270, %p271
      %p273 = scmp.ne.s32.totalorder %s264, %s265
      %p274 = scmp.eq.s32.totalorder %s32, 0
      %p275 = por %p273, %p274
      %p276 = scmp.ne.s32.totalorder %s264, %s265
      %p277 = scmp.eq.s32.totalorder %s33, 3
      %p278 = por %p276, %p277
      %p280 = scmp.ne.s32.totalorder %s265, %s279
      %p281 = scmp.eq.s32.totalorder %s33, 0
      %p282 = por %p280, %p281
      %s284 = sadd.s32 %s283, 1
      %p287 = scmp.eq.s32.totalorder %s27, 3
      %p288 = scmp.ne.s32.totalorder %s283, %s285
      %p289 = scmp.eq.s32.totalorder %s27, 0
      %p290 = por %p288, %p289
      %p291 = scmp.ne.s32.totalorder %s283, %s285
      %p292 = scmp.eq.s32.totalorder %s32, 3
      %p293 = por %p291, %p292
      %p294 = scmp.ne.s32.totalorder %s285, %s286
      %p295 = scmp.eq.s32.totalorder %s32, 0
      %p296 = por %p294, %p295
      %p297 = scmp.ne.s32.totalorder %s285, %s286
      %p298 = scmp.eq.s32.totalorder %s33, 3
      %p299 = por %p297, %p298
      %p301 = scmp.ne.s32.totalorder %s286, %s300
      %p302 = scmp.eq.s32.totalorder %s33, 0
      %p303 = por %p301, %p302
      %s305 = sadd.s32 %s304, 1
      %p308 = scmp.eq.s32.totalorder %s27, 3
      %p309 = scmp.ne.s32.totalorder %s304, %s306
      %p310 = scmp.eq.s32.totalorder %s27, 0
      %p311 = por %p309, %p310
      %p312 = scmp.ne.s32.totalorder %s304, %s306
      %p313 = scmp.eq.s32.totalorder %s32, 3
      %p314 = por %p312, %p313
      %p315 = scmp.ne.s32.totalorder %s306, %s307
      %p316 = scmp.eq.s32.totalorder %s32, 0
      %p317 = por %p315, %p316
      %p318 = scmp.ne.s32.totalorder %s306, %s307
      %p319 = scmp.eq.s32.totalorder %s33, 3
      %p320 = por %p318, %p319
      %p322 = scmp.ne.s32.totalorder %s307, %s321
      %p323 = scmp.eq.s32.totalorder %s33, 0
      %p324 = por %p322, %p323
      %s325 = ssub.s32 %s34, %s46
      %p326 = scmp.eq.s32.totalorder %s325, 0
      %s328 = sadd.s32 %s327, 1
      %s329 = scalar_select %p326, %s327, %s328
      %p332 = pneg %p326
      %p333 = scmp.eq.s32.totalorder %s27, 3
      %p334 = por %p332, %p333
      %p335 = scmp.ne.s32.totalorder %s327, %s330
      %p336 = scmp.eq.s32.totalorder %s27, 0
      %p337 = por %p335, %p336
      %p338 = scmp.ne.s32.totalorder %s327, %s330
      %p339 = scmp.eq.s32.totalorder %s32, 3
      %p340 = por %p338, %p339
      %p341 = scmp.ne.s32.totalorder %s330, %s331
      %p342 = scmp.eq.s32.totalorder %s32, 0
      %p343 = por %p341, %p342
      %p344 = scmp.ne.s32.totalorder %s330, %s331
      %p345 = scmp.eq.s32.totalorder %s33, 3
      %p346 = por %p344, %p345
      %p348 = scmp.ne.s32.totalorder %s331, %s347
      %p349 = scmp.eq.s32.totalorder %s33, 0
      %p350 = por %p348, %p349
      %p351 = scmp.le.s32.totalorder 1, %s27
      %p352 = scmp.lt.s32.totalorder %s27, 5
      %p353 = pnand %p351, %p352
      %p354 = pneg %p353
      // Predicated region
      $region9: #{tpu_custom_call.1} parent=5 // pred_check
        _
      $region10: #{tpu_custom_call.1} parent=5 // pred_check_branch
        %356 = sbr.rel (%p353) target = $region12
      $region11: #{tpu_custom_call.1} parent=5 // pred_region
        %s357 = ssub.s32 %s27, 1
        // Predicated region
        $region13: #{tpu_custom_call.1} parent=11 // pred_check
          %p358 = pneg %p86
        $region14: #{tpu_custom_call.1} parent=11 // pred_check_branch
          %360 = sbr.rel (%p358) target = $region16
        $region15: #{tpu_custom_call.1} parent=11 // pred_region
          %s362 = ssub.s32 3072, 3072
          %363 = vsyncadd [#allocation6], %s362
          %s364 = sshll.u32 [#allocation5], 4
          %s365 = int_to_ptr.vmem [resolvable:$true] %s364
          %370 = dma.hbm_to_vmem [thread:$0]  %s1, 3072, %s365, [#allocation6], 192, 192, 12
        $region16: #{tpu_custom_call.1} parent=11 // pred_fallthru
          _
        // Predicated region
        $region17: #{tpu_custom_call.1} parent=11 // pred_check
          %p371 = pneg %p107
        $region18: #{tpu_custom_call.1} parent=11 // pred_check_branch
          %373 = sbr.rel (%p371) target = $region20
        $region19: #{tpu_custom_call.1} parent=11 // pred_region
          _
        $region20: #{tpu_custom_call.1} parent=11 // pred_fallthru
          _
        // Predicated region
        $region21: #{tpu_custom_call.1} parent=11 // pred_check
          %p374 = pneg %p128
        $region22: #{tpu_custom_call.1} parent=11 // pred_check_branch
          %376 = sbr.rel (%p374) target = $region24
        $region23: #{tpu_custom_call.1} parent=11 // pred_region
          %s378 = ssub.s32 1024, 1024
          %379 = vsyncadd [#allocation6], %s378
          %s380 = sshll.u32 [#allocation7], 4
          %s381 = int_to_ptr.vmem [resolvable:$true] %s380
          %386 = dma.hbm_to_vmem [thread:$0]  %s3, 1024, %s381, [#allocation6], 64, 64, 4
        $region24: #{tpu_custom_call.1} parent=11 // pred_fallthru
          _
        // Predicated region
        $region25: #{tpu_custom_call.1} parent=11 // pred_check
          %p387 = pneg %p149
        $region26: #{tpu_custom_call.1} parent=11 // pred_check_branch
          %389 = sbr.rel (%p387) target = $region28
        $region27: #{tpu_custom_call.1} parent=11 // pred_region
          _
        $region28: #{tpu_custom_call.1} parent=11 // pred_fallthru
          _
        // Predicated region
        $region29: #{tpu_custom_call.1} parent=11 // pred_check
          %p390 = pneg %p170
        $region30: #{tpu_custom_call.1} parent=11 // pred_check_branch
          %392 = sbr.rel (%p390) target = $region32
        $region31: #{tpu_custom_call.1} parent=11 // pred_region
          _
        $region32: #{tpu_custom_call.1} parent=11 // pred_fallthru
          _
        // Predicated region
        $region33: #{tpu_custom_call.1} parent=11 // pred_check
          %p393 = pneg %p191
        $region34: #{tpu_custom_call.1} parent=11 // pred_check_branch
          %395 = sbr.rel (%p393) target = $region36
        $region35: #{tpu_custom_call.1} parent=11 // pred_region
          _
        $region36: #{tpu_custom_call.1} parent=11 // pred_fallthru
          _
        // Predicated region
        $region37: #{tpu_custom_call.1} parent=11 // pred_check
          %p396 = pneg %p212
        $region38: #{tpu_custom_call.1} parent=11 // pred_check_branch
          %398 = sbr.rel (%p396) target = $region40
        $region39: #{tpu_custom_call.1} parent=11 // pred_region
          %s400 = ssub.s32 2048, 2048
          %401 = vsyncadd [#allocation9], %s400
          %s402 = sshll.u32 [#allocation8], 4
          %s403 = int_to_ptr.vmem [resolvable:$true] %s402
          %408 = dma.hbm_to_vmem [thread:$0]  %s7, 2048, %s403, [#allocation9], 128, 128, 8
        $region40: #{tpu_custom_call.1} parent=11 // pred_fallthru
          _
        // Predicated region
        $region41: #{tpu_custom_call.1} parent=11 // pred_check
          %p409 = pneg %p233
        $region42: #{tpu_custom_call.1} parent=11 // pred_check_branch
          %411 = sbr.rel (%p409) target = $region44
        $region43: #{tpu_custom_call.1} parent=11 // pred_region
          _
        $region44: #{tpu_custom_call.1} parent=11 // pred_fallthru
          _
        // Predicated region
        $region45: #{tpu_custom_call.1} parent=11 // pred_check
          %p412 = pneg %p254
        $region46: #{tpu_custom_call.1} parent=11 // pred_check_branch
          %414 = sbr.rel (%p412) target = $region48
        $region47: #{tpu_custom_call.1} parent=11 // pred_region
          %s416 = ssub.s32 2048, 2048
          %417 = vsyncadd [#allocation9], %s416
          %s418 = sshll.u32 [#allocation10], 4
          %s419 = int_to_ptr.vmem [resolvable:$true] %s418
          %424 = dma.hbm_to_vmem [thread:$0]  %s9, 2048, %s419, [#allocation9], 64, 64, 4
        $region48: #{tpu_custom_call.1} parent=11 // pred_fallthru
          _
        // Predicated region
        $region49: #{tpu_custom_call.1} parent=11 // pred_check
          %p425 = pneg %p275
        $region50: #{tpu_custom_call.1} parent=11 // pred_check_branch
          %427 = sbr.rel (%p425) target = $region52
        $region51: #{tpu_custom_call.1} parent=11 // pred_region
          _
        $region52: #{tpu_custom_call.1} parent=11 // pred_fallthru
          _
        // Predicated region
        $region53: #{tpu_custom_call.1} parent=11 // pred_check
          %p428 = pneg %p296
        $region54: #{tpu_custom_call.1} parent=11 // pred_check_branch
          %430 = sbr.rel (%p428) target = $region56
        $region55: #{tpu_custom_call.1} parent=11 // pred_region
          _
        $region56: #{tpu_custom_call.1} parent=11 // pred_fallthru
          _
        // Predicated region
        $region57: #{tpu_custom_call.1} parent=11 // pred_check
          %p431 = pneg %p317
        $region58: #{tpu_custom_call.1} parent=11 // pred_check_branch
          %433 = sbr.rel (%p431) target = $region60
        $region59: #{tpu_custom_call.1} parent=11 // pred_region
          _
        $region60: #{tpu_custom_call.1} parent=11 // pred_fallthru
          _
      $region12: #{tpu_custom_call.1} parent=5 // pred_fallthru
        _
      %p434 = scmp.lt.s32.totalorder %s27, 4
      // Predicated region
      $region61: #{tpu_custom_call.1} parent=5 // pred_check
        %p435 = pneg %p434
      $region62: #{tpu_custom_call.1} parent=5 // pred_check_branch
        %437 = sbr.rel (%p435) target = $region64
      $region63: #{tpu_custom_call.1} parent=5 // pred_region
        // Predicated region
        $region65: #{tpu_custom_call.1} parent=63 // pred_check
          %p438 = pneg %p59
        $region66: #{tpu_custom_call.1} parent=63 // pred_check_branch
          %440 = sbr.rel (%p438) target = $region68
        $region67: #{tpu_custom_call.1} parent=63 // pred_region
          %s441 = sand.u32 %s49, 1
          %s442 = scalar_lea.sflag [#allocation3], %s441
          %s443 = sand.u32 %s49, 1
          %s444 = smul.addr %s443, 8
          %s445 = scalar_lea.vmem [#allocation2], %s444
          %s447 = ssub.s32 128, 128
          %448 = vsyncadd %s442, %s447
          %s449 = smul.addr %s34, 128
          %s450 = scalar_lea.hbm %s0, %s449
          %s452 = sshll.u32 %s445, 4
          %s453 = int_to_ptr.vmem [resolvable:$true] %s452
          %455 = dma.hbm_to_vmem [thread:$0]  %s450, 128, %s453, %s442
        $region68: #{tpu_custom_call.1} parent=63 // pred_fallthru
          _
      $region64: #{tpu_custom_call.1} parent=5 // pred_fallthru
        _
      %p456 = scmp.le.s32.totalorder 1, %s27
      %p457 = scmp.lt.s32.totalorder %s27, 5
      %p458 = pnand %p456, %p457
      %p459 = pneg %p458
      // Predicated region
      $region69: #{tpu_custom_call.1} parent=5 // pred_check
        _
      $region70: #{tpu_custom_call.1} parent=5 // pred_check_branch
        %461 = sbr.rel (%p458) target = $region72
      $region71: #{tpu_custom_call.1} parent=5 // pred_region
        %s462 = ssub.s32 %s27, 1
        %s463 = sand.u32 %s52, 1
        %s464 = scalar_lea.sflag [#allocation3], %s463
        %s465 = sand.u32 %s52, 1
        %s466 = smul.addr %s465, 8
        %s467 = scalar_lea.vmem [#allocation2], %s466
        // Predicated region
        $region73: #{tpu_custom_call.1} parent=71 // pred_check
          %p468 = pneg %p65
        $region74: #{tpu_custom_call.1} parent=71 // pred_check_branch
          %470 = sbr.rel (%p468) target = $region76
        $region75: #{tpu_custom_call.1} parent=71 // pred_region
          %471 = dma.done %s464, 128
        $region76: #{tpu_custom_call.1} parent=71 // pred_fallthru
          _
        // Predicated region
        $region77: #{tpu_custom_call.1} parent=71 // pred_check
          %p472 = pneg %p86
        $region78: #{tpu_custom_call.1} parent=71 // pred_check_branch
          %474 = sbr.rel (%p472) target = $region80
        $region79: #{tpu_custom_call.1} parent=71 // pred_region
          %475 = dma.done [#allocation6], 3072
        $region80: #{tpu_custom_call.1} parent=71 // pred_fallthru
          _
        // Predicated region
        $region81: #{tpu_custom_call.1} parent=71 // pred_check
          %p476 = pneg %p128
        $region82: #{tpu_custom_call.1} parent=71 // pred_check_branch
          %478 = sbr.rel (%p476) target = $region84
        $region83: #{tpu_custom_call.1} parent=71 // pred_region
          %479 = dma.done [#allocation6], 1024
        $region84: #{tpu_custom_call.1} parent=71 // pred_fallthru
          _
        // Predicated region
        $region85: #{tpu_custom_call.1} parent=71 // pred_check
          %p480 = pneg %p212
        $region86: #{tpu_custom_call.1} parent=71 // pred_check_branch
          %482 = sbr.rel (%p480) target = $region88
        $region87: #{tpu_custom_call.1} parent=71 // pred_region
          %483 = dma.done [#allocation9], 2048
        $region88: #{tpu_custom_call.1} parent=71 // pred_fallthru
          _
        // Predicated region
        $region89: #{tpu_custom_call.1} parent=71 // pred_check
          %p484 = pneg %p254
        $region90: #{tpu_custom_call.1} parent=71 // pred_check_branch
          %486 = sbr.rel (%p484) target = $region92
        $region91: #{tpu_custom_call.1} parent=71 // pred_region
          %487 = dma.done [#allocation9], 2048
        $region92: #{tpu_custom_call.1} parent=71 // pred_fallthru
          _
        %s488 = sand.u32 %s52, 1
        %s489 = scalar_lea.sflag [#allocation3], %s488
        %s490 = sand.u32 %s52, 1
        %s491 = smul.addr %s490, 8
        %s492 = scalar_lea.vmem [#allocation2], %s491
        %p493 = pneg %p65
        %p494 = pneg %p62
        %p495 = pneg %p86
        %p496 = pneg %p83
        %p497 = pneg %p107
        %p498 = pneg %p104
        %p499 = pneg %p128
        %p500 = pneg %p125
        %p501 = pneg %p149
        %p502 = pneg %p146
        %p503 = pneg %p170
        %p504 = pneg %p167
        %p505 = pneg %p191
        %p506 = pneg %p188
        %p507 = pneg %p212
        %p508 = pneg %p209
        %p509 = pneg %p233
        %p510 = pneg %p230
        %p511 = pneg %p254
        %p512 = pneg %p251
        %p513 = pneg %p275
        %p514 = pneg %p272
        %p515 = pneg %p296
        %p516 = pneg %p293
        %p517 = pneg %p317
        %p518 = pneg %p314
        %p519 = pneg %p343
        %p520 = pneg %p340
        %s521 = sand.u32 %s330, 1
        %s522 = scalar_lea.sflag [#allocation4], %s521
        %s523 = sand.u32 %s330, 1
        %s524 = smul.addr %s523, 8
        %s525 = scalar_lea.vmem [#allocation11], %s524
        %p527 = scmp.eq.s32.totalorder %s37, 0
        // Predicated region
        $region93: #{tpu_custom_call.1} parent=71 // pred_check
          %p528 = pneg %p527
        $region94: #{tpu_custom_call.1} parent=71 // pred_check_branch
          %530 = sbr.rel (%p528) target = $region96
        $region95: #{tpu_custom_call.1} parent=71 // pred_region
          %v531 = vld [vmem:[%s467] sm:$0xff]
          %532 = vst [vmem:[%s525] sm:$0xff] %v531
        $region96: #{tpu_custom_call.1} parent=71 // pred_fallthru
          _
        %v533 = vld [vmem:[%s525] sm:$0xff]
        %v534 = vld [vmem:[#allocation5] sm:$0xff]
        %v535 = vld [vmem:[#allocation5 + $0x8] sm:$0xf]
        %v536 = vld [vmem:[#allocation5 + $0xc] sm:$0xff]
        %v537 = vld [vmem:[#allocation5 + $0x14] sm:$0xf]
        %v538 = vld [vmem:[#allocation5 + $0x18] sm:$0xff]
        %v539 = vld [vmem:[#allocation5 + $0x20] sm:$0xf]
        %v540 = vld [vmem:[#allocation5 + $0x24] sm:$0xff]
        %v541 = vld [vmem:[#allocation5 + $0x2c] sm:$0xf]
        %v542 = vld [vmem:[#allocation5 + $0x30] sm:$0xff]
        %v543 = vld [vmem:[#allocation5 + $0x38] sm:$0xf]
        %v544 = vld [vmem:[#allocation5 + $0x3c] sm:$0xff]
        %v545 = vld [vmem:[#allocation5 + $0x44] sm:$0xf]
        %v546 = vld [vmem:[#allocation5 + $0x48] sm:$0xff]
        %v547 = vld [vmem:[#allocation5 + $0x50] sm:$0xf]
        %v548 = vld [vmem:[#allocation5 + $0x54] sm:$0xff]
        %v549 = vld [vmem:[#allocation5 + $0x5c] sm:$0xf]
        %v550 = vld [vmem:[#allocation5 + $0x60] sm:$0xff]
        %v551 = vld [vmem:[#allocation5 + $0x68] sm:$0xf]
        %v552 = vld [vmem:[#allocation5 + $0x6c] sm:$0xff]
        %v553 = vld [vmem:[#allocation5 + $0x74] sm:$0xf]
        %v554 = vld [vmem:[#allocation5 + $0x78] sm:$0xff]
        %v555 = vld [vmem:[#allocation5 + $0x80] sm:$0xf]
        %v556 = vld [vmem:[#allocation5 + $0x84] sm:$0xff]
        %v557 = vld [vmem:[#allocation5 + $0x8c] sm:$0xf]
        %v558 = vld [vmem:[#allocation5 + $0x90] sm:$0xff]
        %v559 = vld [vmem:[#allocation5 + $0x98] sm:$0xf]
        %v560 = vld [vmem:[#allocation5 + $0x9c] sm:$0xff]
        %v561 = vld [vmem:[#allocation5 + $0xa4] sm:$0xf]
        %v562 = vld [vmem:[#allocation5 + $0xa8] sm:$0xff]
        %v563 = vld [vmem:[#allocation5 + $0xb0] sm:$0xf]
        %v564 = vld [vmem:[#allocation5 + $0xb4] sm:$0xff]
        %v565 = vld [vmem:[#allocation5 + $0xbc] sm:$0xf]
        %v566 = vpack.c.bf16 %v533, %v533
        %v567 = vld [vmem:[%s2] sm:$0x7]
        %v569 = vlaneseq
        %v570 = vshrl.u32 %v569, 7
        %v571 = vsub.s32 0, %v570
        %v572 = vrot.slane %v567, %v571
        %v573 = vlaneseq
        %v574 = vshrl.u32 %v573, 7
        %v575 = vsub.s32 1, %v574
        %v576 = vrot.slane %v567, %v575
        %v577 = vlaneseq
        %v578 = vshrl.u32 %v577, 7
        %v579 = vsub.s32 2, %v578
        %v580 = vrot.slane %v567, %v579
        %v616 = vunpack.c.l.b16 %v534
        %v617 = vunpack.c.h.b16 %v534
        %v618 = vunpack.c.l.b16 %v535
        %v619 = vunpack.c.l.b16 %v536
        %v620 = vunpack.c.h.b16 %v536
        %v621 = vunpack.c.l.b16 %v537
        %v622 = vunpack.c.l.b16 %v538
        %v623 = vunpack.c.h.b16 %v538
        %v624 = vunpack.c.l.b16 %v539
        %v625 = vunpack.c.l.b16 %v540
        %v626 = vunpack.c.h.b16 %v540
        %v627 = vunpack.c.l.b16 %v541
        %v628 = vunpack.c.l.b16 %v542
        %v629 = vunpack.c.h.b16 %v542
        %v630 = vunpack.c.l.b16 %v543
        %v631 = vunpack.c.l.b16 %v544
        %v632 = vunpack.c.h.b16 %v544
        %v633 = vunpack.c.l.b16 %v545
        %v634 = vunpack.c.l.b16 %v546
        %v635 = vunpack.c.h.b16 %v546
        %v636 = vunpack.c.l.b16 %v547
        %v637 = vunpack.c.l.b16 %v548
        %v638 = vunpack.c.h.b16 %v548
        %v639 = vunpack.c.l.b16 %v549
        %v640 = vunpack.c.l.b16 %v550
        %v641 = vunpack.c.h.b16 %v550
        %v642 = vunpack.c.l.b16 %v551
        %v643 = vunpack.c.l.b16 %v552
        %v644 = vunpack.c.h.b16 %v552
        %v645 = vunpack.c.l.b16 %v553
        %v646 = vunpack.c.l.b16 %v554
        %v647 = vunpack.c.h.b16 %v554
        %v648 = vunpack.c.l.b16 %v555
        %v649 = vunpack.c.l.b16 %v556
        %v650 = vunpack.c.h.b16 %v556
        %v651 = vunpack.c.l.b16 %v557
        %v652 = vunpack.c.l.b16 %v558
        %v653 = vunpack.c.h.b16 %v558
        %v654 = vunpack.c.l.b16 %v559
        %v655 = vunpack.c.l.b16 %v560
        %v656 = vunpack.c.h.b16 %v560
        %v657 = vunpack.c.l.b16 %v561
        %v658 = vunpack.c.l.b16 %v562
        %v659 = vunpack.c.h.b16 %v562
        %v660 = vunpack.c.l.b16 %v563
        %v661 = vunpack.c.l.b16 %v564
        %v662 = vunpack.c.h.b16 %v564
        %v663 = vunpack.c.l.b16 %v565
        %v664 = vpack.c.b16 %v619, %v616
        %v665 = vpack.c.b16 %v620, %v617
        %v666 = vpack.c.b16 %v621, %v618
        %v667 = vpack.c.b16 %v625, %v622
        %v668 = vpack.c.b16 %v626, %v623
        %v669 = vpack.c.b16 %v627, %v624
        %v670 = vpack.c.b16 %v631, %v628
        %v671 = vpack.c.b16 %v632, %v629
        %v672 = vpack.c.b16 %v633, %v630
        %v673 = vpack.c.b16 %v637, %v634
        %v674 = vpack.c.b16 %v638, %v635
        %v675 = vpack.c.b16 %v639, %v636
        %v676 = vpack.c.b16 %v643, %v640
        %v677 = vpack.c.b16 %v644, %v641
        %v678 = vpack.c.b16 %v645, %v642
        %v679 = vpack.c.b16 %v649, %v646
        %v680 = vpack.c.b16 %v650, %v647
        %v681 = vpack.c.b16 %v651, %v648
        %v682 = vpack.c.b16 %v655, %v652
        %v683 = vpack.c.b16 %v656, %v653
        %v684 = vpack.c.b16 %v657, %v654
        %v685 = vpack.c.b16 %v661, %v658
        %v686 = vpack.c.b16 %v662, %v659
        %v687 = vpack.c.b16 %v663, %v660
        %712 = vmatprep.subr.bf16.mxu0 %v665
        %713 = vmatpush1.bf16.msra.mxu0 %v664
        %714 = vmatprep.subr.bf16.mxu0 %v668
        %715 = vmatpush1.bf16.msra.mxu0 %v667
        %716 = vmatprep.subr.bf16.mxu0 %v671
        %717 = vmatpush1.bf16.msra.mxu0 %v670
        %718 = vmatprep.subr.bf16.mxu0 %v674
        %719 = vmatpush1.bf16.msra.mxu0 %v673
        %720 = vmatprep.subr.bf16.mxu0 %v677
        %721 = vmatpush1.bf16.msra.mxu0 %v676
        %722 = vmatprep.subr.bf16.mxu0 %v680
        %723 = vmatpush1.bf16.msra.mxu0 %v679
        %724 = vmatprep.subr.bf16.mxu0 %v683
        %725 = vmatpush1.bf16.msra.mxu0 %v682
        %726 = vmatprep.subr.bf16.mxu0 %v686
        %727 = vmatpush1.bf16.msra.mxu0 %v685
        %728 = vmatprep.subr.bf16.mxu0 0
        %729 = vmatpush1.bf16.msra.mxu0 0
        %730 = vmatprep.subr.bf16.mxu0 0
        %731 = vmatpush1.bf16.msra.mxu0 0
        %732 = vmatprep.subr.bf16.mxu0 0
        %733 = vmatpush1.bf16.msra.mxu0 0
        %734 = vmatprep.subr.bf16.mxu0 0
        %735 = vmatpush1.bf16.msra.mxu0 0
        %736 = vmatprep.subr.bf16.mxu0 0
        %737 = vmatpush1.bf16.msra.mxu0 0
        %738 = vmatprep.subr.bf16.mxu0 0
        %739 = vmatpush1.bf16.msra.mxu0 0
        %740 = vmatprep.subr.bf16.mxu0 0
        %741 = vmatpush1.bf16.msra.mxu0 0
        %742 = vmatprep.subr.bf16.mxu0 0
        %743 = vmatpush1.bf16.msra.mxu0 0
        %744 = vmatprep.mubr.bf16.mxu0 0
        %745 = vmatmul.mubr.bf16.gmra.mrb[0].mxu0 %v566
        %v746 = vpop.f32.mrb[0].mxu0
        %v747 = vadd.f32 %v572, %v746
        %v748 = vpop.f32.mrb[0].mxu0
        %v749 = vadd.f32 %v576, %v748
        %v750 = vpop.f32.mrb[0].mxu0
        %v751 = vpop.f32.mrb[0].mxu0
        %752 = vdwg.mxu0
        %753 = vmatprep.subr.bf16.mxu0 0
        %754 = vmatpush1.bf16.msra.mxu0 %v666
        %755 = vmatprep.subr.bf16.mxu0 0
        %756 = vmatpush1.bf16.msra.mxu0 %v669
        %757 = vmatprep.subr.bf16.mxu0 0
        %758 = vmatpush1.bf16.msra.mxu0 %v672
        %759 = vmatprep.subr.bf16.mxu0 0
        %760 = vmatpush1.bf16.msra.mxu0 %v675
        %761 = vmatprep.subr.bf16.mxu0 0
        %762 = vmatpush1.bf16.msra.mxu0 %v678
        %763 = vmatprep.subr.bf16.mxu0 0
        %764 = vmatpush1.bf16.msra.mxu0 %v681
        %765 = vmatprep.subr.bf16.mxu0 0
        %766 = vmatpush1.bf16.msra.mxu0 %v684
        %767 = vmatprep.subr.bf16.mxu0 0
        %768 = vmatpush1.bf16.msra.mxu0 %v687
        %769 = vmatprep.subr.bf16.mxu0 0
        %770 = vmatpush1.bf16.msra.mxu0 0
        %771 = vmatprep.subr.bf16.mxu0 0
        %772 = vmatpush1.bf16.msra.mxu0 0
        %773 = vmatprep.subr.bf16.mxu0 0
        %774 = vmatpush1.bf16.msra.mxu0 0
        %775 = vmatprep.subr.bf16.mxu0 0
        %776 = vmatpush1.bf16.msra.mxu0 0
        %777 = vmatprep.subr.bf16.mxu0 0
        %778 = vmatpush1.bf16.msra.mxu0 0
        %779 = vmatprep.subr.bf16.mxu0 0
        %780 = vmatpush1.bf16.msra.mxu0 0
        %781 = vmatprep.subr.bf16.mxu0 0
        %782 = vmatpush1.bf16.msra.mxu0 0
        %783 = vmatprep.subr.bf16.mxu0 0
        %784 = vmatpush1.bf16.msra.mxu0 0
        %785 = vmatprep.mubr.bf16.mxu0 0
        %786 = vmatmul.mubr.bf16.gmra.mrb[0].mxu0 %v566
        %v787 = vpop.f32.mrb[0].mxu0
        %v788 = vadd.f32 %v580, %v787
        %v789 = vpop.f32.mrb[0].mxu0
        %v790 = vpop.f32.mrb[0].mxu0
        %v791 = vpop.f32.mrb[0].mxu0
        %792 = vdwg.mxu0
        %v793 = vld [vmem:[#allocation7] sm:$0xf]
        %v794 = vld [vmem:[#allocation7 + $0x4] sm:$0xf]
        %v795 = vld [vmem:[#allocation7 + $0x8] sm:$0xf]
        %v796 = vld [vmem:[#allocation7 + $0xc] sm:$0xf]
        %v797 = vld [vmem:[#allocation7 + $0x10] sm:$0xf]
        %v798 = vld [vmem:[#allocation7 + $0x14] sm:$0xf]
        %v799 = vld [vmem:[#allocation7 + $0x18] sm:$0xf]
        %v800 = vld [vmem:[#allocation7 + $0x1c] sm:$0xf]
        %v801 = vld [vmem:[#allocation7 + $0x20] sm:$0xf]
        %v802 = vld [vmem:[#allocation7 + $0x24] sm:$0xf]
        %v803 = vld [vmem:[#allocation7 + $0x28] sm:$0xf]
        %v804 = vld [vmem:[#allocation7 + $0x2c] sm:$0xf]
        %v805 = vld [vmem:[#allocation7 + $0x30] sm:$0xf]
        %v806 = vld [vmem:[#allocation7 + $0x34] sm:$0xf]
        %v807 = vld [vmem:[#allocation7 + $0x38] sm:$0xf]
        %v808 = vld [vmem:[#allocation7 + $0x3c] sm:$0xf]
        %v809 = vld [vmem:[%s4] sm:$0x1]
        %v810 = vpack.c.bf16 %v749, %v749
        %v811 = vpack.c.bf16 %v747, %v747
        %vm812 = vcmask 261120
        %v814 = vsel %vm812, %v811, 0
        %v817 = vsel %vm812, %v810, 0
        %819 = vmatprep.subr.bf16.mxu0 0
        %820 = vmatpush1.bf16.xpose.msra.mxu0 %v817
        %821 = vmatprep.subr.bf16.mxu0 0
        %822 = vmatpush1.bf16.xpose.msra.mxu0 0
        %823 = vmatprep.subr.bf16.mxu0 0
        %824 = vmatpush1.bf16.xpose.msra.mxu0 0
        %825 = vmatprep.subr.bf16.mxu0 0
        %826 = vmatpush1.bf16.xpose.msra.mxu0 0
        %827 = vmatprep.subr.bf16.mxu0 0
        %828 = vmatpush1.bf16.xpose.msra.mxu0 0
        %829 = vmatprep.subr.bf16.mxu0 0
        %830 = vmatpush1.bf16.xpose.msra.mxu0 0
        %831 = vmatprep.subr.bf16.mxu0 0
        %832 = vmatpush1.bf16.xpose.msra.mxu0 0
        %833 = vmatprep.subr.bf16.mxu0 0
        %834 = vmatpush1.bf16.xpose.msra.mxu0 0
        %835 = vmatprep.subr.bf16.mxu0 0
        %836 = vmatpush1.bf16.xpose.msra.mxu0 0
        %837 = vmatprep.subr.bf16.mxu0 0
        %838 = vmatpush1.bf16.xpose.msra.mxu0 0
        %839 = vmatprep.subr.bf16.mxu0 0
        %840 = vmatpush1.bf16.xpose.msra.mxu0 0
        %841 = vmatprep.subr.bf16.mxu0 0
        %842 = vmatpush1.bf16.xpose.msra.mxu0 0
        %843 = vmatprep.subr.bf16.mxu0 0
        %844 = vmatpush1.bf16.xpose.msra.mxu0 0
        %845 = vmatprep.subr.bf16.mxu0 0
        %846 = vmatpush1.bf16.xpose.msra.mxu0 0
        %847 = vmatprep.subr.bf16.mxu0 0
        %848 = vmatpush1.bf16.xpose.msra.mxu0 0
        %849 = vmatprep.subr.bf16.mxu0 0
        %850 = vmatpush1.bf16.xpose.msra.mxu0 0
        %851 = vmatprep.mubr.bf16.mxu0 0
        %852 = vmatmul.mubr.bf16.gmra.mrb[0].mxu0 %v814
        %v853 = vpop.f32.mrb[0].mxu0
        %v854 = vadd.f32 0.0, %v853
        %v855 = vpop.f32.mrb[0].mxu0
        %v856 = vpop.f32.mrb[0].mxu0
        %v857 = vpop.f32.mrb[0].mxu0
        %858 = vdwg.mxu0
        %v859 = vmul.f32 %v854, 0.17677669
        %vm860 = vcmask 64512
        %v861 = vsel %vm860, %v859, -inf
        %862 = vmax.xlane.f32.xlu0 %v861
        %v863 = vpop.xlane.xlu0 %862
        %v864 = vsub.f32 %v859, %v863
        %v865 = vmul.f32 %v864, 1.442695
        %v866 = vpow.pop %v865
        %v867 = vsel %vm860, %v866, 0.0
        %868 = vadd.xlane.f32.xlu0 %v867
        %v869 = vpop.xlane.xlu0 %868
        %v870 = vrcp.pop %v869
        %v871 = vmul.f32 %v866, %v870
        %v872 = vpack.c.bf16 %v871, %v871
        %v873 = vpack.c.bf16 %v788, %v788
        %v875 = vsel %vm860, %v872, 0
        %vm877 = vcmask 1043456
        %v879 = vsel %vm877, %v873, 0
        %881 = vmatprep.subr.bf16.mxu0 0
        %882 = vmatpush1.bf16.msra.mxu0 %v879
        %883 = vmatprep.subr.bf16.mxu0 0
        %884 = vmatpush1.bf16.msra.mxu0 0
        %885 = vmatprep.subr.bf16.mxu0 0
        %886 = vmatpush1.bf16.msra.mxu0 0
        %887 = vmatprep.subr.bf16.mxu0 0
        %888 = vmatpush1.bf16.msra.mxu0 0
        %889 = vmatprep.subr.bf16.mxu0 0
        %890 = vmatpush1.bf16.msra.mxu0 0
        %891 = vmatprep.subr.bf16.mxu0 0
        %892 = vmatpush1.bf16.msra.mxu0 0
        %893 = vmatprep.subr.bf16.mxu0 0
        %894 = vmatpush1.bf16.msra.mxu0 0
        %895 = vmatprep.subr.bf16.mxu0 0
        %896 = vmatpush1.bf16.msra.mxu0 0
        %897 = vmatprep.subr.bf16.mxu0 0
        %898 = vmatpush1.bf16.msra.mxu0 0
        %899 = vmatprep.subr.bf16.mxu0 0
        %900 = vmatpush1.bf16.msra.mxu0 0
        %901 = vmatprep.subr.bf16.mxu0 0
        %902 = vmatpush1.bf16.msra.mxu0 0
        %903 = vmatprep.subr.bf16.mxu0 0
        %904 = vmatpush1.bf16.msra.mxu0 0
        %905 = vmatprep.subr.bf16.mxu0 0
        %906 = vmatpush1.bf16.msra.mxu0 0
        %907 = vmatprep.subr.bf16.mxu0 0
        %908 = vmatpush1.bf16.msra.mxu0 0
        %909 = vmatprep.subr.bf16.mxu0 0
        %910 = vmatpush1.bf16.msra.mxu0 0
        %911 = vmatprep.subr.bf16.mxu0 0
        %912 = vmatpush1.bf16.msra.mxu0 0
        %913 = vmatprep.mubr.bf16.mxu0 0
        %914 = vmatmul.mubr.bf16.gmra.mrb[0].mxu0 %v875
        %v915 = vpop.f32.mrb[0].mxu0
        %v916 = vadd.f32 0.0, %v915
        %v917 = vpop.f32.mrb[0].mxu0
        %v918 = vpop.f32.mrb[0].mxu0
        %v919 = vpop.f32.mrb[0].mxu0
        %920 = vdwg.mxu0
        %v921 = vpack.c.bf16 %v916, %v916
        %923 = vrot.lane.b32.xlu0 %v811, 96
        %v924 = vpop.permute.xlu0 %923
        %926 = vrot.lane.b32.xlu0 %v810, 96
        %v927 = vpop.permute.xlu0 %926
        %v929 = vsel %vm812, %v924, 0
        %v932 = vsel %vm812, %v927, 0
        %934 = vmatprep.subr.bf16.mxu0 0
        %935 = vmatpush1.bf16.xpose.msra.mxu0 %v932
        %936 = vmatprep.subr.bf16.mxu0 0
        %937 = vmatpush1.bf16.xpose.msra.mxu0 0
        %938 = vmatprep.subr.bf16.mxu0 0
        %939 = vmatpush1.bf16.xpose.msra.mxu0 0
        %940 = vmatprep.subr.bf16.mxu0 0
        %941 = vmatpush1.bf16.xpose.msra.mxu0 0
        %942 = vmatprep.subr.bf16.mxu0 0
        %943 = vmatpush1.bf16.xpose.msra.mxu0 0
        %944 = vmatprep.subr.bf16.mxu0 0
        %945 = vmatpush1.bf16.xpose.msra.mxu0 0
        %946 = vmatprep.subr.bf16.mxu0 0
        %947 = vmatpush1.bf16.xpose.msra.mxu0 0
        %948 = vmatprep.subr.bf16.mxu0 0
        %949 = vmatpush1.bf16.xpose.msra.mxu0 0
        %950 = vmatprep.subr.bf16.mxu0 0
        %951 = vmatpush1.bf16.xpose.msra.mxu0 0
        %952 = vmatprep.subr.bf16.mxu0 0
        %953 = vmatpush1.bf16.xpose.msra.mxu0 0
        %954 = vmatprep.subr.bf16.mxu0 0
        %955 = vmatpush1.bf16.xpose.msra.mxu0 0
        %956 = vmatprep.subr.bf16.mxu0 0
        %957 = vmatpush1.bf16.xpose.msra.mxu0 0
        %958 = vmatprep.subr.bf16.mxu0 0
        %959 = vmatpush1.bf16.xpose.msra.mxu0 0
        %960 = vmatprep.subr.bf16.mxu0 0
        %961 = vmatpush1.bf16.xpose.msra.mxu0 0
        %962 = vmatprep.subr.bf16.mxu0 0
        %963 = vmatpush1.bf16.xpose.msra.mxu0 0
        %964 = vmatprep.subr.bf16.mxu0 0
        %965 = vmatpush1.bf16.xpose.msra.mxu0 0
        %966 = vmatprep.mubr.bf16.mxu0 0
        %967 = vmatmul.mubr.bf16.gmra.mrb[0].mxu0 %v929
        %v968 = vpop.f32.mrb[0].mxu0
        %v969 = vadd.f32 0.0, %v968
        %v970 = vpop.f32.mrb[0].mxu0
        %v971 = vpop.f32.mrb[0].mxu0
        %v972 = vpop.f32.mrb[0].mxu0
        %973 = vdwg.mxu0
        %v974 = vmul.f32 %v969, 0.17677669
        %v975 = vsel %vm860, %v974, -inf
        %976 = vmax.xlane.f32.xlu0 %v975
        %v977 = vpop.xlane.xlu0 %976
        %v978 = vsub.f32 %v974, %v977
        %v979 = vmul.f32 %v978, 1.442695
        %v980 = vpow.pop %v979
        %v981 = vsel %vm860, %v980, 0.0
        %982 = vadd.xlane.f32.xlu0 %v981
        %v983 = vpop.xlane.xlu0 %982
        %v984 = vrcp.pop %v983
        %v985 = vmul.f32 %v980, %v984
        %v986 = vpack.c.bf16 %v985, %v985
        %988 = vrot.lane.b32.xlu0 %v873, 96
        %v989 = vpop.permute.xlu0 %988
        %v991 = vsel %vm860, %v986, 0
        %v994 = vsel %vm877, %v989, 0
        %996 = vmatprep.subr.bf16.mxu0 0
        %997 = vmatpush1.bf16.msra.mxu0 %v994
        %998 = vmatprep.subr.bf16.mxu0 0
        %999 = vmatpush1.bf16.msra.mxu0 0
        %1000 = vmatprep.subr.bf16.mxu0 0
        %1001 = vmatpush1.bf16.msra.mxu0 0
        %1002 = vmatprep.subr.bf16.mxu0 0
        %1003 = vmatpush1.bf16.msra.mxu0 0
        %1004 = vmatprep.subr.bf16.mxu0 0
        %1005 = vmatpush1.bf16.msra.mxu0 0
        %1006 = vmatprep.subr.bf16.mxu0 0
        %1007 = vmatpush1.bf16.msra.mxu0 0
        %1008 = vmatprep.subr.bf16.mxu0 0
        %1009 = vmatpush1.bf16.msra.mxu0 0
        %1010 = vmatprep.subr.bf16.mxu0 0
        %1011 = vmatpush1.bf16.msra.mxu0 0
        %1012 = vmatprep.subr.bf16.mxu0 0
        %1013 = vmatpush1.bf16.msra.mxu0 0
        %1014 = vmatprep.subr.bf16.mxu0 0
        %1015 = vmatpush1.bf16.msra.mxu0 0
        %1016 = vmatprep.subr.bf16.mxu0 0
        %1017 = vmatpush1.bf16.msra.mxu0 0
        %1018 = vmatprep.subr.bf16.mxu0 0
        %1019 = vmatpush1.bf16.msra.mxu0 0
        %1020 = vmatprep.subr.bf16.mxu0 0
        %1021 = vmatpush1.bf16.msra.mxu0 0
        %1022 = vmatprep.subr.bf16.mxu0 0
        %1023 = vmatpush1.bf16.msra.mxu0 0
        %1024 = vmatprep.subr.bf16.mxu0 0
        %1025 = vmatpush1.bf16.msra.mxu0 0
        %1026 = vmatprep.subr.bf16.mxu0 0
        %1027 = vmatpush1.bf16.msra.mxu0 0
        %1028 = vmatprep.mubr.bf16.mxu0 0
        %1029 = vmatmul.mubr.bf16.gmra.mrb[0].mxu0 %v991
        %v1030 = vpop.f32.mrb[0].mxu0
        %v1031 = vadd.f32 0.0, %v1030
        %v1032 = vpop.f32.mrb[0].mxu0
        %v1033 = vpop.f32.mrb[0].mxu0
        %v1034 = vpop.f32.mrb[0].mxu0
        %1035 = vdwg.mxu0
        %v1036 = vpack.c.bf16 %v1031, %v1031
        %v1041 = vunpack.c.l.b16 %v797
        %v1042 = vunpack.c.l.b16 %v798
        %v1043 = vunpack.c.l.b16 %v799
        %v1044 = vunpack.c.l.b16 %v800
        %v1045 = vpack.c.b16 %v1042, %v1041
        %v1046 = vpack.c.b16 %v1044, %v1043
        %v1050 = vsel %vm812, %v1036, 0
        %1052 = vmatprep.subr.bf16.mxu0 0
        %1053 = vmatpush1.bf16.msra.mxu0 %v1045
        %1054 = vmatprep.subr.bf16.mxu0 0
        %1055 = vmatpush1.bf16.msra.mxu0 %v1046
        %1056 = vmatprep.subr.bf16.mxu0 0
        %1057 = vmatpush1.bf16.msra.mxu0 0
        %1058 = vmatprep.subr.bf16.mxu0 0
        %1059 = vmatpush1.bf16.msra.mxu0 0
        %1060 = vmatprep.subr.bf16.mxu0 0
        %1061 = vmatpush1.bf16.msra.mxu0 0
        %1062 = vmatprep.subr.bf16.mxu0 0
        %1063 = vmatpush1.bf16.msra.mxu0 0
        %1064 = vmatprep.subr.bf16.mxu0 0
        %1065 = vmatpush1.bf16.msra.mxu0 0
        %1066 = vmatprep.subr.bf16.mxu0 0
        %1067 = vmatpush1.bf16.msra.mxu0 0
        %1068 = vmatprep.subr.bf16.mxu0 0
        %1069 = vmatpush1.bf16.msra.mxu0 0
        %1070 = vmatprep.subr.bf16.mxu0 0
        %1071 = vmatpush1.bf16.msra.mxu0 0
        %1072 = vmatprep.subr.bf16.mxu0 0
        %1073 = vmatpush1.bf16.msra.mxu0 0
        %1074 = vmatprep.subr.bf16.mxu0 0
        %1075 = vmatpush1.bf16.msra.mxu0 0
        %1076 = vmatprep.subr.bf16.mxu0 0
        %1077 = vmatpush1.bf16.msra.mxu0 0
        %1078 = vmatprep.subr.bf16.mxu0 0
        %1079 = vmatpush1.bf16.msra.mxu0 0
        %1080 = vmatprep.subr.bf16.mxu0 0
        %1081 = vmatpush1.bf16.msra.mxu0 0
        %1082 = vmatprep.subr.bf16.mxu0 0
        %1083 = vmatpush1.bf16.msra.mxu0 0
        %1084 = vmatprep.mubr.bf16.mxu0 0
        %1085 = vmatmul.mubr.bf16.gmra.mrb[0].mxu0 %v1050
        %v1086 = vpop.f32.mrb[0].mxu0
        %v1087 = vadd.f32 0.0, %v1086
        %v1088 = vpop.f32.mrb[0].mxu0
        %v1089 = vpop.f32.mrb[0].mxu0
        %v1090 = vpop.f32.mrb[0].mxu0
        %1091 = vdwg.mxu0
        %v1096 = vunpack.c.l.b16 %v793
        %v1097 = vunpack.c.l.b16 %v794
        %v1098 = vunpack.c.l.b16 %v795
        %v1099 = vunpack.c.l.b16 %v796
        %v1100 = vpack.c.b16 %v1097, %v1096
        %v1101 = vpack.c.b16 %v1099, %v1098
        %v1105 = vsel %vm812, %v921, 0
        %1107 = vmatprep.subr.bf16.mxu0 0
        %1108 = vmatpush1.bf16.msra.mxu0 %v1100
        %1109 = vmatprep.subr.bf16.mxu0 0
        %1110 = vmatpush1.bf16.msra.mxu0 %v1101
        %1111 = vmatprep.subr.bf16.mxu0 0
        %1112 = vmatpush1.bf16.msra.mxu0 0
        %1113 = vmatprep.subr.bf16.mxu0 0
        %1114 = vmatpush1.bf16.msra.mxu0 0
        %1115 = vmatprep.subr.bf16.mxu0 0
        %1116 = vmatpush1.bf16.msra.mxu0 0
        %1117 = vmatprep.subr.bf16.mxu0 0
        %1118 = vmatpush1.bf16.msra.mxu0 0
        %1119 = vmatprep.subr.bf16.mxu0 0
        %1120 = vmatpush1.bf16.msra.mxu0 0
        %1121 = vmatprep.subr.bf16.mxu0 0
        %1122 = vmatpush1.bf16.msra.mxu0 0
        %1123 = vmatprep.subr.bf16.mxu0 0
        %1124 = vmatpush1.bf16.msra.mxu0 0
        %1125 = vmatprep.subr.bf16.mxu0 0
        %1126 = vmatpush1.bf16.msra.mxu0 0
        %1127 = vmatprep.subr.bf16.mxu0 0
        %1128 = vmatpush1.bf16.msra.mxu0 0
        %1129 = vmatprep.subr.bf16.mxu0 0
        %1130 = vmatpush1.bf16.msra.mxu0 0
        %1131 = vmatprep.subr.bf16.mxu0 0
        %1132 = vmatpush1.bf16.msra.mxu0 0
        %1133 = vmatprep.subr.bf16.mxu0 0
        %1134 = vmatpush1.bf16.msra.mxu0 0
        %1135 = vmatprep.subr.bf16.mxu0 0
        %1136 = vmatpush1.bf16.msra.mxu0 0
        %1137 = vmatprep.subr.bf16.mxu0 0
        %1138 = vmatpush1.bf16.msra.mxu0 0
        %1139 = vmatprep.mubr.bf16.mxu0 0
        %1140 = vmatmul.mubr.bf16.gmra.mrb[0].mxu0 %v1105
        %v1141 = vpop.f32.mrb[0].mxu0
        %v1142 = vadd.f32 %v1087, %v1141
        %v1143 = vpop.f32.mrb[0].mxu0
        %v1144 = vpop.f32.mrb[0].mxu0
        %v1145 = vpop.f32.mrb[0].mxu0
        %1146 = vdwg.mxu0
        %1147 = vrot.lane.b32.xlu0 %v811, 64
        %v1148 = vpop.permute.xlu0 %1147
        %1149 = vrot.lane.b32.xlu0 %v810, 64
        %v1150 = vpop.permute.xlu0 %1149
        %v1152 = vsel %vm812, %v1148, 0
        %v1155 = vsel %vm812, %v1150, 0
        %1157 = vmatprep.subr.bf16.mxu0 0
        %1158 = vmatpush1.bf16.xpose.msra.mxu0 %v1155
        %1159 = vmatprep.subr.bf16.mxu0 0
        %1160 = vmatpush1.bf16.xpose.msra.mxu0 0
        %1161 = vmatprep.subr.bf16.mxu0 0
        %1162 = vmatpush1.bf16.xpose.msra.mxu0 0
        %1163 = vmatprep.subr.bf16.mxu0 0
        %1164 = vmatpush1.bf16.xpose.msra.mxu0 0
        %1165 = vmatprep.subr.bf16.mxu0 0
        %1166 = vmatpush1.bf16.xpose.msra.mxu0 0
        %1167 = vmatprep.subr.bf16.mxu0 0
        %1168 = vmatpush1.bf16.xpose.msra.mxu0 0
        %1169 = vmatprep.subr.bf16.mxu0 0
        %1170 = vmatpush1.bf16.xpose.msra.mxu0 0
        %1171 = vmatprep.subr.bf16.mxu0 0
        %1172 = vmatpush1.bf16.xpose.msra.mxu0 0
        %1173 = vmatprep.subr.bf16.mxu0 0
        %1174 = vmatpush1.bf16.xpose.msra.mxu0 0
        %1175 = vmatprep.subr.bf16.mxu0 0
        %1176 = vmatpush1.bf16.xpose.msra.mxu0 0
        %1177 = vmatprep.subr.bf16.mxu0 0
        %1178 = vmatpush1.bf16.xpose.msra.mxu0 0
        %1179 = vmatprep.subr.bf16.mxu0 0
        %1180 = vmatpush1.bf16.xpose.msra.mxu0 0
        %1181 = vmatprep.subr.bf16.mxu0 0
        %1182 = vmatpush1.bf16.xpose.msra.mxu0 0
        %1183 = vmatprep.subr.bf16.mxu0 0
        %1184 = vmatpush1.bf16.xpose.msra.mxu0 0
        %1185 = vmatprep.subr.bf16.mxu0 0
        %1186 = vmatpush1.bf16.xpose.msra.mxu0 0
        %1187 = vmatprep.subr.bf16.mxu0 0
        %1188 = vmatpush1.bf16.xpose.msra.mxu0 0
        %1189 = vmatprep.mubr.bf16.mxu0 0
        %1190 = vmatmul.mubr.bf16.gmra.mrb[0].mxu0 %v1152
        %v1191 = vpop.f32.mrb[0].mxu0
        %v1192 = vadd.f32 0.0, %v1191
        %v1193 = vpop.f32.mrb[0].mxu0
        %v1194 = vpop.f32.mrb[0].mxu0
        %v1195 = vpop.f32.mrb[0].mxu0
        %1196 = vdwg.mxu0
        %v1197 = vmul.f32 %v1192, 0.17677669
        %v1198 = vsel %vm860, %v1197, -inf
        %1199 = vmax.xlane.f32.xlu0 %v1198
        %v1200 = vpop.xlane.xlu0 %1199
        %v1201 = vsub.f32 %v1197, %v1200
        %v1202 = vmul.f32 %v1201, 1.442695
        %v1203 = vpow.pop %v1202
        %v1204 = vsel %vm860, %v1203, 0.0
        %1205 = vadd.xlane.f32.xlu0 %v1204
        %v1206 = vpop.xlane.xlu0 %1205
        %v1207 = vrcp.pop %v1206
        %v1208 = vmul.f32 %v1203, %v1207
        %v1209 = vpack.c.bf16 %v1208, %v1208
        %1210 = vrot.lane.b32.xlu0 %v873, 64
        %v1211 = vpop.permute.xlu0 %1210
        %v1213 = vsel %vm860, %v1209, 0
        %v1216 = vsel %vm877, %v1211, 0
        %1218 = vmatprep.subr.bf16.mxu0 0
        %1219 = vmatpush1.bf16.msra.mxu0 %v1216
        %1220 = vmatprep.subr.bf16.mxu0 0
        %1221 = vmatpush1.bf16.msra.mxu0 0
        %1222 = vmatprep.subr.bf16.mxu0 0
        %1223 = vmatpush1.bf16.msra.mxu0 0
        %1224 = vmatprep.subr.bf16.mxu0 0
        %1225 = vmatpush1.bf16.msra.mxu0 0
        %1226 = vmatprep.subr.bf16.mxu0 0
        %1227 = vmatpush1.bf16.msra.mxu0 0
        %1228 = vmatprep.subr.bf16.mxu0 0
        %1229 = vmatpush1.bf16.msra.mxu0 0
        %1230 = vmatprep.subr.bf16.mxu0 0
        %1231 = vmatpush1.bf16.msra.mxu0 0
        %1232 = vmatprep.subr.bf16.mxu0 0
        %1233 = vmatpush1.bf16.msra.mxu0 0
        %1234 = vmatprep.subr.bf16.mxu0 0
        %1235 = vmatpush1.bf16.msra.mxu0 0
        %1236 = vmatprep.subr.bf16.mxu0 0
        %1237 = vmatpush1.bf16.msra.mxu0 0
        %1238 = vmatprep.subr.bf16.mxu0 0
        %1239 = vmatpush1.bf16.msra.mxu0 0
        %1240 = vmatprep.subr.bf16.mxu0 0
        %1241 = vmatpush1.bf16.msra.mxu0 0
        %1242 = vmatprep.subr.bf16.mxu0 0
        %1243 = vmatpush1.bf16.msra.mxu0 0
        %1244 = vmatprep.subr.bf16.mxu0 0
        %1245 = vmatpush1.bf16.msra.mxu0 0
        %1246 = vmatprep.subr.bf16.mxu0 0
        %1247 = vmatpush1.bf16.msra.mxu0 0
        %1248 = vmatprep.subr.bf16.mxu0 0
        %1249 = vmatpush1.bf16.msra.mxu0 0
        %1250 = vmatprep.mubr.bf16.mxu0 0
        %1251 = vmatmul.mubr.bf16.gmra.mrb[0].mxu0 %v1213
        %v1252 = vpop.f32.mrb[0].mxu0
        %v1253 = vadd.f32 0.0, %v1252
        %v1254 = vpop.f32.mrb[0].mxu0
        %v1255 = vpop.f32.mrb[0].mxu0
        %v1256 = vpop.f32.mrb[0].mxu0
        %1257 = vdwg.mxu0
        %v1258 = vpack.c.bf16 %v1253, %v1253
        %v1263 = vunpack.c.l.b16 %v801
        %v1264 = vunpack.c.l.b16 %v802
        %v1265 = vunpack.c.l.b16 %v803
        %v1266 = vunpack.c.l.b16 %v804
        %v1267 = vpack.c.b16 %v1264, %v1263
        %v1268 = vpack.c.b16 %v1266, %v1265
        %v1272 = vsel %vm812, %v1258, 0
        %1274 = vmatprep.subr.bf16.mxu0 0
        %1275 = vmatpush1.bf16.msra.mxu0 %v1267
        %1276 = vmatprep.subr.bf16.mxu0 0
        %1277 = vmatpush1.bf16.msra.mxu0 %v1268
        %1278 = vmatprep.subr.bf16.mxu0 0
        %1279 = vmatpush1.bf16.msra.mxu0 0
        %1280 = vmatprep.subr.bf16.mxu0 0
        %1281 = vmatpush1.bf16.msra.mxu0 0
        %1282 = vmatprep.subr.bf16.mxu0 0
        %1283 = vmatpush1.bf16.msra.mxu0 0
        %1284 = vmatprep.subr.bf16.mxu0 0
        %1285 = vmatpush1.bf16.msra.mxu0 0
        %1286 = vmatprep.subr.bf16.mxu0 0
        %1287 = vmatpush1.bf16.msra.mxu0 0
        %1288 = vmatprep.subr.bf16.mxu0 0
        %1289 = vmatpush1.bf16.msra.mxu0 0
        %1290 = vmatprep.subr.bf16.mxu0 0
        %1291 = vmatpush1.bf16.msra.mxu0 0
        %1292 = vmatprep.subr.bf16.mxu0 0
        %1293 = vmatpush1.bf16.msra.mxu0 0
        %1294 = vmatprep.subr.bf16.mxu0 0
        %1295 = vmatpush1.bf16.msra.mxu0 0
        %1296 = vmatprep.subr.bf16.mxu0 0
        %1297 = vmatpush1.bf16.msra.mxu0 0
        %1298 = vmatprep.subr.bf16.mxu0 0
        %1299 = vmatpush1.bf16.msra.mxu0 0
        %1300 = vmatprep.subr.bf16.mxu0 0
        %1301 = vmatpush1.bf16.msra.mxu0 0
        %1302 = vmatprep.subr.bf16.mxu0 0
        %1303 = vmatpush1.bf16.msra.mxu0 0
        %1304 = vmatprep.subr.bf16.mxu0 0
        %1305 = vmatpush1.bf16.msra.mxu0 0
        %1306 = vmatprep.mubr.bf16.mxu0 0
        %1307 = vmatmul.mubr.bf16.gmra.mrb[0].mxu0 %v1272
        %v1308 = vpop.f32.mrb[0].mxu0
        %v1309 = vadd.f32 0.0, %v1308
        %v1310 = vpop.f32.mrb[0].mxu0
        %v1311 = vpop.f32.mrb[0].mxu0
        %v1312 = vpop.f32.mrb[0].mxu0
        %1313 = vdwg.mxu0
        %v1314 = vadd.f32 %v1142, %v1309
        %1315 = vrot.lane.b32.xlu0 %v811, 32
        %v1316 = vpop.permute.xlu0 %1315
        %1317 = vrot.lane.b32.xlu0 %v810, 32
        %v1318 = vpop.permute.xlu0 %1317
        %v1320 = vsel %vm812, %v1316, 0
        %v1323 = vsel %vm812, %v1318, 0
        %1325 = vmatprep.subr.bf16.mxu0 0
        %1326 = vmatpush1.bf16.xpose.msra.mxu0 %v1323
        %1327 = vmatprep.subr.bf16.mxu0 0
        %1328 = vmatpush1.bf16.xpose.msra.mxu0 0
        %1329 = vmatprep.subr.bf16.mxu0 0
        %1330 = vmatpush1.bf16.xpose.msra.mxu0 0
        %1331 = vmatprep.subr.bf16.mxu0 0
        %1332 = vmatpush1.bf16.xpose.msra.mxu0 0
        %1333 = vmatprep.subr.bf16.mxu0 0
        %1334 = vmatpush1.bf16.xpose.msra.mxu0 0
        %1335 = vmatprep.subr.bf16.mxu0 0
        %1336 = vmatpush1.bf16.xpose.msra.mxu0 0
        %1337 = vmatprep.subr.bf16.mxu0 0
        %1338 = vmatpush1.bf16.xpose.msra.mxu0 0
        %1339 = vmatprep.subr.bf16.mxu0 0
        %1340 = vmatpush1.bf16.xpose.msra.mxu0 0
        %1341 = vmatprep.subr.bf16.mxu0 0
        %1342 = vmatpush1.bf16.xpose.msra.mxu0 0
        %1343 = vmatprep.subr.bf16.mxu0 0
        %1344 = vmatpush1.bf16.xpose.msra.mxu0 0
        %1345 = vmatprep.subr.bf16.mxu0 0
        %1346 = vmatpush1.bf16.xpose.msra.mxu0 0
        %1347 = vmatprep.subr.bf16.mxu0 0
        %1348 = vmatpush1.bf16.xpose.msra.mxu0 0
        %1349 = vmatprep.subr.bf16.mxu0 0
        %1350 = vmatpush1.bf16.xpose.msra.mxu0 0
        %1351 = vmatprep.subr.bf16.mxu0 0
        %1352 = vmatpush1.bf16.xpose.msra.mxu0 0
        %1353 = vmatprep.subr.bf16.mxu0 0
        %1354 = vmatpush1.bf16.xpose.msra.mxu0 0
        %1355 = vmatprep.subr.bf16.mxu0 0
        %1356 = vmatpush1.bf16.xpose.msra.mxu0 0
        %1357 = vmatprep.mubr.bf16.mxu0 0
        %1358 = vmatmul.mubr.bf16.gmra.mrb[0].mxu0 %v1320
        %v1359 = vpop.f32.mrb[0].mxu0
        %v1360 = vadd.f32 0.0, %v1359
        %v1361 = vpop.f32.mrb[0].mxu0
        %v1362 = vpop.f32.mrb[0].mxu0
        %v1363 = vpop.f32.mrb[0].mxu0
        %1364 = vdwg.mxu0
        %v1365 = vmul.f32 %v1360, 0.17677669
        %v1366 = vsel %vm860, %v1365, -inf
        %1367 = vmax.xlane.f32.xlu0 %v1366
        %v1368 = vpop.xlane.xlu0 %1367
        %v1369 = vsub.f32 %v1365, %v1368
        %v1370 = vmul.f32 %v1369, 1.442695
        %v1371 = vpow.pop %v1370
        %v1372 = vsel %vm860, %v1371, 0.0
        %1373 = vadd.xlane.f32.xlu0 %v1372
        %v1374 = vpop.xlane.xlu0 %1373
        %v1375 = vrcp.pop %v1374
        %v1376 = vmul.f32 %v1371, %v1375
        %v1377 = vpack.c.bf16 %v1376, %v1376
        %1378 = vrot.lane.b32.xlu0 %v873, 32
        %v1379 = vpop.permute.xlu0 %1378
        %v1381 = vsel %vm860, %v1377, 0
        %v1384 = vsel %vm877, %v1379, 0
        %1386 = vmatprep.subr.bf16.mxu0 0
        %1387 = vmatpush1.bf16.msra.mxu0 %v1384
        %1388 = vmatprep.subr.bf16.mxu0 0
        %1389 = vmatpush1.bf16.msra.mxu0 0
        %1390 = vmatprep.subr.bf16.mxu0 0
        %1391 = vmatpush1.bf16.msra.mxu0 0
        %1392 = vmatprep.subr.bf16.mxu0 0
        %1393 = vmatpush1.bf16.msra.mxu0 0
        %1394 = vmatprep.subr.bf16.mxu0 0
        %1395 = vmatpush1.bf16.msra.mxu0 0
        %1396 = vmatprep.subr.bf16.mxu0 0
        %1397 = vmatpush1.bf16.msra.mxu0 0
        %1398 = vmatprep.subr.bf16.mxu0 0
        %1399 = vmatpush1.bf16.msra.mxu0 0
        %1400 = vmatprep.subr.bf16.mxu0 0
        %1401 = vmatpush1.bf16.msra.mxu0 0
        %1402 = vmatprep.subr.bf16.mxu0 0
        %1403 = vmatpush1.bf16.msra.mxu0 0
        %1404 = vmatprep.subr.bf16.mxu0 0
        %1405 = vmatpush1.bf16.msra.mxu0 0
        %1406 = vmatprep.subr.bf16.mxu0 0
        %1407 = vmatpush1.bf16.msra.mxu0 0
        %1408 = vmatprep.subr.bf16.mxu0 0
        %1409 = vmatpush1.bf16.msra.mxu0 0
        %1410 = vmatprep.subr.bf16.mxu0 0
        %1411 = vmatpush1.bf16.msra.mxu0 0
        %1412 = vmatprep.subr.bf16.mxu0 0
        %1413 = vmatpush1.bf16.msra.mxu0 0
        %1414 = vmatprep.subr.bf16.mxu0 0
        %1415 = vmatpush1.bf16.msra.mxu0 0
        %1416 = vmatprep.subr.bf16.mxu0 0
        %1417 = vmatpush1.bf16.msra.mxu0 0
        %1418 = vmatprep.mubr.bf16.mxu0 0
        %1419 = vmatmul.mubr.bf16.gmra.mrb[0].mxu0 %v1381
        %v1420 = vpop.f32.mrb[0].mxu0
        %v1421 = vadd.f32 0.0, %v1420
        %v1422 = vpop.f32.mrb[0].mxu0
        %v1423 = vpop.f32.mrb[0].mxu0
        %v1424 = vpop.f32.mrb[0].mxu0
        %1425 = vdwg.mxu0
        %v1426 = vpack.c.bf16 %v1421, %v1421
        %v1431 = vunpack.c.l.b16 %v805
        %v1432 = vunpack.c.l.b16 %v806
        %v1433 = vunpack.c.l.b16 %v807
        %v1434 = vunpack.c.l.b16 %v808
        %v1435 = vpack.c.b16 %v1432, %v1431
        %v1436 = vpack.c.b16 %v1434, %v1433
        %v1440 = vsel %vm812, %v1426, 0
        %1442 = vmatprep.subr.bf16.mxu0 0
        %1443 = vmatpush1.bf16.msra.mxu0 %v1435
        %1444 = vmatprep.subr.bf16.mxu0 0
        %1445 = vmatpush1.bf16.msra.mxu0 %v1436
        %1446 = vmatprep.subr.bf16.mxu0 0
        %1447 = vmatpush1.bf16.msra.mxu0 0
        %1448 = vmatprep.subr.bf16.mxu0 0
        %1449 = vmatpush1.bf16.msra.mxu0 0
        %1450 = vmatprep.subr.bf16.mxu0 0
        %1451 = vmatpush1.bf16.msra.mxu0 0
        %1452 = vmatprep.subr.bf16.mxu0 0
        %1453 = vmatpush1.bf16.msra.mxu0 0
        %1454 = vmatprep.subr.bf16.mxu0 0
        %1455 = vmatpush1.bf16.msra.mxu0 0
        %1456 = vmatprep.subr.bf16.mxu0 0
        %1457 = vmatpush1.bf16.msra.mxu0 0
        %1458 = vmatprep.subr.bf16.mxu0 0
        %1459 = vmatpush1.bf16.msra.mxu0 0
        %1460 = vmatprep.subr.bf16.mxu0 0
        %1461 = vmatpush1.bf16.msra.mxu0 0
        %1462 = vmatprep.subr.bf16.mxu0 0
        %1463 = vmatpush1.bf16.msra.mxu0 0
        %1464 = vmatprep.subr.bf16.mxu0 0
        %1465 = vmatpush1.bf16.msra.mxu0 0
        %1466 = vmatprep.subr.bf16.mxu0 0
        %1467 = vmatpush1.bf16.msra.mxu0 0
        %1468 = vmatprep.subr.bf16.mxu0 0
        %1469 = vmatpush1.bf16.msra.mxu0 0
        %1470 = vmatprep.subr.bf16.mxu0 0
        %1471 = vmatpush1.bf16.msra.mxu0 0
        %1472 = vmatprep.subr.bf16.mxu0 0
        %1473 = vmatpush1.bf16.msra.mxu0 0
        %1474 = vmatprep.mubr.bf16.mxu0 0
        %1475 = vmatmul.mubr.bf16.gmra.mrb[0].mxu0 %v1440
        %v1476 = vpop.f32.mrb[0].mxu0
        %v1477 = vadd.f32 0.0, %v1476
        %v1478 = vpop.f32.mrb[0].mxu0
        %v1479 = vpop.f32.mrb[0].mxu0
        %v1480 = vpop.f32.mrb[0].mxu0
        %1481 = vdwg.mxu0
        %v1482 = vadd.f32 %v1314, %v1477
        %v1484 = vlaneseq
        %v1485 = vshrl.u32 %v1484, 7
        %v1486 = vsub.s32 0, %v1485
        %v1487 = vrot.slane %v809, %v1486
        %v1489 = vadd.f32 %v1482, %v1487
        %v1490 = vld [vmem:[%s5] sm:$0x1]
        %v1491 = vld [vmem:[%s6] sm:$0x1]
        %v1492 = vadd.f32 %v533, %v1489
        %1493 = vadd.xlane.f32.xlu0 %v1492
        %v1494 = vpop.xlane.xlu0 %1493
        %v1495 = vrcp.pop 128.0
        %v1496 = vmul.f32 %v1494, %v1495
        %v1497 = vsub.f32 %v1492, %v1496
        %v1498 = vmul.f32 %v1497, %v1497
        %1499 = vadd.xlane.f32.xlu0 %v1498
        %v1500 = vpop.xlane.xlu0 %1499
        %v1501 = vmul.f32 %v1500, %v1495
        %v1502 = vadd.f32 %v1501, 1e-05
        %v1503 = vrsqrt.pop %v1502
        %v1504 = vmul.f32 %v1497, %v1503
        %v1506 = vlaneseq
        %v1507 = vshrl.u32 %v1506, 7
        %v1508 = vsub.s32 0, %v1507
        %v1509 = vrot.slane %v1490, %v1508
        %v1511 = vmul.f32 %v1504, %v1509
        %v1513 = vlaneseq
        %v1514 = vshrl.u32 %v1513, 7
        %v1515 = vsub.s32 0, %v1514
        %v1516 = vrot.slane %v1491, %v1515
        %v1518 = vadd.f32 %v1511, %v1516
        %v1519 = vld [vmem:[#allocation8] sm:$0xff]
        %v1520 = vld [vmem:[#allocation8 + $0x8] sm:$0xff]
        %v1521 = vld [vmem:[#allocation8 + $0x10] sm:$0xff]
        %v1522 = vld [vmem:[#allocation8 + $0x18] sm:$0xff]
        %v1523 = vld [vmem:[#allocation8 + $0x20] sm:$0xff]
        %v1524 = vld [vmem:[#allocation8 + $0x28] sm:$0xff]
        %v1525 = vld [vmem:[#allocation8 + $0x30] sm:$0xff]
        %v1526 = vld [vmem:[#allocation8 + $0x38] sm:$0xff]
        %v1527 = vld [vmem:[#allocation8 + $0x40] sm:$0xff]
        %v1528 = vld [vmem:[#allocation8 + $0x48] sm:$0xff]
        %v1529 = vld [vmem:[#allocation8 + $0x50] sm:$0xff]
        %v1530 = vld [vmem:[#allocation8 + $0x58] sm:$0xff]
        %v1531 = vld [vmem:[#allocation8 + $0x60] sm:$0xff]
        %v1532 = vld [vmem:[#allocation8 + $0x68] sm:$0xff]
        %v1533 = vld [vmem:[#allocation8 + $0x70] sm:$0xff]
        %v1534 = vld [vmem:[#allocation8 + $0x78] sm:$0xff]
        %v1535 = vpack.c.bf16 %v1518, %v1518
        %v1536 = vld [vmem:[%s8] sm:$0x3]
        %v1538 = vlaneseq
        %v1539 = vshrl.u32 %v1538, 7
        %v1540 = vsub.s32 0, %v1539
        %v1541 = vrot.slane %v1536, %v1540
        %v1542 = vlaneseq
        %v1543 = vshrl.u32 %v1542, 7
        %v1544 = vsub.s32 1, %v1543
        %v1545 = vrot.slane %v1536, %v1544
        %v1564 = vunpack.c.l.b16 %v1519
        %v1565 = vunpack.c.h.b16 %v1519
        %v1566 = vunpack.c.l.b16 %v1520
        %v1567 = vunpack.c.h.b16 %v1520
        %v1568 = vunpack.c.l.b16 %v1521
        %v1569 = vunpack.c.h.b16 %v1521
        %v1570 = vunpack.c.l.b16 %v1522
        %v1571 = vunpack.c.h.b16 %v1522
        %v1572 = vunpack.c.l.b16 %v1523
        %v1573 = vunpack.c.h.b16 %v1523
        %v1574 = vunpack.c.l.b16 %v1524
        %v1575 = vunpack.c.h.b16 %v1524
        %v1576 = vunpack.c.l.b16 %v1525
        %v1577 = vunpack.c.h.b16 %v1525
        %v1578 = vunpack.c.l.b16 %v1526
        %v1579 = vunpack.c.h.b16 %v1526
        %v1580 = vunpack.c.l.b16 %v1527
        %v1581 = vunpack.c.h.b16 %v1527
        %v1582 = vunpack.c.l.b16 %v1528
        %v1583 = vunpack.c.h.b16 %v1528
        %v1584 = vunpack.c.l.b16 %v1529
        %v1585 = vunpack.c.h.b16 %v1529
        %v1586 = vunpack.c.l.b16 %v1530
        %v1587 = vunpack.c.h.b16 %v1530
        %v1588 = vunpack.c.l.b16 %v1531
        %v1589 = vunpack.c.h.b16 %v1531
        %v1590 = vunpack.c.l.b16 %v1532
        %v1591 = vunpack.c.h.b16 %v1532
        %v1592 = vunpack.c.l.b16 %v1533
        %v1593 = vunpack.c.h.b16 %v1533
        %v1594 = vunpack.c.l.b16 %v1534
        %v1595 = vunpack.c.h.b16 %v1534
        %v1596 = vpack.c.b16 %v1566, %v1564
        %v1597 = vpack.c.b16 %v1567, %v1565
        %v1598 = vpack.c.b16 %v1570, %v1568
        %v1599 = vpack.c.b16 %v1571, %v1569
        %v1600 = vpack.c.b16 %v1574, %v1572
        %v1601 = vpack.c.b16 %v1575, %v1573
        %v1602 = vpack.c.b16 %v1578, %v1576
        %v1603 = vpack.c.b16 %v1579, %v1577
        %v1604 = vpack.c.b16 %v1582, %v1580
        %v1605 = vpack.c.b16 %v1583, %v1581
        %v1606 = vpack.c.b16 %v1586, %v1584
        %v1607 = vpack.c.b16 %v1587, %v1585
        %v1608 = vpack.c.b16 %v1590, %v1588
        %v1609 = vpack.c.b16 %v1591, %v1589
        %v1610 = vpack.c.b16 %v1594, %v1592
        %v1611 = vpack.c.b16 %v1595, %v1593
        %1628 = vmatprep.subr.bf16.mxu0 %v1597
        %1629 = vmatpush1.bf16.msra.mxu0 %v1596
        %1630 = vmatprep.subr.bf16.mxu0 %v1599
        %1631 = vmatpush1.bf16.msra.mxu0 %v1598
        %1632 = vmatprep.subr.bf16.mxu0 %v1601
        %1633 = vmatpush1.bf16.msra.mxu0 %v1600
        %1634 = vmatprep.subr.bf16.mxu0 %v1603
        %1635 = vmatpush1.bf16.msra.mxu0 %v1602
        %1636 = vmatprep.subr.bf16.mxu0 %v1605
        %1637 = vmatpush1.bf16.msra.mxu0 %v1604
        %1638 = vmatprep.subr.bf16.mxu0 %v1607
        %1639 = vmatpush1.bf16.msra.mxu0 %v1606
        %1640 = vmatprep.subr.bf16.mxu0 %v1609
        %1641 = vmatpush1.bf16.msra.mxu0 %v1608
        %1642 = vmatprep.subr.bf16.mxu0 %v1611
        %1643 = vmatpush1.bf16.msra.mxu0 %v1610
        %1644 = vmatprep.subr.bf16.mxu0 0
        %1645 = vmatpush1.bf16.msra.mxu0 0
        %1646 = vmatprep.subr.bf16.mxu0 0
        %1647 = vmatpush1.bf16.msra.mxu0 0
        %1648 = vmatprep.subr.bf16.mxu0 0
        %1649 = vmatpush1.bf16.msra.mxu0 0
        %1650 = vmatprep.subr.bf16.mxu0 0
        %1651 = vmatpush1.bf16.msra.mxu0 0
        %1652 = vmatprep.subr.bf16.mxu0 0
        %1653 = vmatpush1.bf16.msra.mxu0 0
        %1654 = vmatprep.subr.bf16.mxu0 0
        %1655 = vmatpush1.bf16.msra.mxu0 0
        %1656 = vmatprep.subr.bf16.mxu0 0
        %1657 = vmatpush1.bf16.msra.mxu0 0
        %1658 = vmatprep.subr.bf16.mxu0 0
        %1659 = vmatpush1.bf16.msra.mxu0 0
        %1660 = vmatprep.mubr.bf16.mxu0 0
        %1661 = vmatmul.mubr.bf16.gmra.mrb[0].mxu0 %v1535
        %v1662 = vpop.f32.mrb[0].mxu0
        %v1663 = vadd.f32 %v1541, %v1662
        %v1664 = vpop.f32.mrb[0].mxu0
        %v1665 = vadd.f32 %v1545, %v1664
        %v1666 = vpop.f32.mrb[0].mxu0
        %v1667 = vpop.f32.mrb[0].mxu0
        %1668 = vdwg.mxu0
        %v1669 = vmax.f32 %v1663, 0.0
        %v1670 = vmax.f32 %v1665, 0.0
        %v1671 = vld [vmem:[#allocation10] sm:$0xf]
        %v1672 = vld [vmem:[#allocation10 + $0x4] sm:$0xf]
        %v1673 = vld [vmem:[#allocation10 + $0x8] sm:$0xf]
        %v1674 = vld [vmem:[#allocation10 + $0xc] sm:$0xf]
        %v1675 = vld [vmem:[#allocation10 + $0x10] sm:$0xf]
        %v1676 = vld [vmem:[#allocation10 + $0x14] sm:$0xf]
        %v1677 = vld [vmem:[#allocation10 + $0x18] sm:$0xf]
        %v1678 = vld [vmem:[#allocation10 + $0x1c] sm:$0xf]
        %v1679 = vld [vmem:[#allocation10 + $0x20] sm:$0xf]
        %v1680 = vld [vmem:[#allocation10 + $0x24] sm:$0xf]
        %v1681 = vld [vmem:[#allocation10 + $0x28] sm:$0xf]
        %v1682 = vld [vmem:[#allocation10 + $0x2c] sm:$0xf]
        %v1683 = vld [vmem:[#allocation10 + $0x30] sm:$0xf]
        %v1684 = vld [vmem:[#allocation10 + $0x34] sm:$0xf]
        %v1685 = vld [vmem:[#allocation10 + $0x38] sm:$0xf]
        %v1686 = vld [vmem:[#allocation10 + $0x3c] sm:$0xf]
        %v1687 = vld [vmem:[#allocation10 + $0x40] sm:$0xf]
        %v1688 = vld [vmem:[#allocation10 + $0x44] sm:$0xf]
        %v1689 = vld [vmem:[#allocation10 + $0x48] sm:$0xf]
        %v1690 = vld [vmem:[#allocation10 + $0x4c] sm:$0xf]
        %v1691 = vld [vmem:[#allocation10 + $0x50] sm:$0xf]
        %v1692 = vld [vmem:[#allocation10 + $0x54] sm:$0xf]
        %v1693 = vld [vmem:[#allocation10 + $0x58] sm:$0xf]
        %v1694 = vld [vmem:[#allocation10 + $0x5c] sm:$0xf]
        %v1695 = vld [vmem:[#allocation10 + $0x60] sm:$0xf]
        %v1696 = vld [vmem:[#allocation10 + $0x64] sm:$0xf]
        %v1697 = vld [vmem:[#allocation10 + $0x68] sm:$0xf]
        %v1698 = vld [vmem:[#allocation10 + $0x6c] sm:$0xf]
        %v1699 = vld [vmem:[#allocation10 + $0x70] sm:$0xf]
        %v1700 = vld [vmem:[#allocation10 + $0x74] sm:$0xf]
        %v1701 = vld [vmem:[#allocation10 + $0x78] sm:$0xf]
        %v1702 = vld [vmem:[#allocation10 + $0x7c] sm:$0xf]
        %v1703 = vpack.c.bf16 %v1669, %v1669
        %v1704 = vpack.c.bf16 %v1670, %v1670
        %v1705 = vld [vmem:[%s10] sm:$0x1]
        %v1707 = vlaneseq
        %v1708 = vshrl.u32 %v1707, 7
        %v1709 = vsub.s32 0, %v1708
        %v1710 = vrot.slane %v1705, %v1709
        %v1744 = vunpack.c.l.b16 %v1671
        %v1745 = vunpack.c.l.b16 %v1672
        %v1746 = vunpack.c.l.b16 %v1673
        %v1747 = vunpack.c.l.b16 %v1674
        %v1748 = vunpack.c.l.b16 %v1675
        %v1749 = vunpack.c.l.b16 %v1676
        %v1750 = vunpack.c.l.b16 %v1677
        %v1751 = vunpack.c.l.b16 %v1678
        %v1752 = vunpack.c.l.b16 %v1679
        %v1753 = vunpack.c.l.b16 %v1680
        %v1754 = vunpack.c.l.b16 %v1681
        %v1755 = vunpack.c.l.b16 %v1682
        %v1756 = vunpack.c.l.b16 %v1683
        %v1757 = vunpack.c.l.b16 %v1684
        %v1758 = vunpack.c.l.b16 %v1685
        %v1759 = vunpack.c.l.b16 %v1686
        %v1760 = vunpack.c.l.b16 %v1687
        %v1761 = vunpack.c.l.b16 %v1688
        %v1762 = vunpack.c.l.b16 %v1689
        %v1763 = vunpack.c.l.b16 %v1690
        %v1764 = vunpack.c.l.b16 %v1691
        %v1765 = vunpack.c.l.b16 %v1692
        %v1766 = vunpack.c.l.b16 %v1693
        %v1767 = vunpack.c.l.b16 %v1694
        %v1768 = vunpack.c.l.b16 %v1695
        %v1769 = vunpack.c.l.b16 %v1696
        %v1770 = vunpack.c.l.b16 %v1697
        %v1771 = vunpack.c.l.b16 %v1698
        %v1772 = vunpack.c.l.b16 %v1699
        %v1773 = vunpack.c.l.b16 %v1700
        %v1774 = vunpack.c.l.b16 %v1701
        %v1775 = vunpack.c.l.b16 %v1702
        %v1776 = vpack.c.b16 %v1745, %v1744
        %v1777 = vpack.c.b16 %v1747, %v1746
        %v1778 = vpack.c.b16 %v1749, %v1748
        %v1779 = vpack.c.b16 %v1751, %v1750
        %v1780 = vpack.c.b16 %v1753, %v1752
        %v1781 = vpack.c.b16 %v1755, %v1754
        %v1782 = vpack.c.b16 %v1757, %v1756
        %v1783 = vpack.c.b16 %v1759, %v1758
        %v1784 = vpack.c.b16 %v1761, %v1760
        %v1785 = vpack.c.b16 %v1763, %v1762
        %v1786 = vpack.c.b16 %v1765, %v1764
        %v1787 = vpack.c.b16 %v1767, %v1766
        %v1788 = vpack.c.b16 %v1769, %v1768
        %v1789 = vpack.c.b16 %v1771, %v1770
        %v1790 = vpack.c.b16 %v1773, %v1772
        %v1791 = vpack.c.b16 %v1775, %v1774
        %1808 = vmatprep.subr.bf16.mxu0 0
        %1809 = vmatpush1.bf16.msra.mxu0 %v1776
        %1810 = vmatprep.subr.bf16.mxu0 0
        %1811 = vmatpush1.bf16.msra.mxu0 %v1777
        %1812 = vmatprep.subr.bf16.mxu0 0
        %1813 = vmatpush1.bf16.msra.mxu0 %v1778
        %1814 = vmatprep.subr.bf16.mxu0 0
        %1815 = vmatpush1.bf16.msra.mxu0 %v1779
        %1816 = vmatprep.subr.bf16.mxu0 0
        %1817 = vmatpush1.bf16.msra.mxu0 %v1780
        %1818 = vmatprep.subr.bf16.mxu0 0
        %1819 = vmatpush1.bf16.msra.mxu0 %v1781
        %1820 = vmatprep.subr.bf16.mxu0 0
        %1821 = vmatpush1.bf16.msra.mxu0 %v1782
        %1822 = vmatprep.subr.bf16.mxu0 0
        %1823 = vmatpush1.bf16.msra.mxu0 %v1783
        %1824 = vmatprep.subr.bf16.mxu0 0
        %1825 = vmatpush1.bf16.msra.mxu0 %v1784
        %1826 = vmatprep.subr.bf16.mxu0 0
        %1827 = vmatpush1.bf16.msra.mxu0 %v1785
        %1828 = vmatprep.subr.bf16.mxu0 0
        %1829 = vmatpush1.bf16.msra.mxu0 %v1786
        %1830 = vmatprep.subr.bf16.mxu0 0
        %1831 = vmatpush1.bf16.msra.mxu0 %v1787
        %1832 = vmatprep.subr.bf16.mxu0 0
        %1833 = vmatpush1.bf16.msra.mxu0 %v1788
        %1834 = vmatprep.subr.bf16.mxu0 0
        %1835 = vmatpush1.bf16.msra.mxu0 %v1789
        %1836 = vmatprep.subr.bf16.mxu0 0
        %1837 = vmatpush1.bf16.msra.mxu0 %v1790
        %1838 = vmatprep.subr.bf16.mxu0 0
        %1839 = vmatpush1.bf16.msra.mxu0 %v1791
        %1840 = vmatprep.mubr.bf16.mxu0 %v1704
        %1841 = vmatmul.mubr.bf16.gmra.mrb[0].mxu0 %v1703
        %v1842 = vpop.f32.mrb[0].mxu0
        %v1843 = vadd.f32 %v1710, %v1842
        %v1844 = vpop.f32.mrb[0].mxu0
        %v1845 = vpop.f32.mrb[0].mxu0
        %v1846 = vpop.f32.mrb[0].mxu0
        %1847 = vdwg.mxu0
        %v1848 = vld [vmem:[%s11] sm:$0x1]
        %v1849 = vld [vmem:[%s12] sm:$0x1]
        %v1850 = vadd.f32 %v1518, %v1843
        %1851 = vadd.xlane.f32.xlu0 %v1850
        %v1852 = vpop.xlane.xlu0 %1851
        %v1853 = vmul.f32 %v1852, %v1495
        %v1854 = vsub.f32 %v1850, %v1853
        %v1855 = vmul.f32 %v1854, %v1854
        %1856 = vadd.xlane.f32.xlu0 %v1855
        %v1857 = vpop.xlane.xlu0 %1856
        %v1858 = vmul.f32 %v1857, %v1495
        %v1859 = vadd.f32 %v1858, 1e-05
        %v1860 = vrsqrt.pop %v1859
        %v1861 = vmul.f32 %v1854, %v1860
        %v1863 = vlaneseq
        %v1864 = vshrl.u32 %v1863, 7
        %v1865 = vsub.s32 0, %v1864
        %v1866 = vrot.slane %v1848, %v1865
        %v1868 = vmul.f32 %v1861, %v1866
        %v1870 = vlaneseq
        %v1871 = vshrl.u32 %v1870, 7
        %v1872 = vsub.s32 0, %v1871
        %v1873 = vrot.slane %v1849, %v1872
        %v1875 = vadd.f32 %v1868, %v1873
        %1876 = vst [vmem:[%s525] sm:$0xff] %v1875
        %s1877 = sand.u32 %s330, 1
        %s1878 = scalar_lea.sflag [#allocation4], %s1877
        %s1879 = sand.u32 %s330, 1
        %s1880 = smul.addr %s1879, 8
        %s1881 = scalar_lea.vmem [#allocation11], %s1880
        // Predicated region
        $region97: #{tpu_custom_call.1} parent=71 // pred_check
          %p1882 = pneg %p340
        $region98: #{tpu_custom_call.1} parent=71 // pred_check_branch
          %1884 = sbr.rel (%p1882) target = $region100
        $region99: #{tpu_custom_call.1} parent=71 // pred_region
          %s1886 = ssub.s32 128, 128
          %1887 = vsyncadd %s1878, %s1886
          %s1888 = smul.addr %s36, 128
          %s1889 = scalar_lea.hbm %s13, %s1888
          %s1891 = sshll.u32 %s1881, 4
          %s1892 = int_to_ptr.vmem [resolvable:$true] %s1891
          %1894 = dma.vmem_to_hbm [thread:$0]  %s1892, 128, %s1889, %s1878
        $region100: #{tpu_custom_call.1} parent=71 // pred_fallthru
          _
      $region72: #{tpu_custom_call.1} parent=5 // pred_fallthru
        _
      %p1895 = scmp.le.s32.totalorder 2, %s27
      // Predicated region
      $region101: #{tpu_custom_call.1} parent=5 // pred_check
        %p1896 = pneg %p1895
      $region102: #{tpu_custom_call.1} parent=5 // pred_check_branch
        %1898 = sbr.rel (%p1896) target = $region104
      $region103: #{tpu_custom_call.1} parent=5 // pred_region
        %s1899 = ssub.s32 %s27, 2
        // Predicated region
        $region105: #{tpu_custom_call.1} parent=103 // pred_check
          %p1900 = pneg %p346
        $region106: #{tpu_custom_call.1} parent=103 // pred_check_branch
          %1902 = sbr.rel (%p1900) target = $region108
        $region107: #{tpu_custom_call.1} parent=103 // pred_region
          %s1903 = sand.u32 %s331, 1
          %s1904 = scalar_lea.sflag [#allocation4], %s1903
          %s1905 = sand.u32 %s331, 1
          %s1906 = smul.addr %s1905, 8
          %s1907 = scalar_lea.vmem [#allocation11], %s1906
          %1908 = dma.done %s1904, 128
        $region108: #{tpu_custom_call.1} parent=103 // pred_fallthru
          _
      $region104: #{tpu_custom_call.1} parent=5 // pred_fallthru
        _
    $region6: #{tpu_custom_call.1} parent=1 // loop_footer
      %s31 = sadd.s32 1, %s27
    $region7: #{tpu_custom_call.1} parent=1 // loop_footer_branch
      %26 = sbr.rel target = $region3
    $region8: #{tpu_custom_call.1} parent=1 // loop_exit
      _
    %1909 = vsyncpa [#allocation3], 1
    %s1910 = scalar_lea.sflag [#allocation3], 1
    %1911 = vsyncpa %s1910, 1
    %1912 = vsyncpa [#allocation6], 1
    %1913 = vsyncpa [#allocation9], 1
    %1914 = vsyncpa [#allocation4], 1
    %s1915 = scalar_lea.sflag [#allocation4], 1
    %1916 = vsyncpa %s1915, 1

// kernel: tpu_custom_call.1
$region0: #{tpu_custom_call.1}
  #allocation0 [shape = 'u32[]', space=smem, size = 0x4, offset = 0x4, fixed_abs, tag = 'smem constant byte address 0x4 - core index']
  #allocation1 [shape = 'u32[144,128]{1,0:T(1,128)}', space=vmem, size = 0x12000, scoped, tag = 'internal scratch']
  %s0 = inlined_call_operand.hbm [shape: f32[16,128], index: 0, kind: input, shape index: {}]
  %s1 = inlined_call_operand.hbm [shape: bf16[128,384], index: 1, kind: input, shape index: {}]
  %s2 = inlined_call_operand.vmem [shape: f32[1,384], index: 2, kind: input, shape index: {}]
  %s3 = inlined_call_operand.hbm [shape: bf16[128,128], index: 3, kind: input, shape index: {}]
  %s4 = inlined_call_operand.vmem [shape: f32[1,128], index: 4, kind: input, shape index: {}]
  %s5 = inlined_call_operand.vmem [shape: f32[1,128], index: 5, kind: input, shape index: {}]
  %s6 = inlined_call_operand.vmem [shape: f32[1,128], index: 6, kind: input, shape index: {}]
  %s7 = inlined_call_operand.hbm [shape: bf16[128,256], index: 7, kind: input, shape index: {}]
  %s8 = inlined_call_operand.vmem [shape: f32[1,256], index: 8, kind: input, shape index: {}]
  %s9 = inlined_call_operand.hbm [shape: bf16[256,128], index: 9, kind: input, shape index: {}]
  %s10 = inlined_call_operand.vmem [shape: f32[1,128], index: 10, kind: input, shape index: {}]
  %s11 = inlined_call_operand.vmem [shape: f32[1,128], index: 11, kind: input, shape index: {}]
  %s12 = inlined_call_operand.vmem [shape: f32[1,128], index: 12, kind: input, shape index: {}]
  %s13 = inlined_call_operand.hbm [shape: f32[16,128], index: 13, kind: output, shape index: {}]
  %s14 = sld [smem:[#allocation0]]
  $region109: #{tpu_custom_call.1} parent=0
    _
  %s16 = ssub.s32 1, %s14
  %s17 = scalar_select 0, %s16, %s14
  $region1: #{tpu_custom_call.1} parent=0
    #allocation2 [shape = 'u8[8192]{0}', space=vmem, size = 0x2000, scoped, tag = 'input window, operand 0']
    #allocation3 [shape = 's32[2]{0}', space=sflag, size = 0x8, scoped, tag = 'scoped memory for tpu_custom_call.1']
    #allocation4 [shape = 's32[2]{0}', space=sflag, size = 0x8, scoped, tag = 'scoped memory for tpu_custom_call.1']
    #allocation5 [shape = 'u8[98304]{0}', space=vmem, size = 0x18000, scoped, tag = 'input window, operand 1, single buffered']
    #allocation6 [shape = 's32[1]{0}', space=sflag, size = 0x4, scoped, tag = 'scoped memory for tpu_custom_call.1']
    #allocation7 [shape = 'u8[32768]{0}', space=vmem, size = 0x8000, scoped, tag = 'input window, operand 3, single buffered']
    #allocation8 [shape = 'u8[65536]{0}', space=vmem, size = 0x10000, scoped, tag = 'input window, operand 7, single buffered']
    #allocation9 [shape = 's32[1]{0}', space=sflag, size = 0x4, scoped, tag = 'scoped memory for tpu_custom_call.1']
    #allocation10 [shape = 'u8[65536]{0}', space=vmem, size = 0x10000, scoped, tag = 'input window, operand 9, single buffered']
    #allocation11 [shape = 'u8[8192]{0}', space=vmem, size = 0x2000, scoped, tag = 'output window, operand 0']
    %18 = vsyncpa [#allocation3], 0
    %s19 = scalar_lea.sflag [#allocation3], 1
    %20 = vsyncpa %s19, 0
    %21 = vsyncpa [#allocation6], 0
    %22 = vsyncpa [#allocation9], 0
    %23 = vsyncpa [#allocation4], 0
    %s24 = scalar_lea.sflag [#allocation4], 1
    %25 = vsyncpa %s24, 0
    loop: start=0, step=1, limit=6
    $region2: #{tpu_custom_call.1} parent=1 // loop_pre_header
      _
    $region3: #{tpu_custom_call.1} parent=1 // loop_header
      %s27 = sphi 0, %s31
      %p28 = scmp.ge.s32.totalorder %s27, 6
      %s34 = sphi 0, %s46
      %s35 = sphi 0, %s42
      %s36 = sphi 0, %s34
      %s37 = sphi 0, %s35
      %s38 = sphi 0, %s36
      %s39 = sphi 0, %s37
      %s49 = sphi 0, %s51
      %s52 = sphi 0, %s49
      %s53 = sphi 0, %s52
      %s69 = sphi 0, %s53
      %s73 = sphi 0, %s73
      %s75 = sphi 0, %s73
      %s76 = sphi 0, %s75
      %s90 = sphi 0, %s76
      %s94 = sphi 0, %s94
      %s96 = sphi 0, %s94
      %s97 = sphi 0, %s96
      %s111 = sphi 0, %s97
      %s115 = sphi 0, %s115
      %s117 = sphi 0, %s115
      %s118 = sphi 0, %s117
      %s132 = sphi 0, %s118
      %s136 = sphi 0, %s136
      %s138 = sphi 0, %s136
      %s139 = sphi 0, %s138
      %s153 = sphi 0, %s139
      %s157 = sphi 0, %s157
      %s159 = sphi 0, %s157
      %s160 = sphi 0, %s159
      %s174 = sphi 0, %s160
      %s178 = sphi 0, %s178
      %s180 = sphi 0, %s178
      %s181 = sphi 0, %s180
      %s195 = sphi 0, %s181
      %s199 = sphi 0, %s199
      %s201 = sphi 0, %s199
      %s202 = sphi 0, %s201
      %s216 = sphi 0, %s202
      %s220 = sphi 0, %s220
      %s222 = sphi 0, %s220
      %s223 = sphi 0, %s222
      %s237 = sphi 0, %s223
      %s241 = sphi 0, %s241
      %s243 = sphi 0, %s241
      %s244 = sphi 0, %s243
      %s258 = sphi 0, %s244
      %s262 = sphi 0, %s262
      %s264 = sphi 0, %s262
      %s265 = sphi 0, %s264
      %s279 = sphi 0, %s265
      %s283 = sphi 0, %s283
      %s285 = sphi 0, %s283
      %s286 = sphi 0, %s285
      %s300 = sphi 0, %s286
      %s304 = sphi 0, %s304
      %s306 = sphi 0, %s304
      %s307 = sphi 0, %s306
      %s321 = sphi 0, %s307
      %s327 = sphi 0, %s329
      %s330 = sphi 0, %s327
      %s331 = sphi 0, %s330
      %s347 = sphi 0, %s331
    $region4: #{tpu_custom_call.1} parent=1 // loop_header_branch
      %30 = sbr.rel (%p28) target = $region8
    $region5: #{tpu_custom_call.1} parent=1 // loop_body
      %s32 = ssub.s32 %s27, 1
      %s33 = ssub.s32 %s27, 2
      %s40 = sadd.s32 1, %s35
      %p41 = scmp.ge.s32.totalorder %s40, 2
      %s42 = scalar_select %p41, 0, %s40
      %s43 = sadd.s32 1, %s34
      %s44 = scalar_select %p41, %s43, %s34
      %p45 = scmp.ge.s32.totalorder %s44, 2
      %s46 = scalar_select %p45, 0, %s44
      %s47 = ssub.s32 %s34, %s46
      %p48 = scmp.eq.s32.totalorder %s47, 0
      %s50 = sadd.s32 %s49, 1
      %s51 = scalar_select %p48, %s49, %s50
      %p54 = pneg %p48
      %p55 = scmp.eq.s32.totalorder %s27, 3
      %p56 = por %p54, %p55
      %p57 = scmp.ne.s32.totalorder %s49, %s52
      %p58 = scmp.eq.s32.totalorder %s27, 0
      %p59 = por %p57, %p58
      %p60 = scmp.ne.s32.totalorder %s49, %s52
      %p61 = scmp.eq.s32.totalorder %s32, 3
      %p62 = por %p60, %p61
      %p63 = scmp.ne.s32.totalorder %s52, %s53
      %p64 = scmp.eq.s32.totalorder %s32, 0
      %p65 = por %p63, %p64
      %p66 = scmp.ne.s32.totalorder %s52, %s53
      %p67 = scmp.eq.s32.totalorder %s33, 3
      %p68 = por %p66, %p67
      %p70 = scmp.ne.s32.totalorder %s53, %s69
      %p71 = scmp.eq.s32.totalorder %s33, 0
      %p72 = por %p70, %p71
      %s74 = sadd.s32 %s73, 1
      %p77 = scmp.eq.s32.totalorder %s27, 3
      %p78 = scmp.ne.s32.totalorder %s73, %s75
      %p79 = scmp.eq.s32.totalorder %s27, 0
      %p80 = por %p78, %p79
      %p81 = scmp.ne.s32.totalorder %s73, %s75
      %p82 = scmp.eq.s32.totalorder %s32, 3
      %p83 = por %p81, %p82
      %p84 = scmp.ne.s32.totalorder %s75, %s76
      %p85 = scmp.eq.s32.totalorder %s32, 0
      %p86 = por %p84, %p85
      %p87 = scmp.ne.s32.totalorder %s75, %s76
      %p88 = scmp.eq.s32.totalorder %s33, 3
      %p89 = por %p87, %p88
      %p91 = scmp.ne.s32.totalorder %s76, %s90
      %p92 = scmp.eq.s32.totalorder %s33, 0
      %p93 = por %p91, %p92
      %s95 = sadd.s32 %s94, 1
      %p98 = scmp.eq.s32.totalorder %s27, 3
      %p99 = scmp.ne.s32.totalorder %s94, %s96
      %p100 = scmp.eq.s32.totalorder %s27, 0
      %p101 = por %p99, %p100
      %p102 = scmp.ne.s32.totalorder %s94, %s96
      %p103 = scmp.eq.s32.totalorder %s32, 3
      %p104 = por %p102, %p103
      %p105 = scmp.ne.s32.totalorder %s96, %s97
      %p106 = scmp.eq.s32.totalorder %s32, 0
      %p107 = por %p105, %p106
      %p108 = scmp.ne.s32.totalorder %s96, %s97
      %p109 = scmp.eq.s32.totalorder %s33, 3
      %p110 = por %p108, %p109
      %p112 = scmp.ne.s32.totalorder %s97, %s111
      %p113 = scmp.eq.s32.totalorder %s33, 0
      %p114 = por %p112, %p113
      %s116 = sadd.s32 %s115, 1
      %p119 = scmp.eq.s32.totalorder %s27, 3
      %p120 = scmp.ne.s32.totalorder %s115, %s117
      %p121 = scmp.eq.s32.totalorder %s27, 0
      %p122 = por %p120, %p121
      %p123 = scmp.ne.s32.totalorder %s115, %s117
      %p124 = scmp.eq.s32.totalorder %s32, 3
      %p125 = por %p123, %p124
      %p126 = scmp.ne.s32.totalorder %s117, %s118
      %p127 = scmp.eq.s32.totalorder %s32, 0
      %p128 = por %p126, %p127
      %p129 = scmp.ne.s32.totalorder %s117, %s118
      %p130 = scmp.eq.s32.totalorder %s33, 3
      %p131 = por %p129, %p130
      %p133 = scmp.ne.s32.totalorder %s118, %s132
      %p134 = scmp.eq.s32.totalorder %s33, 0
      %p135 = por %p133, %p134
      %s137 = sadd.s32 %s136, 1
      %p140 = scmp.eq.s32.totalorder %s27, 3
      %p141 = scmp.ne.s32.totalorder %s136, %s138
      %p142 = scmp.eq.s32.totalorder %s27, 0
      %p143 = por %p141, %p142
      %p144 = scmp.ne.s32.totalorder %s136, %s138
      %p145 = scmp.eq.s32.totalorder %s32, 3
      %p146 = por %p144, %p145
      %p147 = scmp.ne.s32.totalorder %s138, %s139
      %p148 = scmp.eq.s32.totalorder %s32, 0
      %p149 = por %p147, %p148
      %p150 = scmp.ne.s32.totalorder %s138, %s139
      %p151 = scmp.eq.s32.totalorder %s33, 3
      %p152 = por %p150, %p151
      %p154 = scmp.ne.s32.totalorder %s139, %s153
      %p155 = scmp.eq.s32.totalorder %s33, 0
      %p156 = por %p154, %p155
      %s158 = sadd.s32 %s157, 1
      %p161 = scmp.eq.s32.totalorder %s27, 3
      %p162 = scmp.ne.s32.totalorder %s157, %s159
      %p163 = scmp.eq.s32.totalorder %s27, 0
      %p164 = por %p162, %p163
      %p165 = scmp.ne.s32.totalorder %s157, %s159
      %p166 = scmp.eq.s32.totalorder %s32, 3
      %p167 = por %p165, %p166
      %p168 = scmp.ne.s32.totalorder %s159, %s160
      %p169 = scmp.eq.s32.totalorder %s32, 0
      %p170 = por %p168, %p169
      %p171 = scmp.ne.s32.totalorder %s159, %s160
      %p172 = scmp.eq.s32.totalorder %s33, 3
      %p173 = por %p171, %p172
      %p175 = scmp.ne.s32.totalorder %s160, %s174
      %p176 = scmp.eq.s32.totalorder %s33, 0
      %p177 = por %p175, %p176
      %s179 = sadd.s32 %s178, 1
      %p182 = scmp.eq.s32.totalorder %s27, 3
      %p183 = scmp.ne.s32.totalorder %s178, %s180
      %p184 = scmp.eq.s32.totalorder %s27, 0
      %p185 = por %p183, %p184
      %p186 = scmp.ne.s32.totalorder %s178, %s180
      %p187 = scmp.eq.s32.totalorder %s32, 3
      %p188 = por %p186, %p187
      %p189 = scmp.ne.s32.totalorder %s180, %s181
      %p190 = scmp.eq.s32.totalorder %s32, 0
      %p191 = por %p189, %p190
      %p192 = scmp.ne.s32.totalorder %s180, %s181
      %p193 = scmp.eq.s32.totalorder %s33, 3
      %p194 = por %p192, %p193
      %p196 = scmp.ne.s32.totalorder %s181, %s195
      %p197 = scmp.eq.s32.totalorder %s33, 0
      %p198 = por %p196, %p197
      %s200 = sadd.s32 %s199, 1
      %p203 = scmp.eq.s32.totalorder %s27, 3
      %p204 = scmp.ne.s32.totalorder %s199, %s201
      %p205 = scmp.eq.s32.totalorder %s27, 0
      %p206 = por %p204, %p205
      %p207 = scmp.ne.s32.totalorder %s199, %s201
      %p208 = scmp.eq.s32.totalorder %s32, 3
      %p209 = por %p207, %p208
      %p210 = scmp.ne.s32.totalorder %s201, %s202
      %p211 = scmp.eq.s32.totalorder %s32, 0
      %p212 = por %p210, %p211
      %p213 = scmp.ne.s32.totalorder %s201, %s202
      %p214 = scmp.eq.s32.totalorder %s33, 3
      %p215 = por %p213, %p214
      %p217 = scmp.ne.s32.totalorder %s202, %s216
      %p218 = scmp.eq.s32.totalorder %s33, 0
      %p219 = por %p217, %p218
      %s221 = sadd.s32 %s220, 1
      %p224 = scmp.eq.s32.totalorder %s27, 3
      %p225 = scmp.ne.s32.totalorder %s220, %s222
      %p226 = scmp.eq.s32.totalorder %s27, 0
      %p227 = por %p225, %p226
      %p228 = scmp.ne.s32.totalorder %s220, %s222
      %p229 = scmp.eq.s32.totalorder %s32, 3
      %p230 = por %p228, %p229
      %p231 = scmp.ne.s32.totalorder %s222, %s223
      %p232 = scmp.eq.s32.totalorder %s32, 0
      %p233 = por %p231, %p232
      %p234 = scmp.ne.s32.totalorder %s222, %s223
      %p235 = scmp.eq.s32.totalorder %s33, 3
      %p236 = por %p234, %p235
      %p238 = scmp.ne.s32.totalorder %s223, %s237
      %p239 = scmp.eq.s32.totalorder %s33, 0
      %p240 = por %p238, %p239
      %s242 = sadd.s32 %s241, 1
      %p245 = scmp.eq.s32.totalorder %s27, 3
      %p246 = scmp.ne.s32.totalorder %s241, %s243
      %p247 = scmp.eq.s32.totalorder %s27, 0
      %p248 = por %p246, %p247
      %p249 = scmp.ne.s32.totalorder %s241, %s243
      %p250 = scmp.eq.s32.totalorder %s32, 3
      %p251 = por %p249, %p250
      %p252 = scmp.ne.s32.totalorder %s243, %s244
      %p253 = scmp.eq.s32.totalorder %s32, 0
      %p254 = por %p252, %p253
      %p255 = scmp.ne.s32.totalorder %s243, %s244
      %p256 = scmp.eq.s32.totalorder %s33, 3
      %p257 = por %p255, %p256
      %p259 = scmp.ne.s32.totalorder %s244, %s258
      %p260 = scmp.eq.s32.totalorder %s33, 0
      %p261 = por %p259, %p260
      %s263 = sadd.s32 %s262, 1
      %p266 = scmp.eq.s32.totalorder %s27, 3
      %p267 = scmp.ne.s32.totalorder %s262, %s264
      %p268 = scmp.eq.s32.totalorder %s27, 0
      %p269 = por %p267, %p268
      %p270 = scmp.ne.s32.totalorder %s262, %s264
      %p271 = scmp.eq.s32.totalorder %s32, 3
      %p272 = por %p270, %p271
      %p273 = scmp.ne.s32.totalorder %s264, %s265
      %p274 = scmp.eq.s32.totalorder %s32, 0
      %p275 = por %p273, %p274
      %p276 = scmp.ne.s32.totalorder %s264, %s265
      %p277 = scmp.eq.s32.totalorder %s33, 3
      %p278 = por %p276, %p277
      %p280 = scmp.ne.s32.totalorder %s265, %s279
      %p281 = scmp.eq.s32.totalorder %s33, 0
      %p282 = por %p280, %p281
      %s284 = sadd.s32 %s283, 1
      %p287 = scmp.eq.s32.totalorder %s27, 3
      %p288 = scmp.ne.s32.totalorder %s283, %s285
      %p289 = scmp.eq.s32.totalorder %s27, 0
      %p290 = por %p288, %p289
      %p291 = scmp.ne.s32.totalorder %s283, %s285
      %p292 = scmp.eq.s32.totalorder %s32, 3
      %p293 = por %p291, %p292
      %p294 = scmp.ne.s32.totalorder %s285, %s286
      %p295 = scmp.eq.s32.totalorder %s32, 0
      %p296 = por %p294, %p295
      %p297 = scmp.ne.s32.totalorder %s285, %s286
      %p298 = scmp.eq.s32.totalorder %s33, 3
      %p299 = por %p297, %p298
      %p301 = scmp.ne.s32.totalorder %s286, %s300
      %p302 = scmp.eq.s32.totalorder %s33, 0
      %p303 = por %p301, %p302
      %s305 = sadd.s32 %s304, 1
      %p308 = scmp.eq.s32.totalorder %s27, 3
      %p309 = scmp.ne.s32.totalorder %s304, %s306
      %p310 = scmp.eq.s32.totalorder %s27, 0
      %p311 = por %p309, %p310
      %p312 = scmp.ne.s32.totalorder %s304, %s306
      %p313 = scmp.eq.s32.totalorder %s32, 3
      %p314 = por %p312, %p313
      %p315 = scmp.ne.s32.totalorder %s306, %s307
      %p316 = scmp.eq.s32.totalorder %s32, 0
      %p317 = por %p315, %p316
      %p318 = scmp.ne.s32.totalorder %s306, %s307
      %p319 = scmp.eq.s32.totalorder %s33, 3
      %p320 = por %p318, %p319
      %p322 = scmp.ne.s32.totalorder %s307, %s321
      %p323 = scmp.eq.s32.totalorder %s33, 0
      %p324 = por %p322, %p323
      %s325 = ssub.s32 %s34, %s46
      %p326 = scmp.eq.s32.totalorder %s325, 0
      %s328 = sadd.s32 %s327, 1
      %s329 = scalar_select %p326, %s327, %s328
      %p332 = pneg %p326
      %p333 = scmp.eq.s32.totalorder %s27, 3
      %p334 = por %p332, %p333
      %p335 = scmp.ne.s32.totalorder %s327, %s330
      %p336 = scmp.eq.s32.totalorder %s27, 0
      %p337 = por %p335, %p336
      %p338 = scmp.ne.s32.totalorder %s327, %s330
      %p339 = scmp.eq.s32.totalorder %s32, 3
      %p340 = por %p338, %p339
      %p341 = scmp.ne.s32.totalorder %s330, %s331
      %p342 = scmp.eq.s32.totalorder %s32, 0
      %p343 = por %p341, %p342
      %p344 = scmp.ne.s32.totalorder %s330, %s331
      %p345 = scmp.eq.s32.totalorder %s33, 3
      %p346 = por %p344, %p345
      %p348 = scmp.ne.s32.totalorder %s331, %s347
      %p349 = scmp.eq.s32.totalorder %s33, 0
      %p350 = por %p348, %p349
      %p351 = scmp.le.s32.totalorder 1, %s27
      %p352 = scmp.lt.s32.totalorder %s27, 5
      %p353 = pnand %p351, %p352
      %p354 = pneg %p353
      // Predicated region
      $region9: #{tpu_custom_call.1} parent=5 // pred_check
        _
      $region10: #{tpu_custom_call.1} parent=5 // pred_check_branch
        %356 = sbr.rel (%p353) target = $region12
      $region11: #{tpu_custom_call.1} parent=5 // pred_region
        %s357 = ssub.s32 %s27, 1
        // Predicated region
        $region13: #{tpu_custom_call.1} parent=11 // pred_check
          %p358 = pneg %p86
        $region14: #{tpu_custom_call.1} parent=11 // pred_check_branch
          %360 = sbr.rel (%p358) target = $region16
        $region15: #{tpu_custom_call.1} parent=11 // pred_region
          %s362 = ssub.s32 3072, 3072
          %363 = vsyncadd [#allocation6], %s362
          %s364 = sshll.u32 [#allocation5], 4
          %s365 = int_to_ptr.vmem [resolvable:$true] %s364
          %370 = dma.hbm_to_vmem [thread:$0]  %s1, 3072, %s365, [#allocation6], 192, 192, 12
        $region16: #{tpu_custom_call.1} parent=11 // pred_fallthru
          _
        // Predicated region
        $region17: #{tpu_custom_call.1} parent=11 // pred_check
          %p371 = pneg %p107
        $region18: #{tpu_custom_call.1} parent=11 // pred_check_branch
          %373 = sbr.rel (%p371) target = $region20
        $region19: #{tpu_custom_call.1} parent=11 // pred_region
          _
        $region20: #{tpu_custom_call.1} parent=11 // pred_fallthru
          _
        // Predicated region
        $region21: #{tpu_custom_call.1} parent=11 // pred_check
          %p374 = pneg %p128
        $region22: #{tpu_custom_call.1} parent=11 // pred_check_branch
          %376 = sbr.rel (%p374) target = $region24
        $region23: #{tpu_custom_call.1} parent=11 // pred_region
          %s378 = ssub.s32 1024, 1024
          %379 = vsyncadd [#allocation6], %s378
          %s380 = sshll.u32 [#allocation7], 4
          %s381 = int_to_ptr.vmem [resolvable:$true] %s380
          %386 = dma.hbm_to_vmem [thread:$0]  %s3, 1024, %s381, [#allocation6], 64, 64, 4
        $region24: #{tpu_custom_call.1} parent=11 // pred_fallthru
          _
        // Predicated region
        $region25: #{tpu_custom_call.1} parent=11 // pred_check
          %p387 = pneg %p149
        $region26: #{tpu_custom_call.1} parent=11 // pred_check_branch
          %389 = sbr.rel (%p387) target = $region28
        $region27: #{tpu_custom_call.1} parent=11 // pred_region
          _
        $region28: #{tpu_custom_call.1} parent=11 // pred_fallthru
          _
        // Predicated region
        $region29: #{tpu_custom_call.1} parent=11 // pred_check
          %p390 = pneg %p170
        $region30: #{tpu_custom_call.1} parent=11 // pred_check_branch
          %392 = sbr.rel (%p390) target = $region32
        $region31: #{tpu_custom_call.1} parent=11 // pred_region
          _
        $region32: #{tpu_custom_call.1} parent=11 // pred_fallthru
          _
        // Predicated region
        $region33: #{tpu_custom_call.1} parent=11 // pred_check
          %p393 = pneg %p191
        $region34: #{tpu_custom_call.1} parent=11 // pred_check_branch
          %395 = sbr.rel (%p393) target = $region36
        $region35: #{tpu_custom_call.1} parent=11 // pred_region
          _
        $region36: #{tpu_custom_call.1} parent=11 // pred_fallthru
          _
        // Predicated region
        $region37: #{tpu_custom_call.1} parent=11 // pred_check
          %p396 = pneg %p212
        $region38: #{tpu_custom_call.1} parent=11 // pred_check_branch
          %398 = sbr.rel (%p396) target = $region40
        $region39: #{tpu_custom_call.1} parent=11 // pred_region
          %s400 = ssub.s32 2048, 2048
          %401 = vsyncadd [#allocation9], %s400
          %s402 = sshll.u32 [#allocation8], 4
          %s403 = int_to_ptr.vmem [resolvable:$true] %s402
          %408 = dma.hbm_to_vmem [thread:$0]  %s7, 2048, %s403, [#allocation9], 128, 128, 8
        $region40: #{tpu_custom_call.1} parent=11 // pred_fallthru
          _
        // Predicated region
        $region41: #{tpu_custom_call.1} parent=11 // pred_check
          %p409 = pneg %p233
        $region42: #{tpu_custom_call.1} parent=11 // pred_check_branch
          %411 = sbr.rel (%p409) target = $region44
        $region43: #{tpu_custom_call.1} parent=11 // pred_region
          _
        $region44: #{tpu_custom_call.1} parent=11 // pred_fallthru
          _
        // Predicated region
        $region45: #{tpu_custom_call.1} parent=11 // pred_check
          %p412 = pneg %p254
        $region46: #{tpu_custom_call.1} parent=11 // pred_check_branch
          %414 = sbr.rel (%p412) target = $region48
        $region47: #{tpu_custom_call.1} parent=11 // pred_region
          %s416 = ssub.s32 2048, 2048
          %417 = vsyncadd [#allocation9], %s416
          %s418 = sshll.u32 [#allocation10], 4
          %s419 = int_to_ptr.vmem [resolvable:$true] %s418
          %424 = dma.hbm_to_vmem [thread:$0]  %s9, 2048, %s419, [#allocation9], 64, 64, 4
        $region48: #{tpu_custom_call.1} parent=11 // pred_fallthru
          _
        // Predicated region
        $region49: #{tpu_custom_call.1} parent=11 // pred_check
          %p425 = pneg %p275
        $region50: #{tpu_custom_call.1} parent=11 // pred_check_branch
          %427 = sbr.rel (%p425) target = $region52
        $region51: #{tpu_custom_call.1} parent=11 // pred_region
          _
        $region52: #{tpu_custom_call.1} parent=11 // pred_fallthru
          _
        // Predicated region
        $region53: #{tpu_custom_call.1} parent=11 // pred_check
          %p428 = pneg %p296
        $region54: #{tpu_custom_call.1} parent=11 // pred_check_branch
          %430 = sbr.rel (%p428) target = $region56
        $region55: #{tpu_custom_call.1} parent=11 // pred_region
          _
        $region56: #{tpu_custom_call.1} parent=11 // pred_fallthru
          _
        // Predicated region
        $region57: #{tpu_custom_call.1} parent=11 // pred_check
          %p431 = pneg %p317
        $region58: #{tpu_custom_call.1} parent=11 // pred_check_branch
          %433 = sbr.rel (%p431) target = $region60
        $region59: #{tpu_custom_call.1} parent=11 // pred_region
          _
        $region60: #{tpu_custom_call.1} parent=11 // pred_fallthru
          _
      $region12: #{tpu_custom_call.1} parent=5 // pred_fallthru
        _
      %p434 = scmp.lt.s32.totalorder %s27, 4
      // Predicated region
      $region61: #{tpu_custom_call.1} parent=5 // pred_check
        %p435 = pneg %p434
      $region62: #{tpu_custom_call.1} parent=5 // pred_check_branch
        %437 = sbr.rel (%p435) target = $region64
      $region63: #{tpu_custom_call.1} parent=5 // pred_region
        // Predicated region
        $region65: #{tpu_custom_call.1} parent=63 // pred_check
          %p438 = pneg %p59
        $region66: #{tpu_custom_call.1} parent=63 // pred_check_branch
          %440 = sbr.rel (%p438) target = $region68
        $region67: #{tpu_custom_call.1} parent=63 // pred_region
          %s441 = sand.u32 %s49, 1
          %s442 = scalar_lea.sflag [#allocation3], %s441
          %s443 = sand.u32 %s49, 1
          %s444 = smul.addr %s443, 8
          %s445 = scalar_lea.vmem [#allocation2], %s444
          %s447 = ssub.s32 128, 128
          %448 = vsyncadd %s442, %s447
          %s449 = smul.addr %s34, 128
          %s450 = scalar_lea.hbm %s0, %s449
          %s452 = sshll.u32 %s445, 4
          %s453 = int_to_ptr.vmem [resolvable:$true] %s452
          %455 = dma.hbm_to_vmem [thread:$0]  %s450, 128, %s453, %s442
        $region68: #{tpu_custom_call.1} parent=63 // pred_fallthru
          _
      $region64: #{tpu_custom_call.1} parent=5 // pred_fallthru
        _
      %p456 = scmp.le.s32.totalorder 1, %s27
      %p457 = scmp.lt.s32.totalorder %s27, 5
      %p458 = pnand %p456, %p457
      %p459 = pneg %p458
      // Predicated region
      $region69: #{tpu_custom_call.1} parent=5 // pred_check
        _
      $region70: #{tpu_custom_call.1} parent=5 // pred_check_branch
        %461 = sbr.rel (%p458) target = $region72
      $region71: #{tpu_custom_call.1} parent=5 // pred_region
        %s462 = ssub.s32 %s27, 1
        %s463 = sand.u32 %s52, 1
        %s464 = scalar_lea.sflag [#allocation3], %s463
        %s465 = sand.u32 %s52, 1
        %s466 = smul.addr %s465, 8
        %s467 = scalar_lea.vmem [#allocation2], %s466
        // Predicated region
        $region73: #{tpu_custom_call.1} parent=71 // pred_check
          %p468 = pneg %p65
        $region74: #{tpu_custom_call.1} parent=71 // pred_check_branch
          %470 = sbr.rel (%p468) target = $region76
        $region75: #{tpu_custom_call.1} parent=71 // pred_region
          %471 = dma.done %s464, 128
        $region76: #{tpu_custom_call.1} parent=71 // pred_fallthru
          _
        // Predicated region
        $region77: #{tpu_custom_call.1} parent=71 // pred_check
          %p472 = pneg %p86
        $region78: #{tpu_custom_call.1} parent=71 // pred_check_branch
          %474 = sbr.rel (%p472) target = $region80
        $region79: #{tpu_custom_call.1} parent=71 // pred_region
          %475 = dma.done [#allocation6], 3072
        $region80: #{tpu_custom_call.1} parent=71 // pred_fallthru
          _
        // Predicated region
        $region81: #{tpu_custom_call.1} parent=71 // pred_check
          %p476 = pneg %p128
        $region82: #{tpu_custom_call.1} parent=71 // pred_check_branch
          %478 = sbr.rel (%p476) target = $region84
        $region83: #{tpu_custom_call.1} parent=71 // pred_region
          %479 = dma.done [#allocation6], 1024
        $region84: #{tpu_custom_call.1} parent=71 // pred_fallthru
          _
        // Predicated region
        $region85: #{tpu_custom_call.1} parent=71 // pred_check
          %p480 = pneg %p212
        $region86: #{tpu_custom_call.1} parent=71 // pred_check_branch
          %482 = sbr.rel (%p480) target = $region88
        $region87: #{tpu_custom_call.1} parent=71 // pred_region
          %483 = dma.done [#allocation9], 2048
        $region88: #{tpu_custom_call.1} parent=71 // pred_fallthru
          _
        // Predicated region
        $region89: #{tpu_custom_call.1} parent=71 // pred_check
          %p484 = pneg %p254
        $region90: #{tpu_custom_call.1} parent=71 // pred_check_branch
          %486 = sbr.rel (%p484) target = $region92
        $region91: #{tpu_custom_call.1} parent=71 // pred_region
          %487 = dma.done [#allocation9], 2048
        $region92: #{tpu_custom_call.1} parent=71 // pred_fallthru
          _
        %s488 = sand.u32 %s52, 1
        %s489 = scalar_lea.sflag [#allocation3], %s488
        %s490 = sand.u32 %s52, 1
        %s491 = smul.addr %s490, 8
        %s492 = scalar_lea.vmem [#allocation2], %s491
        %p493 = pneg %p65
        %p494 = pneg %p62
        %p495 = pneg %p86
        %p496 = pneg %p83
        %p497 = pneg %p107
        %p498 = pneg %p104
        %p499 = pneg %p128
        %p500 = pneg %p125
        %p501 = pneg %p149
        %p502 = pneg %p146
        %p503 = pneg %p170
        %p504 = pneg %p167
        %p505 = pneg %p191
        %p506 = pneg %p188
        %p507 = pneg %p212
        %p508 = pneg %p209
        %p509 = pneg %p233
        %p510 = pneg %p230
        %p511 = pneg %p254
        %p512 = pneg %p251
        %p513 = pneg %p275
        %p514 = pneg %p272
        %p515 = pneg %p296
        %p516 = pneg %p293
        %p517 = pneg %p317
        %p518 = pneg %p314
        %p519 = pneg %p343
        %p520 = pneg %p340
        %s521 = sand.u32 %s330, 1
        %s522 = scalar_lea.sflag [#allocation4], %s521
        %s523 = sand.u32 %s330, 1
        %s524 = smul.addr %s523, 8
        %s525 = scalar_lea.vmem [#allocation11], %s524
        %p527 = scmp.eq.s32.totalorder %s37, 0
        // Predicated region
        $region93: #{tpu_custom_call.1} parent=71 // pred_check
          %p528 = pneg %p527
        $region94: #{tpu_custom_call.1} parent=71 // pred_check_branch
          %530 = sbr.rel (%p528) target = $region96
        $region95: #{tpu_custom_call.1} parent=71 // pred_region
          %v531 = vld [vmem:[%s467] sm:$0xff]
          %532 = vst [vmem:[%s525] sm:$0xff] %v531
        $region96: #{tpu_custom_call.1} parent=71 // pred_fallthru
          _
        %v533 = vld [vmem:[%s525] sm:$0xff]
        %v534 = vld [vmem:[#allocation5] sm:$0xff]
        %v535 = vld [vmem:[#allocation5 + $0x8] sm:$0xf]
        %v536 = vld [vmem:[#allocation5 + $0xc] sm:$0xff]
        %v537 = vld [vmem:[#allocation5 + $0x14] sm:$0xf]
        %v538 = vld [vmem:[#allocation5 + $0x18] sm:$0xff]
        %v539 = vld [vmem:[#allocation5 + $0x20] sm:$0xf]
        %v540 = vld [vmem:[#allocation5 + $0x24] sm:$0xff]
        %v541 = vld [vmem:[#allocation5 + $0x2c] sm:$0xf]
        %v542 = vld [vmem:[#allocation5 + $0x30] sm:$0xff]
        %v543 = vld [vmem:[#allocation5 + $0x38] sm:$0xf]
        %v544 = vld [vmem:[#allocation5 + $0x3c] sm:$0xff]
        %v545 = vld [vmem:[#allocation5 + $0x44] sm:$0xf]
        %v546 = vld [vmem:[#allocation5 + $0x48] sm:$0xff]
        %v547 = vld [vmem:[#allocation5 + $0x50] sm:$0xf]
        %v548 = vld [vmem:[#allocation5 + $0x54] sm:$0xff]
        %v549 = vld [vmem:[#allocation5 + $0x5c] sm:$0xf]
        %v550 = vld [vmem:[#allocation5 + $0x60] sm:$0xff]
        %v551 = vld [vmem:[#allocation5 + $0x68] sm:$0xf]
        %v552 = vld [vmem:[#allocation5 + $0x6c] sm:$0xff]
        %v553 = vld [vmem:[#allocation5 + $0x74] sm:$0xf]
        %v554 = vld [vmem:[#allocation5 + $0x78] sm:$0xff]
        %v555 = vld [vmem:[#allocation5 + $0x80] sm:$0xf]
        %v556 = vld [vmem:[#allocation5 + $0x84] sm:$0xff]
        %v557 = vld [vmem:[#allocation5 + $0x8c] sm:$0xf]
        %v558 = vld [vmem:[#allocation5 + $0x90] sm:$0xff]
        %v559 = vld [vmem:[#allocation5 + $0x98] sm:$0xf]
        %v560 = vld [vmem:[#allocation5 + $0x9c] sm:$0xff]
        %v561 = vld [vmem:[#allocation5 + $0xa4] sm:$0xf]
        %v562 = vld [vmem:[#allocation5 + $0xa8] sm:$0xff]
        %v563 = vld [vmem:[#allocation5 + $0xb0] sm:$0xf]
        %v564 = vld [vmem:[#allocation5 + $0xb4] sm:$0xff]
        %v565 = vld [vmem:[#allocation5 + $0xbc] sm:$0xf]
        %v566 = vpack.c.bf16 %v533, %v533
        %v567 = vld [vmem:[%s2] sm:$0x7]
        %v569 = vlaneseq
        %v570 = vshrl.u32 %v569, 7
        %v571 = vsub.s32 0, %v570
        %v572 = vrot.slane %v567, %v571
        %v573 = vlaneseq
        %v574 = vshrl.u32 %v573, 7
        %v575 = vsub.s32 1, %v574
        %v576 = vrot.slane %v567, %v575
        %v577 = vlaneseq
        %v578 = vshrl.u32 %v577, 7
        %v579 = vsub.s32 2, %v578
        %v580 = vrot.slane %v567, %v579
        %v616 = vunpack.c.l.b16 %v534
        %v617 = vunpack.c.h.b16 %v534
        %v618 = vunpack.c.l.b16 %v535
        %v619 = vunpack.c.l.b16 %v536
        %v620 = vunpack.c.h.b16 %v536
        %v621 = vunpack.c.l.b16 %v537
        %v622 = vunpack.c.l.b16 %v538
        %v623 = vunpack.c.h.b16 %v538
        %v624 = vunpack.c.l.b16 %v539
        %v625 = vunpack.c.l.b16 %v540
        %v626 = vunpack.c.h.b16 %v540
        %v627 = vunpack.c.l.b16 %v541
        %v628 = vunpack.c.l.b16 %v542
        %v629 = vunpack.c.h.b16 %v542
        %v630 = vunpack.c.l.b16 %v543
        %v631 = vunpack.c.l.b16 %v544
        %v632 = vunpack.c.h.b16 %v544
        %v633 = vunpack.c.l.b16 %v545
        %v634 = vunpack.c.l.b16 %v546
        %v635 = vunpack.c.h.b16 %v546
        %v636 = vunpack.c.l.b16 %v547
        %v637 = vunpack.c.l.b16 %v548
        %v638 = vunpack.c.h.b16 %v548
        %v639 = vunpack.c.l.b16 %v549
        %v640 = vunpack.c.l.b16 %v550
        %v641 = vunpack.c.h.b16 %v550
        %v642 = vunpack.c.l.b16 %v551
        %v643 = vunpack.c.l.b16 %v552
        %v644 = vunpack.c.h.b16 %v552
        %v645 = vunpack.c.l.b16 %v553
        %v646 = vunpack.c.l.b16 %v554
        %v647 = vunpack.c.h.b16 %v554
        %v648 = vunpack.c.l.b16 %v555
        %v649 = vunpack.c.l.b16 %v556
        %v650 = vunpack.c.h.b16 %v556
        %v651 = vunpack.c.l.b16 %v557
        %v652 = vunpack.c.l.b16 %v558
        %v653 = vunpack.c.h.b16 %v558
        %v654 = vunpack.c.l.b16 %v559
        %v655 = vunpack.c.l.b16 %v560
        %v656 = vunpack.c.h.b16 %v560
        %v657 = vunpack.c.l.b16 %v561
        %v658 = vunpack.c.l.b16 %v562
        %v659 = vunpack.c.h.b16 %v562
        %v660 = vunpack.c.l.b16 %v563
        %v661 = vunpack.c.l.b16 %v564
        %v662 = vunpack.c.h.b16 %v564
        %v663 = vunpack.c.l.b16 %v565
        %v664 = vpack.c.b16 %v619, %v616
        %v665 = vpack.c.b16 %v620, %v617
        %v666 = vpack.c.b16 %v621, %v618
        %v667 = vpack.c.b16 %v625, %v622
        %v668 = vpack.c.b16 %v626, %v623
        %v669 = vpack.c.b16 %v627, %v624
        %v670 = vpack.c.b16 %v631, %v628
        %v671 = vpack.c.b16 %v632, %v629
        %v672 = vpack.c.b16 %v633, %v630
        %v673 = vpack.c.b16 %v637, %v634
        %v674 = vpack.c.b16 %v638, %v635
        %v675 = vpack.c.b16 %v639, %v636
        %v676 = vpack.c.b16 %v643, %v640
        %v677 = vpack.c.b16 %v644, %v641
        %v678 = vpack.c.b16 %v645, %v642
        %v679 = vpack.c.b16 %v649, %v646
        %v680 = vpack.c.b16 %v650, %v647
        %v681 = vpack.c.b16 %v651, %v648
        %v682 = vpack.c.b16 %v655, %v652
        %v683 = vpack.c.b16 %v656, %v653
        %v684 = vpack.c.b16 %v657, %v654
        %v685 = vpack.c.b16 %v661, %v658
        %v686 = vpack.c.b16 %v662, %v659
        %v687 = vpack.c.b16 %v663, %v660
        %712 = vmatprep.subr.bf16.mxu0 %v665
        %713 = vmatpush1.bf16.msra.mxu0 %v664
        %714 = vmatprep.subr.bf16.mxu0 %v668
        %715 = vmatpush1.bf16.msra.mxu0 %v667
        %716 = vmatprep.subr.bf16.mxu0 %v671
        %717 = vmatpush1.bf16.msra.mxu0 %v670
        %718 = vmatprep.subr.bf16.mxu0 %v674
        %719 = vmatpush1.bf16.msra.mxu0 %v673
        %720 = vmatprep.subr.bf16.mxu0 %v677
        %721 = vmatpush1.bf16.msra.mxu0 %v676
        %722 = vmatprep.subr.bf16.mxu0 %v680
        %723 = vmatpush1.bf16.msra.mxu0 %v679
        %724 = vmatprep.subr.bf16.mxu0 %v683
        %725 = vmatpush1.bf16.msra.mxu0 %v682
        %726 = vmatprep.subr.bf16.mxu0 %v686
        %727 = vmatpush1.bf16.msra.mxu0 %v685
        %728 = vmatprep.subr.bf16.mxu0 0
        %729 = vmatpush1.bf16.msra.mxu0 0
        %730 = vmatprep.subr.bf16.mxu0 0
        %731 = vmatpush1.bf16.msra.mxu0 0
        %732 = vmatprep.subr.bf16.mxu0 0
        %733 = vmatpush1.bf16.msra.mxu0 0
        %734 = vmatprep.subr.bf16.mxu0 0
        %735 = vmatpush1.bf16.msra.mxu0 0
        %736 = vmatprep.subr.bf16.mxu0 0
        %737 = vmatpush1.bf16.msra.mxu0 0
        %738 = vmatprep.subr.bf16.mxu0 0
        %739 = vmatpush1.bf16.msra.mxu0 0
        %740 = vmatprep.subr.bf16.mxu0 0
        %741 = vmatpush1.bf16.msra.mxu0 0
        %742 = vmatprep.subr.bf16.mxu0 0
        %743 = vmatpush1.bf16.msra.mxu0 0
        %744 = vmatprep.mubr.bf16.mxu0 0
        %745 = vmatmul.mubr.bf16.gmra.mrb[0].mxu0 %v566
        %v746 = vpop.f32.mrb[0].mxu0
        %v747 = vadd.f32 %v572, %v746
        %v748 = vpop.f32.mrb[0].mxu0
        %v749 = vadd.f32 %v576, %v748
        %v750 = vpop.f32.mrb[0].mxu0
        %v751 = vpop.f32.mrb[0].mxu0
        %752 = vdwg.mxu0
        %753 = vmatprep.subr.bf16.mxu0 0
        %754 = vmatpush1.bf16.msra.mxu0 %v666
        %755 = vmatprep.subr.bf16.mxu0 0
        %756 = vmatpush1.bf16.msra.mxu0 %v669
        %757 = vmatprep.subr.bf16.mxu0 0
        %758 = vmatpush1.bf16.msra.mxu0 %v672
        %759 = vmatprep.subr.bf16.mxu0 0
        %760 = vmatpush1.bf16.msra.mxu0 %v675
        %761 = vmatprep.subr.bf16.mxu0 0
        %762 = vmatpush1.bf16.msra.mxu0 %v678
        %763 = vmatprep.subr.bf16.mxu0 0
        %764 = vmatpush1.bf16.msra.mxu0 %v681
        %765 = vmatprep.subr.bf16.mxu0 0
        %766 = vmatpush1.bf16.msra.mxu0 %v684
        %767 = vmatprep.subr.bf16.mxu0 0
        %768 = vmatpush1.bf16.msra.mxu0 %v687
        %769 = vmatprep.subr.bf16.mxu0 0
        %770 = vmatpush1.bf16.msra.mxu0 0
        %771 = vmatprep.subr.bf16.mxu0 0
        %772 = vmatpush1.bf16.msra.mxu0 0
        %773 = vmatprep.subr.bf16.mxu0 0
        %774 = vmatpush1.bf16.msra.mxu0 0
        %775 = vmatprep.subr.bf16.mxu0 0
        %776 = vmatpush1.bf16.msra.mxu0 0
        %777 = vmatprep.subr.bf16.mxu0 0
        %778 = vmatpush1.bf16.msra.mxu0 0
        %779 = vmatprep.subr.bf16.mxu0 0
        %780 = vmatpush1.bf16.msra.mxu0 0
        %781 = vmatprep.subr.bf16.mxu0 0
        %782 = vmatpush1.bf16.msra.mxu0 0
        %783 = vmatprep.subr.bf16.mxu0 0
        %784 = vmatpush1.bf16.msra.mxu0 0
        %785 = vmatprep.mubr.bf16.mxu0 0
        %786 = vmatmul.mubr.bf16.gmra.mrb[0].mxu0 %v566
        %v787 = vpop.f32.mrb[0].mxu0
        %v788 = vadd.f32 %v580, %v787
        %v789 = vpop.f32.mrb[0].mxu0
        %v790 = vpop.f32.mrb[0].mxu0
        %v791 = vpop.f32.mrb[0].mxu0
        %792 = vdwg.mxu0
        %v793 = vld [vmem:[#allocation7] sm:$0xf]
        %v794 = vld [vmem:[#allocation7 + $0x4] sm:$0xf]
        %v795 = vld [vmem:[#allocation7 + $0x8] sm:$0xf]
        %v796 = vld [vmem:[#allocation7 + $0xc] sm:$0xf]
        %v797 = vld [vmem:[#allocation7 + $0x10] sm:$0xf]
        %v798 = vld [vmem:[#allocation7 + $0x14] sm:$0xf]
        %v799 = vld [vmem:[#allocation7 + $0x18] sm:$0xf]
        %v800 = vld [vmem:[#allocation7 + $0x1c] sm:$0xf]
        %v801 = vld [vmem:[#allocation7 + $0x20] sm:$0xf]
        %v802 = vld [vmem:[#allocation7 + $0x24] sm:$0xf]
        %v803 = vld [vmem:[#allocation7 + $0x28] sm:$0xf]
        %v804 = vld [vmem:[#allocation7 + $0x2c] sm:$0xf]
        %v805 = vld [vmem:[#allocation7 + $0x30] sm:$0xf]
        %v806 = vld [vmem:[#allocation7 + $0x34] sm:$0xf]
        %v807 = vld [vmem:[#allocation7 + $0x38] sm:$0xf]
        %v808 = vld [vmem:[#allocation7 + $0x3c] sm:$0xf]
        %v809 = vld [vmem:[%s4] sm:$0x1]
        %v810 = vpack.c.bf16 %v749, %v749
        %v811 = vpack.c.bf16 %v747, %v747
        %vm812 = vcmask 261120
        %v814 = vsel %vm812, %v811, 0
        %v817 = vsel %vm812, %v810, 0
        %819 = vmatprep.subr.bf16.mxu0 0
        %820 = vmatpush1.bf16.xpose.msra.mxu0 %v817
        %821 = vmatprep.subr.bf16.mxu0 0
        %822 = vmatpush1.bf16.xpose.msra.mxu0 0
        %823 = vmatprep.subr.bf16.mxu0 0
        %824 = vmatpush1.bf16.xpose.msra.mxu0 0
        %825 = vmatprep.subr.bf16.mxu0 0
        %826 = vmatpush1.bf16.xpose.msra.mxu0 0
        %827 = vmatprep.subr.bf16.mxu0 0
        %828 = vmatpush1.bf16.xpose.msra.mxu0 0
        %829 = vmatprep.subr.bf16.mxu0 0
        %830 = vmatpush1.bf16.xpose.msra.mxu0 0
        %831 = vmatprep.subr.bf16.mxu0 0
        %832 = vmatpush1.bf16.xpose.msra.mxu0 0
        %833 = vmatprep.subr.bf16.mxu0 0
        %834 = vmatpush1.bf16.xpose.msra.mxu0 0
        %835 = vmatprep.subr.bf16.mxu0 0
        %836 = vmatpush1.bf16.xpose.msra.mxu0 0
        %837 = vmatprep.subr.bf16.mxu0 0
        %838 = vmatpush1.bf16.xpose.msra.mxu0 0
        %839 = vmatprep.subr.bf16.mxu0 0
        %840 = vmatpush1.bf16.xpose.msra.mxu0 0
        %841 = vmatprep.subr.bf16.mxu0 0
        %842 = vmatpush1.bf16.xpose.msra.mxu0 0
        %843 = vmatprep.subr.bf16.mxu0 0
        %844 = vmatpush1.bf16.xpose.msra.mxu0 0
        %845 = vmatprep.subr.bf16.mxu0 0
        %846 = vmatpush1.bf16.xpose.msra.mxu0 0
        %847 = vmatprep.subr.bf16.mxu0 0
        %848 = vmatpush1.bf16.xpose.msra.mxu0 0
        %849 = vmatprep.subr.bf16.mxu0 0
        %850 = vmatpush1.bf16.xpose.msra.mxu0 0
        %851 = vmatprep.mubr.bf16.mxu0 0
        %852 = vmatmul.mubr.bf16.gmra.mrb[0].mxu0 %v814
        %v853 = vpop.f32.mrb[0].mxu0
        %v854 = vadd.f32 0.0, %v853
        %v855 = vpop.f32.mrb[0].mxu0
        %v856 = vpop.f32.mrb[0].mxu0
        %v857 = vpop.f32.mrb[0].mxu0
        %858 = vdwg.mxu0
        %v859 = vmul.f32 %v854, 0.17677669
        %vm860 = vcmask 64512
        %v861 = vsel %vm860, %v859, -inf
        %862 = vmax.xlane.f32.xlu0 %v861
        %v863 = vpop.xlane.xlu0 %862
        %v864 = vsub.f32 %v859, %v863
        %v865 = vmul.f32 %v864, 1.442695
        %v866 = vpow.pop %v865
        %v867 = vsel %vm860, %v866, 0.0
        %868 = vadd.xlane.f32.xlu0 %v867
        %v869 = vpop.xlane.xlu0 %868
        %v870 = vrcp.pop %v869
        %v871 = vmul.f32 %v866, %v870
        %v872 = vpack.c.bf16 %v871, %v871
        %v873 = vpack.c.bf16 %v788, %v788
        %v875 = vsel %vm860, %v872, 0
        %vm877 = vcmask 1043456
        %v879 = vsel %vm877, %v873, 0
        %881 = vmatprep.subr.bf16.mxu0 0
        %882 = vmatpush1.bf16.msra.mxu0 %v879
        %883 = vmatprep.subr.bf16.mxu0 0
        %884 = vmatpush1.bf16.msra.mxu0 0
        %885 = vmatprep.subr.bf16.mxu0 0
        %886 = vmatpush1.bf16.msra.mxu0 0
        %887 = vmatprep.subr.bf16.mxu0 0
        %888 = vmatpush1.bf16.msra.mxu0 0
        %889 = vmatprep.subr.bf16.mxu0 0
        %890 = vmatpush1.bf16.msra.mxu0 0
        %891 = vmatprep.subr.bf16.mxu0 0
        %892 = vmatpush1.bf16.msra.mxu0 0
        %893 = vmatprep.subr.bf16.mxu0 0
        %894 = vmatpush1.bf16.msra.mxu0 0
        %895 = vmatprep.subr.bf16.mxu0 0
        %896 = vmatpush1.bf16.msra.mxu0 0
        %897 = vmatprep.subr.bf16.mxu0 0
        %898 = vmatpush1.bf16.msra.mxu0 0
        %899 = vmatprep.subr.bf16.mxu0 0
        %900 = vmatpush1.bf16.msra.mxu0 0
        %901 = vmatprep.subr.bf16.mxu0 0
        %902 = vmatpush1.bf16.msra.mxu0 0
        %903 = vmatprep.subr.bf16.mxu0 0
        %904 = vmatpush1.bf16.msra.mxu0 0
        %905 = vmatprep.subr.bf16.mxu0 0
        %906 = vmatpush1.bf16.msra.mxu0 0
        %907 = vmatprep.subr.bf16.mxu0 0
        %908 = vmatpush1.bf16.msra.mxu0 0
        %909 = vmatprep.subr.bf16.mxu0 0
        %910 = vmatpush1.bf16.msra.mxu0 0
        %911 = vmatprep.subr.bf16.mxu0 0
        %912 = vmatpush1.bf16.msra.mxu0 0
        %913 = vmatprep.mubr.bf16.mxu0 0
        %914 = vmatmul.mubr.bf16.gmra.mrb[0].mxu0 %v875
        %v915 = vpop.f32.mrb[0].mxu0
        %v916 = vadd.f32 0.0, %v915
        %v917 = vpop.f32.mrb[0].mxu0
        %v918 = vpop.f32.mrb[0].mxu0
        %v919 = vpop.f32.mrb[0].mxu0
        %920 = vdwg.mxu0
        %v921 = vpack.c.bf16 %v916, %v916
        %923 = vrot.lane.b32.xlu0 %v811, 96
        %v924 = vpop.permute.xlu0 %923
        %926 = vrot.lane.b32.xlu0 %v810, 96
        %v927 = vpop.permute.xlu0 %926
        %v929 = vsel %vm812, %v924, 0
        %v932 = vsel %vm812, %v927, 0
        %934 = vmatprep.subr.bf16.mxu0 0
        %935 = vmatpush1.bf16.xpose.msra.mxu0 %v932
        %936 = vmatprep.subr.bf16.mxu0 0
        %937 = vmatpush1.bf16.xpose.msra.mxu0 0
        %938 = vmatprep.subr.bf16.mxu0 0
        %939 = vmatpush1.bf16.xpose.msra.mxu0 0
        %940 = vmatprep.subr.bf16.mxu0 0
        %941 = vmatpush1.bf16.xpose.msra.mxu0 0
        %942 = vmatprep.subr.bf16.mxu0 0
        %943 = vmatpush1.bf16.xpose.msra.mxu0 0
        %944 = vmatprep.subr.bf16.mxu0 0
        %945 = vmatpush1.bf16.xpose.msra.mxu0 0
        %946 = vmatprep.subr.bf16.mxu0 0
        %947 = vmatpush1.bf16.xpose.msra.mxu0 0
        %948 = vmatprep.subr.bf16.mxu0 0
        %949 = vmatpush1.bf16.xpose.msra.mxu0 0
        %950 = vmatprep.subr.bf16.mxu0 0
        %951 = vmatpush1.bf16.xpose.msra.mxu0 0
        %952 = vmatprep.subr.bf16.mxu0 0
        %953 = vmatpush1.bf16.xpose.msra.mxu0 0
        %954 = vmatprep.subr.bf16.mxu0 0
        %955 = vmatpush1.bf16.xpose.msra.mxu0 0
        %956 = vmatprep.subr.bf16.mxu0 0
        %957 = vmatpush1.bf16.xpose.msra.mxu0 0
        %958 = vmatprep.subr.bf16.mxu0 0
        %959 = vmatpush1.bf16.xpose.msra.mxu0 0
        %960 = vmatprep.subr.bf16.mxu0 0
        %961 = vmatpush1.bf16.xpose.msra.mxu0 0
        %962 = vmatprep.subr.bf16.mxu0 0
        %963 = vmatpush1.bf16.xpose.msra.mxu0 0
        %964 = vmatprep.subr.bf16.mxu0 0
        %965 = vmatpush1.bf16.xpose.msra.mxu0 0
        %966 = vmatprep.mubr.bf16.mxu0 0
        %967 = vmatmul.mubr.bf16.gmra.mrb[0].mxu0 %v929
        %v968 = vpop.f32.mrb[0].mxu0
        %v969 = vadd.f32 0.0, %v968
        %v970 = vpop.f32.mrb[0].mxu0
        %v971 = vpop.f32.mrb[0].mxu0
        %v972 = vpop.f32.mrb[0].mxu0
        %973 = vdwg.mxu0
        %v974 = vmul.f32 %v969, 0.17677669
        %v975 = vsel %vm860, %v974, -inf
        %976 = vmax.xlane.f32.xlu0 %v975
        %v977 = vpop.xlane.xlu0 %976
        %v978 = vsub.f32 %v974, %v977
        %v979 = vmul.f32 %v978, 1.442695
        %v980 = vpow.pop %v979
        %v981 = vsel %vm860, %v980, 0.0
        %982 = vadd.xlane.f32.xlu0 %v981
        %v983 = vpop.xlane.xlu0 %982
        %v984 = vrcp.pop %v983
        %v985 = vmul.f32 %v980, %v984
        %v986 = vpack.c.bf16 %v985, %v985
        %988 = vrot.lane.b32.xlu0 %v873, 96
        %v989 = vpop.permute.xlu0 %988
        %v991 = vsel %vm860, %v986, 0
        %v994 = vsel %vm877, %v989, 0
        %996 = vmatprep.subr.bf16.mxu0 0
        %997 = vmatpush1.bf16.msra.mxu0 %v994
        %998 = vmatprep.subr.bf16.mxu0 0
        %999 = vmatpush1.bf16.msra.mxu0 0
        %1000 = vmatprep.subr.bf16.mxu0 0
        %1001 = vmatpush1.bf16.msra.mxu0 0
        %1002 = vmatprep.subr.bf16.mxu0 0
        %1003 = vmatpush1.bf16.msra.mxu0 0
        %1004 = vmatprep.subr.bf16.mxu0 0
        %1005 = vmatpush1.bf16.msra.mxu0 0
        %1006 = vmatprep.subr.bf16.mxu0 0
        %1007 = vmatpush1.bf16.msra.mxu0 0
        %1008 = vmatprep.subr.bf16.mxu0 0
        %1009 = vmatpush1.bf16.msra.mxu0 0
        %1010 = vmatprep.subr.bf16.mxu0 0
        %1011 = vmatpush1.bf16.msra.mxu0 0
        %1012 = vmatprep.subr.bf16.mxu0 0
        %1013 = vmatpush1.bf16.msra.mxu0 0
        %1014 = vmatprep.subr.bf16.mxu0 0
        %1015 = vmatpush1.bf16.msra.mxu0 0
        %1016 = vmatprep.subr.bf16.mxu0 0
        %1017 = vmatpush1.bf16.msra.mxu0 0
        %1018 = vmatprep.subr.bf16.mxu0 0
        %1019 = vmatpush1.bf16.msra.mxu0 0
        %1020 = vmatprep.subr.bf16.mxu0 0
        %1021 = vmatpush1.bf16.msra.mxu0 0
        %1022 = vmatprep.subr.bf16.mxu0 0
        %1023 = vmatpush1.bf16.msra.mxu0 0
        %1024 = vmatprep.subr.bf16.mxu0 0
        %1025 = vmatpush1.bf16.msra.mxu0 0
        %1026 = vmatprep.subr.bf16.mxu0 0
        %1027 = vmatpush1.bf16.msra.mxu0 0
        %1028 = vmatprep.mubr.bf16.mxu0 0
        %1029 = vmatmul.mubr.bf16.gmra.mrb[0].mxu0 %v991
        %v1030 = vpop.f32.mrb[0].mxu0
        %v1031 = vadd.f32 0.0, %v1030
        %v1032 = vpop.f32.mrb[0].mxu0
        %v1033 = vpop.f32.mrb[0].mxu0
        %v1034 = vpop.f32.mrb[0].mxu0
        %1035 = vdwg.mxu0
        %v1036 = vpack.c.bf16 %v1031, %v1031
        %v1041 = vunpack.c.l.b16 %v797
        %v1042 = vunpack.c.l.b16 %v798
        %v1043 = vunpack.c.l.b16 %v799
        %v1044 = vunpack.c.l.b16 %v800
        %v1045 = vpack.c.b16 %v1042, %v1041
        %v1046 = vpack.c.b16 %v1044, %v1043
        %v1050 = vsel %vm812, %v1036, 0
        %1052 = vmatprep.subr.bf16.mxu0 0
        %1053 = vmatpush1.bf16.msra.mxu0 %v1045
        %1054 = vmatprep.subr.bf16.mxu0 0
        %1055 = vmatpush1.bf16.msra.mxu0 %v1046
        %1056 = vmatprep.subr.bf16.mxu0 0
        %1057 = vmatpush1.bf16.msra.mxu0 0
        %1058 = vmatprep.subr.bf16.mxu0 0
        %1059 = vmatpush1.bf16.msra.mxu0 0
        %1060 = vmatprep.subr.bf16.mxu0 0
        %1061 = vmatpush1.bf16.msra.mxu0 0
        %1062 = vmatprep.subr.bf16.mxu0 0
        %1063 = vmatpush1.bf16.msra.mxu0 0
        %1064 = vmatprep.subr.bf16.mxu0 0
        %1065 = vmatpush1.bf16.msra.mxu0 0
        %1066 = vmatprep.subr.bf16.mxu0 0
        %1067 = vmatpush1.bf16.msra.mxu0 0
        %1068 = vmatprep.subr.bf16.mxu0 0
        %1069 = vmatpush1.bf16.msra.mxu0 0
        %1070 = vmatprep.subr.bf16.mxu0 0
        %1071 = vmatpush1.bf16.msra.mxu0 0
        %1072 = vmatprep.subr.bf16.mxu0 0
        %1073 = vmatpush1.bf16.msra.mxu0 0
        %1074 = vmatprep.subr.bf16.mxu0 0
        %1075 = vmatpush1.bf16.msra.mxu0 0
        %1076 = vmatprep.subr.bf16.mxu0 0
        %1077 = vmatpush1.bf16.msra.mxu0 0
        %1078 = vmatprep.subr.bf16.mxu0 0
        %1079 = vmatpush1.bf16.msra.mxu0 0
        %1080 = vmatprep.subr.bf16.mxu0 0
        %1081 = vmatpush1.bf16.msra.mxu0 0
        %1082 = vmatprep.subr.bf16.mxu0 0
        %1083 = vmatpush1.bf16.msra.mxu0 0
        %1084 = vmatprep.mubr.bf16.mxu0 0
        %1085 = vmatmul.mubr.bf16.gmra.mrb[0].mxu0 %v1050
        %v1086 = vpop.f32.mrb[0].mxu0
        %v1087 = vadd.f32 0.0, %v1086
        %v1088 = vpop.f32.mrb[0].mxu0
        %v1089 = vpop.f32.mrb[0].mxu0
        %v1090 = vpop.f32.mrb[0].mxu0
        %1091 = vdwg.mxu0
        %v1096 = vunpack.c.l.b16 %v793
        %v1097 = vunpack.c.l.b16 %v794
        %v1098 = vunpack.c.l.b16 %v795
        %v1099 = vunpack.c.l.b16 %v796
        %v1100 = vpack.c.b16 %v1097, %v1096
        %v1101 = vpack.c.b16 %v1099, %v1098
        %v1105 = vsel %vm812, %v921, 0
        %1107 = vmatprep.subr.bf16.mxu0 0
        %1108 = vmatpush1.bf16.msra.mxu0 %v1100
        %1109 = vmatprep.subr.bf16.mxu0 0
        %1110 = vmatpush1.bf16.msra.mxu0 %v1101
        %1111 = vmatprep.subr.bf16.mxu0 0
        %1112 = vmatpush1.bf16.msra.mxu0 0
        %1113 = vmatprep.subr.bf16.mxu0 0
        %1114 = vmatpush1.bf16.msra.mxu0 0
        %1115 = vmatprep.subr.bf16.mxu0 0
        %1116 = vmatpush1.bf16.msra.mxu0 0
        %1117 = vmatprep.subr.bf16.mxu0 0
        %1118 = vmatpush1.bf16.msra.mxu0 0
        %1119 = vmatprep.subr.bf16.mxu0 0
        %1120 = vmatpush1.bf16.msra.mxu0 0
        %1121 = vmatprep.subr.bf16.mxu0 0
        %1122 = vmatpush1.bf16.msra.mxu0 0
        %1123 = vmatprep.subr.bf16.mxu0 0
        %1124 = vmatpush1.bf16.msra.mxu0 0
        %1125 = vmatprep.subr.bf16.mxu0 0
        %1126 = vmatpush1.bf16.msra.mxu0 0
        %1127 = vmatprep.subr.bf16.mxu0 0
        %1128 = vmatpush1.bf16.msra.mxu0 0
        %1129 = vmatprep.subr.bf16.mxu0 0
        %1130 = vmatpush1.bf16.msra.mxu0 0
        %1131 = vmatprep.subr.bf16.mxu0 0
        %1132 = vmatpush1.bf16.msra.mxu0 0
        %1133 = vmatprep.subr.bf16.mxu0 0
        %1134 = vmatpush1.bf16.msra.mxu0 0
        %1135 = vmatprep.subr.bf16.mxu0 0
        %1136 = vmatpush1.bf16.msra.mxu0 0
        %1137 = vmatprep.subr.bf16.mxu0 0
        %1138 = vmatpush1.bf16.msra.mxu0 0
        %1139 = vmatprep.mubr.bf16.mxu0 0
        %1140 = vmatmul.mubr.bf16.gmra.mrb[0].mxu0 %v1105
        %v1141 = vpop.f32.mrb[0].mxu0
        %v1142 = vadd.f32 %v1087, %v1141
        %v1143 = vpop.f32.mrb[0].mxu0
        %v1144 = vpop.f32.mrb[0].mxu0
        %v1145 = vpop.f32.mrb[0].mxu0
        %1146 = vdwg.mxu0
        %1147 = vrot.lane.b32.xlu0 %v811, 64
        %v1148 = vpop.permute.xlu0 %1147
        %1149 = vrot.lane.b32.xlu0 %v810, 64
        %v1150 = vpop.permute.xlu0 %1149
        %v1152 = vsel %vm812, %v1148, 0
        %v1155 = vsel %vm812, %v1150, 0
        %1157 = vmatprep.subr.bf16.mxu0 0
        %1158 = vmatpush1.bf16.xpose.msra.mxu0 %v1155
        %1159 = vmatprep.subr.bf16.mxu0 0
        %1160 = vmatpush1.bf16.xpose.msra.mxu0 0
        %1161 = vmatprep.subr.bf16.mxu0 0
        %1162 = vmatpush1.bf16.xpose.msra.mxu0 0
        %1163 = vmatprep.subr.bf16.mxu0 0
        %1164 = vmatpush1.bf16.xpose.msra.mxu0 0
        %1165 = vmatprep.subr.bf16.mxu0 0
        %1166 = vmatpush1.bf16.xpose.msra.mxu0 0
        %1167 = vmatprep.subr.bf16.mxu0 0
        %1168 = vmatpush1.bf16.xpose.msra.mxu0 0
        %1169 = vmatprep.subr.bf16.mxu0 0
        %1170 = vmatpush1.bf16.xpose.msra.mxu0 0
        %1171 = vmatprep.subr.bf16.mxu0 0
        %1172 = vmatpush1.bf16.xpose.msra.mxu0 0
        %1173 = vmatprep.subr.bf16.mxu0 0
        %1174 = vmatpush1.bf16.xpose.msra.mxu0 0
        %1175 = vmatprep.subr.bf16.mxu0 0
        %1176 = vmatpush1.bf16.xpose.msra.mxu0 0
        %1177 = vmatprep.subr.bf16.mxu0 0
        %1178 = vmatpush1.bf16.xpose.msra.mxu0 0
        %1179 = vmatprep.subr.bf16.mxu0 0
        %1180 = vmatpush1.bf16.xpose.msra.mxu0 0
        %1181 = vmatprep.subr.bf16.mxu0 0
        %1182 = vmatpush1.bf16.xpose.msra.mxu0 0
        %1183 = vmatprep.subr.bf16.mxu0 0
        %1184 = vmatpush1.bf16.xpose.msra.mxu0 0
        %1185 = vmatprep.subr.bf16.mxu0 0
        %1186 = vmatpush1.bf16.xpose.msra.mxu0 0
        %1187 = vmatprep.subr.bf16.mxu0 0
        %1188 = vmatpush1.bf16.xpose.msra.mxu0 0
        %1189 = vmatprep.mubr.bf16.mxu0 0
        %1190 = vmatmul.mubr.bf16.gmra.mrb[0].mxu0 %v1152
        %v1191 = vpop.f32.mrb[0].mxu0
        %v1192 = vadd.f32 0.0, %v1191
        %v1193 = vpop.f32.mrb[0].mxu0
        %v1194 = vpop.f32.mrb[0].mxu0
        %v1195 = vpop.f32.mrb[0].mxu0
        %1196 = vdwg.mxu0
        %v1197 = vmul.f32 %v1192, 0.17677669
        %v1198 = vsel %vm860, %v1197, -inf
        %1199 = vmax.xlane.f32.xlu0 %v1198
        %v1200 = vpop.xlane.xlu0 %1199
        %v1201 = vsub.f32 %v1197, %v1200
        %v1202 = vmul.f32 %v1201, 1.442695
        %v1203 = vpow.pop %v1202
        %v1204 = vsel %vm860, %v1203, 0.0
        %1205 = vadd.xlane.f32.xlu0 %v1204
        %v1206 = vpop.xlane.xlu0 %1205
        %v1207 = vrcp.pop %v1206
        %v1208 = vmul.f32 %v1203, %v1207
        %v1209 = vpack.c.bf16 %v1208, %v1208
        %1210 = vrot.lane.b32.xlu0 %v873, 64
        %v1211 = vpop.permute.xlu0 %1210
        %v1213 = vsel %vm860, %v1209, 0
        %v1216 = vsel %vm877, %v1211, 0
        %1218 = vmatprep.subr.bf16.mxu0 0
        %1219 = vmatpush1.bf16.msra.mxu0 %v1216
        %1220 = vmatprep.subr.bf16.mxu0 0
        %1221 = vmatpush1.bf16.msra.mxu0 0
        %1222 = vmatprep.subr.bf16.mxu0 0
        %1223 = vmatpush1.bf16.msra.mxu0 0
        %1224 = vmatprep.subr.bf16.mxu0 0
        %1225 = vmatpush1.bf16.msra.mxu0 0
        %1226 = vmatprep.subr.bf16.mxu0 0
        %1227 = vmatpush1.bf16.msra.mxu0 0
        %1228 = vmatprep.subr.bf16.mxu0 0
        %1229 = vmatpush1.bf16.msra.mxu0 0
        %1230 = vmatprep.subr.bf16.mxu0 0
        %1231 = vmatpush1.bf16.msra.mxu0 0
        %1232 = vmatprep.subr.bf16.mxu0 0
        %1233 = vmatpush1.bf16.msra.mxu0 0
        %1234 = vmatprep.subr.bf16.mxu0 0
        %1235 = vmatpush1.bf16.msra.mxu0 0
        %1236 = vmatprep.subr.bf16.mxu0 0
        %1237 = vmatpush1.bf16.msra.mxu0 0
        %1238 = vmatprep.subr.bf16.mxu0 0
        %1239 = vmatpush1.bf16.msra.mxu0 0
        %1240 = vmatprep.subr.bf16.mxu0 0
        %1241 = vmatpush1.bf16.msra.mxu0 0
        %1242 = vmatprep.subr.bf16.mxu0 0
        %1243 = vmatpush1.bf16.msra.mxu0 0
        %1244 = vmatprep.subr.bf16.mxu0 0
        %1245 = vmatpush1.bf16.msra.mxu0 0
        %1246 = vmatprep.subr.bf16.mxu0 0
        %1247 = vmatpush1.bf16.msra.mxu0 0
        %1248 = vmatprep.subr.bf16.mxu0 0
        %1249 = vmatpush1.bf16.msra.mxu0 0
        %1250 = vmatprep.mubr.bf16.mxu0 0
        %1251 = vmatmul.mubr.bf16.gmra.mrb[0].mxu0 %v1213
        %v1252 = vpop.f32.mrb[0].mxu0
        %v1253 = vadd.f32 0.0, %v1252
        %v1254 = vpop.f32.mrb[0].mxu0
        %v1255 = vpop.f32.mrb[0].mxu0
        %v1256 = vpop.f32.mrb[0].mxu0
        %1257 = vdwg.mxu0
        %v1258 = vpack.c.bf16 %v1253, %v1253
        %v1263 = vunpack.c.l.b16 %v801
        %v1264 = vunpack.c.l.b16 %v802
        %v1265 = vunpack.c.l.b16 %v803
        %v1266 = vunpack.c.l.b16 %v804
        %v1267 = vpack.c.b16 %v1264, %v1263
        %v1268 = vpack.c.b16 %v1266, %v1265
        %v1272 = vsel %vm812, %v1258, 0
        %1274 = vmatprep.subr.bf16.mxu0 0
        %1275 = vmatpush1.bf16.msra.mxu0 %v1267
        %1276 = vmatprep.subr.bf16.mxu0 0
        %1277 = vmatpush1.bf16.msra.mxu0 %v1268
        %1278 = vmatprep.subr.bf16.mxu0 0
        %1279 = vmatpush1.bf16.msra.mxu0 0
        %1280 = vmatprep.subr.bf16.mxu0 0
        %1281 = vmatpush1.bf16.msra.mxu0 0
        %1282 = vmatprep.subr.bf16.mxu0 0
        %1283 = vmatpush1.bf16.msra.mxu0 0
        %1284 = vmatprep.subr.bf16.mxu0 0
        %1285 = vmatpush1.bf16.msra.mxu0 0
        %1286 = vmatprep.subr.bf16.mxu0 0
        %1287 = vmatpush1.bf16.msra.mxu0 0
        %1288 = vmatprep.subr.bf16.mxu0 0
        %1289 = vmatpush1.bf16.msra.mxu0 0
        %1290 = vmatprep.subr.bf16.mxu0 0
        %1291 = vmatpush1.bf16.msra.mxu0 0
        %1292 = vmatprep.subr.bf16.mxu0 0
        %1293 = vmatpush1.bf16.msra.mxu0 0
        %1294 = vmatprep.subr.bf16.mxu0 0
        %1295 = vmatpush1.bf16.msra.mxu0 0
        %1296 = vmatprep.subr.bf16.mxu0 0
        %1297 = vmatpush1.bf16.msra.mxu0 0
        %1298 = vmatprep.subr.bf16.mxu0 0
        %1299 = vmatpush1.bf16.msra.mxu0 0
        %1300 = vmatprep.subr.bf16.mxu0 0
        %1301 = vmatpush1.bf16.msra.mxu0 0
        %1302 = vmatprep.subr.bf16.mxu0 0
        %1303 = vmatpush1.bf16.msra.mxu0 0
        %1304 = vmatprep.subr.bf16.mxu0 0
        %1305 = vmatpush1.bf16.msra.mxu0 0
        %1306 = vmatprep.mubr.bf16.mxu0 0
        %1307 = vmatmul.mubr.bf16.gmra.mrb[0].mxu0 %v1272
        %v1308 = vpop.f32.mrb[0].mxu0
        %v1309 = vadd.f32 0.0, %v1308
        %v1310 = vpop.f32.mrb[0].mxu0
        %v1311 = vpop.f32.mrb[0].mxu0
        %v1312 = vpop.f32.mrb[0].mxu0
        %1313 = vdwg.mxu0
        %v1314 = vadd.f32 %v1142, %v1309
        %1315 = vrot.lane.b32.xlu0 %v811, 32
        %v1316 = vpop.permute.xlu0 %1315
        %1317 = vrot.lane.b32.xlu0 %v810, 32
        %v1318 = vpop.permute.xlu0 %1317
        %v1320 = vsel %vm812, %v1316, 0
        %v1323 = vsel %vm812, %v1318, 0
        %1325 = vmatprep.subr.bf16.mxu0 0
        %1326 = vmatpush1.bf16.xpose.msra.mxu0 %v1323
        %1327 = vmatprep.subr.bf16.mxu0 0
        %1328 = vmatpush1.bf16.xpose.msra.mxu0 0
        %1329 = vmatprep.subr.bf16.mxu0 0
        %1330 = vmatpush1.bf16.xpose.msra.mxu0 0
        %1331 = vmatprep.subr.bf16.mxu0 0
        %1332 = vmatpush1.bf16.xpose.msra.mxu0 0
        %1333 = vmatprep.subr.bf16.mxu0 0
        %1334 = vmatpush1.bf16.xpose.msra.mxu0 0
        %1335 = vmatprep.subr.bf16.mxu0 0
        %1336 = vmatpush1.bf16.xpose.msra.mxu0 0
        %1337 = vmatprep.subr.bf16.mxu0 0
        %1338 = vmatpush1.bf16.xpose.msra.mxu0 0
        %1339 = vmatprep.subr.bf16.mxu0 0
        %1340 = vmatpush1.bf16.xpose.msra.mxu0 0
        %1341 = vmatprep.subr.bf16.mxu0 0
        %1342 = vmatpush1.bf16.xpose.msra.mxu0 0
        %1343 = vmatprep.subr.bf16.mxu0 0
        %1344 = vmatpush1.bf16.xpose.msra.mxu0 0
        %1345 = vmatprep.subr.bf16.mxu0 0
        %1346 = vmatpush1.bf16.xpose.msra.mxu0 0
        %1347 = vmatprep.subr.bf16.mxu0 0
        %1348 = vmatpush1.bf16.xpose.msra.mxu0 0
        %1349 = vmatprep.subr.bf16.mxu0 0
        %1350 = vmatpush1.bf16.xpose.msra.mxu0 0
        %1351 = vmatprep.subr.bf16.mxu0 0
        %1352 = vmatpush1.bf16.xpose.msra.mxu0 0
        %1353 = vmatprep.subr.bf16.mxu0 0
        %1354 = vmatpush1.bf16.xpose.msra.mxu0 0
        %1355 = vmatprep.subr.bf16.mxu0 0
        %1356 = vmatpush1.bf16.xpose.msra.mxu0 0
        %1357 = vmatprep.mubr.bf16.mxu0 0
        %1358 = vmatmul.mubr.bf16.gmra.mrb[0].mxu0 %v1320
        %v1359 = vpop.f32.mrb[0].mxu0
        %v1360 = vadd.f32 0.0, %v1359
        %v1361 = vpop.f32.mrb[0].mxu0
        %v1362 = vpop.f32.mrb[0].mxu0
        %v1363 = vpop.f32.mrb[0].mxu0
        %1364 = vdwg.mxu0
        %v1365 = vmul.f32 %v1360, 0.17677669
        %v1366 = vsel %vm860, %v1365, -inf
        %1367 = vmax.xlane.f32.xlu0 %v1366
        %v1368 = vpop.xlane.xlu0 %1367
        %v1369 = vsub.f32 %v1365, %v1368
        %v1370 = vmul.f32 %v1369, 1.442695
        %v1371 = vpow.pop %v1370
        %v1372 = vsel %vm860, %v1371, 0.0
        %1373 = vadd.xlane.f32.xlu0 %v1372
        %v1374 = vpop.xlane.xlu0 %1373
        %v1375 = vrcp.pop %v1374
        %v1376 = vmul.f32 %v1371, %v1375
        %v1377 = vpack.c.bf16 %v1376, %v1376
        %1378 = vrot.lane.b32.xlu0 %v873, 32
        %v1379 = vpop.permute.xlu0 %1378
        %v1381 = vsel %vm860, %v1377, 0
        %v1384 = vsel %vm877, %v1379, 0
        %1386 = vmatprep.subr.bf16.mxu0 0
        %1387 = vmatpush1.bf16.msra.mxu0 %v1384
        %1388 = vmatprep.subr.bf16.mxu0 0
        %1389 = vmatpush1.bf16.msra.mxu0 0
        %1390 = vmatprep.subr.bf16.mxu0 0
        %1391 = vmatpush1.bf16.msra.mxu0 0
        %1392 = vmatprep.subr.bf16.mxu0 0
        %1393 = vmatpush1.bf16.msra.mxu0 0
        %1394 = vmatprep.subr.bf16.mxu0 0
        %1395 = vmatpush1.bf16.msra.mxu0 0
        %1396 = vmatprep.subr.bf16.mxu0 0
        %1397 = vmatpush1.bf16.msra.mxu0 0
        %1398 = vmatprep.subr.bf16.mxu0 0
        %1399 = vmatpush1.bf16.msra.mxu0 0
        %1400 = vmatprep.subr.bf16.mxu0 0
        %1401 = vmatpush1.bf16.msra.mxu0 0
        %1402 = vmatprep.subr.bf16.mxu0 0
        %1403 = vmatpush1.bf16.msra.mxu0 0
        %1404 = vmatprep.subr.bf16.mxu0 0
        %1405 = vmatpush1.bf16.msra.mxu0 0
        %1406 = vmatprep.subr.bf16.mxu0 0
        %1407 = vmatpush1.bf16.msra.mxu0 0
        %1408 = vmatprep.subr.bf16.mxu0 0
        %1409 = vmatpush1.bf16.msra.mxu0 0
        %1410 = vmatprep.subr.bf16.mxu0 0
        %1411 = vmatpush1.bf16.msra.mxu0 0
        %1412 = vmatprep.subr.bf16.mxu0 0
        %1413 = vmatpush1.bf16.msra.mxu0 0
        %1414 = vmatprep.subr.bf16.mxu0 0
        %1415 = vmatpush1.bf16.msra.mxu0 0
        %1416 = vmatprep.subr.bf16.mxu0 0
        %1417 = vmatpush1.bf16.msra.mxu0 0
        %1418 = vmatprep.mubr.bf16.mxu0 0
        %1419 = vmatmul.mubr.bf16.gmra.mrb[0].mxu0 %v1381
        %v1420 = vpop.f32.mrb[0].mxu0
        %v1421 = vadd.f32 0.0, %v1420
        %v1422 = vpop.f32.mrb[0].mxu0
        %v1423 = vpop.f32.mrb[0].mxu0
        %v1424 = vpop.f32.mrb[0].mxu0
        %1425 = vdwg.mxu0
        %v1426 = vpack.c.bf16 %v1421, %v1421
        %v1431 = vunpack.c.l.b16 %v805
        %v1432 = vunpack.c.l.b16 %v806
        %v1433 = vunpack.c.l.b16 %v807
        %v1434 = vunpack.c.l.b16 %v808
        %v1435 = vpack.c.b16 %v1432, %v1431
        %v1436 = vpack.c.b16 %v1434, %v1433
        %v1440 = vsel %vm812, %v1426, 0
        %1442 = vmatprep.subr.bf16.mxu0 0
        %1443 = vmatpush1.bf16.msra.mxu0 %v1435
        %1444 = vmatprep.subr.bf16.mxu0 0
        %1445 = vmatpush1.bf16.msra.mxu0 %v1436
        %1446 = vmatprep.subr.bf16.mxu0 0
        %1447 = vmatpush1.bf16.msra.mxu0 0
        %1448 = vmatprep.subr.bf16.mxu0 0
        %1449 = vmatpush1.bf16.msra.mxu0 0
        %1450 = vmatprep.subr.bf16.mxu0 0
        %1451 = vmatpush1.bf16.msra.mxu0 0
        %1452 = vmatprep.subr.bf16.mxu0 0
        %1453 = vmatpush1.bf16.msra.mxu0 0
        %1454 = vmatprep.subr.bf16.mxu0 0
        %1455 = vmatpush1.bf16.msra.mxu0 0
        %1456 = vmatprep.subr.bf16.mxu0 0
        %1457 = vmatpush1.bf16.msra.mxu0 0
        %1458 = vmatprep.subr.bf16.mxu0 0
        %1459 = vmatpush1.bf16.msra.mxu0 0
        %1460 = vmatprep.subr.bf16.mxu0 0
        %1461 = vmatpush1.bf16.msra.mxu0 0
        %1462 = vmatprep.subr.bf16.mxu0 0
        %1463 = vmatpush1.bf16.msra.mxu0 0
        %1464 = vmatprep.subr.bf16.mxu0 0
        %1465 = vmatpush1.bf16.msra.mxu0 0
        %1466 = vmatprep.subr.bf16.mxu0 0
        %1467 = vmatpush1.bf16.msra.mxu0 0
        %1468 = vmatprep.subr.bf16.mxu0 0
        %1469 = vmatpush1.bf16.msra.mxu0 0
        %1470 = vmatprep.subr.bf16.mxu0 0
        %1471 = vmatpush1.bf16.msra.mxu0 0
        %1472 = vmatprep.subr.bf16.mxu0 0
        %1473 = vmatpush1.bf16.msra.mxu0 0
        %1474 = vmatprep.mubr.bf16.mxu0 0
        %1475 = vmatmul.mubr.bf16.gmra.mrb[0].mxu0 %v1440
        %v1476 = vpop.f32.mrb[0].mxu0
        %v1477 = vadd.f32 0.0, %v1476
        %v1478 = vpop.f32.mrb[0].mxu0
        %v1479 = vpop.f32.mrb[0].mxu0
        %v1480 = vpop.f32.mrb[0].mxu0
        %1481 = vdwg.mxu0
        %v1482 = vadd.f32 %v1314, %v1477
        %v1484 = vlaneseq
        %v1485 = vshrl.u32 %v1484, 7
        %v1486 = vsub.s32 0, %v1485
        %v1487 = vrot.slane %v809, %v1486
        %v1489 = vadd.f32 %v1482, %v1487
        %v1490 = vld [vmem:[%s5] sm:$0x1]
        %v1491 = vld [vmem:[%s6] sm:$0x1]
        %v1492 = vadd.f32 %v533, %v1489
        %1493 = vadd.xlane.f32.xlu0 %v1492
        %v1494 = vpop.xlane.xlu0 %1493
        %v1495 = vrcp.pop 128.0
        %v1496 = vmul.f32 %v1494, %v1495
        %v1497 = vsub.f32 %v1492, %v1496
        %v1498 = vmul.f32 %v1497, %v1497
        %1499 = vadd.xlane.f32.xlu0 %v1498
        %v1500 = vpop.xlane.xlu0 %1499
        %v1501 = vmul.f32 %v1500, %v1495
        %v1502 = vadd.f32 %v1501, 1e-05
        %v1503 = vrsqrt.pop %v1502
        %v1504 = vmul.f32 %v1497, %v1503
        %v1506 = vlaneseq
        %v1507 = vshrl.u32 %v1506, 7
        %v1508 = vsub.s32 0, %v1507
        %v1509 = vrot.slane %v1490, %v1508
        %v1511 = vmul.f32 %v1504, %v1509
        %v1513 = vlaneseq
        %v1514 = vshrl.u32 %v1513, 7
        %v1515 = vsub.s32 0, %v1514
        %v1516 = vrot.slane %v1491, %v1515
        %v1518 = vadd.f32 %v1511, %v1516
        %v1519 = vld [vmem:[#allocation8] sm:$0xff]
        %v1520 = vld [vmem:[#allocation8 + $0x8] sm:$0xff]
        %v1521 = vld [vmem:[#allocation8 + $0x10] sm:$0xff]
        %v1522 = vld [vmem:[#allocation8 + $0x18] sm:$0xff]
        %v1523 = vld [vmem:[#allocation8 + $0x20] sm:$0xff]
        %v1524 = vld [vmem:[#allocation8 + $0x28] sm:$0xff]
        %v1525 = vld [vmem:[#allocation8 + $0x30] sm:$0xff]
        %v1526 = vld [vmem:[#allocation8 + $0x38] sm:$0xff]
        %v1527 = vld [vmem:[#allocation8 + $0x40] sm:$0xff]
        %v1528 = vld [vmem:[#allocation8 + $0x48] sm:$0xff]
        %v1529 = vld [vmem:[#allocation8 + $0x50] sm:$0xff]
        %v1530 = vld [vmem:[#allocation8 + $0x58] sm:$0xff]
        %v1531 = vld [vmem:[#allocation8 + $0x60] sm:$0xff]
        %v1532 = vld [vmem:[#allocation8 + $0x68] sm:$0xff]
        %v1533 = vld [vmem:[#allocation8 + $0x70] sm:$0xff]
        %v1534 = vld [vmem:[#allocation8 + $0x78] sm:$0xff]
        %v1535 = vpack.c.bf16 %v1518, %v1518
        %v1536 = vld [vmem:[%s8] sm:$0x3]
        %v1538 = vlaneseq
        %v1539 = vshrl.u32 %v1538, 7
        %v1540 = vsub.s32 0, %v1539
        %v1541 = vrot.slane %v1536, %v1540
        %v1542 = vlaneseq
        %v1543 = vshrl.u32 %v1542, 7
        %v1544 = vsub.s32 1, %v1543
        %v1545 = vrot.slane %v1536, %v1544
        %v1564 = vunpack.c.l.b16 %v1519
        %v1565 = vunpack.c.h.b16 %v1519
        %v1566 = vunpack.c.l.b16 %v1520
        %v1567 = vunpack.c.h.b16 %v1520
        %v1568 = vunpack.c.l.b16 %v1521
        %v1569 = vunpack.c.h.b16 %v1521
        %v1570 = vunpack.c.l.b16 %v1522
        %v1571 = vunpack.c.h.b16 %v1522
        %v1572 = vunpack.c.l.b16 %v1523
        %v1573 = vunpack.c.h.b16 %v1523
        %v1574 = vunpack.c.l.b16 %v1524
        %v1575 = vunpack.c.h.b16 %v1524
        %v1576 = vunpack.c.l.b16 %v1525
        %v1577 = vunpack.c.h.b16 %v1525
        %v1578 = vunpack.c.l.b16 %v1526
        %v1579 = vunpack.c.h.b16 %v1526
        %v1580 = vunpack.c.l.b16 %v1527
        %v1581 = vunpack.c.h.b16 %v1527
        %v1582 = vunpack.c.l.b16 %v1528
        %v1583 = vunpack.c.h.b16 %v1528
        %v1584 = vunpack.c.l.b16 %v1529
        %v1585 = vunpack.c.h.b16 %v1529
        %v1586 = vunpack.c.l.b16 %v1530
        %v1587 = vunpack.c.h.b16 %v1530
        %v1588 = vunpack.c.l.b16 %v1531
        %v1589 = vunpack.c.h.b16 %v1531
        %v1590 = vunpack.c.l.b16 %v1532
        %v1591 = vunpack.c.h.b16 %v1532
        %v1592 = vunpack.c.l.b16 %v1533
        %v1593 = vunpack.c.h.b16 %v1533
        %v1594 = vunpack.c.l.b16 %v1534
        %v1595 = vunpack.c.h.b16 %v1534
        %v1596 = vpack.c.b16 %v1566, %v1564
        %v1597 = vpack.c.b16 %v1567, %v1565
        %v1598 = vpack.c.b16 %v1570, %v1568
        %v1599 = vpack.c.b16 %v1571, %v1569
        %v1600 = vpack.c.b16 %v1574, %v1572
        %v1601 = vpack.c.b16 %v1575, %v1573
        %v1602 = vpack.c.b16 %v1578, %v1576
        %v1603 = vpack.c.b16 %v1579, %v1577
        %v1604 = vpack.c.b16 %v1582, %v1580
        %v1605 = vpack.c.b16 %v1583, %v1581
        %v1606 = vpack.c.b16 %v1586, %v1584
        %v1607 = vpack.c.b16 %v1587, %v1585
        %v1608 = vpack.c.b16 %v1590, %v1588
        %v1609 = vpack.c.b16 %v1591, %v1589
        %v1610 = vpack.c.b16 %v1594, %v1592
        %v1611 = vpack.c.b16 %v1595, %v1593
        %1628 = vmatprep.subr.bf16.mxu0 %v1597
        %1629 = vmatpush1.bf16.msra.mxu0 %v1596
        %1630 = vmatprep.subr.bf16.mxu0 %v1599
        %1631 = vmatpush1.bf16.msra.mxu0 %v1598
        %1632 = vmatprep.subr.bf16.mxu0 %v1601
        %1633 = vmatpush1.bf16.msra.mxu0 %v1600
        %1634 = vmatprep.subr.bf16.mxu0 %v1603
        %1635 = vmatpush1.bf16.msra.mxu0 %v1602
        %1636 = vmatprep.subr.bf16.mxu0 %v1605
        %1637 = vmatpush1.bf16.msra.mxu0 %v1604
        %1638 = vmatprep.subr.bf16.mxu0 %v1607
        %1639 = vmatpush1.bf16.msra.mxu0 %v1606
        %1640 = vmatprep.subr.bf16.mxu0 %v1609
        %1641 = vmatpush1.bf16.msra.mxu0 %v1608
        %1642 = vmatprep.subr.bf16.mxu0 %v1611
        %1643 = vmatpush1.bf16.msra.mxu0 %v1610
        %1644 = vmatprep.subr.bf16.mxu0 0
        %1645 = vmatpush1.bf16.msra.mxu0 0
        %1646 = vmatprep.subr.bf16.mxu0 0
        %1647 = vmatpush1.bf16.msra.mxu0 0
        %1648 = vmatprep.subr.bf16.mxu0 0
        %1649 = vmatpush1.bf16.msra.mxu0 0
        %1650 = vmatprep.subr.bf16.mxu0 0
        %1651 = vmatpush1.bf16.msra.mxu0 0
        %1652 = vmatprep.subr.bf16.mxu0 0
        %1653 = vmatpush1.bf16.msra.mxu0 0
        %1654 = vmatprep.subr.bf16.mxu0 0
        %1655 = vmatpush1.bf16.msra.mxu0 0
        %1656 = vmatprep.subr.bf16.mxu0 0
        %1657 = vmatpush1.bf16.msra.mxu0 0
        %1658 = vmatprep.subr.bf16.mxu0 0
        %1659 = vmatpush1.bf16.msra.mxu0 0
        %1660 = vmatprep.mubr.bf16.mxu0 0
        %1661 = vmatmul.mubr.bf16.gmra.mrb[0].mxu0 %v1535
        %v1662 = vpop.f32.mrb[0].mxu0
        %v1663 = vadd.f32 %v1541, %v1662
        %v1664 = vpop.f32.mrb[0].mxu0
        %v1665 = vadd.f32 %v1545, %v1664
        %v1666 = vpop.f32.mrb[0].mxu0
        %v1667 = vpop.f32.mrb[0].mxu0
        %1668 = vdwg.mxu0
        %v1669 = vmax.f32 %v1663, 0.0
        %v1670 = vmax.f32 %v1665, 0.0
        %v1671 = vld [vmem:[#allocation10] sm:$0xf]
        %v1672 = vld [vmem:[#allocation10 + $0x4] sm:$0xf]
        %v1673 = vld [vmem:[#allocation10 + $0x8] sm:$0xf]
        %v1674 = vld [vmem:[#allocation10 + $0xc] sm:$0xf]
        %v1675 = vld [vmem:[#allocation10 + $0x10] sm:$0xf]
        %v1676 = vld [vmem:[#allocation10 + $0x14] sm:$0xf]
        %v1677 = vld [vmem:[#allocation10 + $0x18] sm:$0xf]
        %v1678 = vld [vmem:[#allocation10 + $0x1c] sm:$0xf]
        %v1679 = vld [vmem:[#allocation10 + $0x20] sm:$0xf]
        %v1680 = vld [vmem:[#allocation10 + $0x24] sm:$0xf]
        %v1681 = vld [vmem:[#allocation10 + $0x28] sm:$0xf]
        %v1682 = vld [vmem:[#allocation10 + $0x2c] sm:$0xf]
        %v1683 = vld [vmem:[#allocation10 + $0x30] sm:$0xf]
        %v1684 = vld [vmem:[#allocation10 + $0x34] sm:$0xf]
        %v1685 = vld [vmem:[#allocation10 + $0x38] sm:$0xf]
        %v1686 = vld [vmem:[#allocation10 + $0x3c] sm:$0xf]
        %v1687 = vld [vmem:[#allocation10 + $0x40] sm:$0xf]
        %v1688 = vld [vmem:[#allocation10 + $0x44] sm:$0xf]
        %v1689 = vld [vmem:[#allocation10 + $0x48] sm:$0xf]
        %v1690 = vld [vmem:[#allocation10 + $0x4c] sm:$0xf]
        %v1691 = vld [vmem:[#allocation10 + $0x50] sm:$0xf]
        %v1692 = vld [vmem:[#allocation10 + $0x54] sm:$0xf]
        %v1693 = vld [vmem:[#allocation10 + $0x58] sm:$0xf]
        %v1694 = vld [vmem:[#allocation10 + $0x5c] sm:$0xf]
        %v1695 = vld [vmem:[#allocation10 + $0x60] sm:$0xf]
        %v1696 = vld [vmem:[#allocation10 + $0x64] sm:$0xf]
        %v1697 = vld [vmem:[#allocation10 + $0x68] sm:$0xf]
        %v1698 = vld [vmem:[#allocation10 + $0x6c] sm:$0xf]
        %v1699 = vld [vmem:[#allocation10 + $0x70] sm:$0xf]
        %v1700 = vld [vmem:[#allocation10 + $0x74] sm:$0xf]
        %v1701 = vld [vmem:[#allocation10 + $0x78] sm:$0xf]
        %v1702 = vld [vmem:[#allocation10 + $0x7c] sm:$0xf]
        %v1703 = vpack.c.bf16 %v1669, %v1669
        %v1704 = vpack.c.bf16 %v1670, %v1670
        %v1705 = vld [vmem:[%s10] sm:$0x1]
        %v1707 = vlaneseq
        %v1708 = vshrl.u32 %v1707, 7
        %v1709 = vsub.s32 0, %v1708
        %v1710 = vrot.slane %v1705, %v1709
        %v1744 = vunpack.c.l.b16 %v1671
        %v1745 = vunpack.c.l.b16 %v1672
        %v1746 = vunpack.c.l.b16 %v1673
        %v1747 = vunpack.c.l.b16 %v1674
        %v1748 = vunpack.c.l.b16 %v1675
        %v1749 = vunpack.c.l.b16 %v1676
        %v1750 = vunpack.c.l.b16 %v1677
        %v1751 = vunpack.c.l.b16 %v1678
        %v1752 = vunpack.c.l.b16 %v1679
        %v1753 = vunpack.c.l.b16 %v1680
        %v1754 = vunpack.c.l.b16 %v1681
        %v1755 = vunpack.c.l.b16 %v1682
        %v1756 = vunpack.c.l.b16 %v1683
        %v1757 = vunpack.c.l.b16 %v1684
        %v1758 = vunpack.c.l.b16 %v1685
        %v1759 = vunpack.c.l.b16 %v1686
        %v1760 = vunpack.c.l.b16 %v1687
        %v1761 = vunpack.c.l.b16 %v1688
        %v1762 = vunpack.c.l.b16 %v1689
        %v1763 = vunpack.c.l.b16 %v1690
        %v1764 = vunpack.c.l.b16 %v1691
        %v1765 = vunpack.c.l.b16 %v1692
        %v1766 = vunpack.c.l.b16 %v1693
        %v1767 = vunpack.c.l.b16 %v1694
        %v1768 = vunpack.c.l.b16 %v1695
        %v1769 = vunpack.c.l.b16 %v1696
        %v1770 = vunpack.c.l.b16 %v1697
        %v1771 = vunpack.c.l.b16 %v1698
        %v1772 = vunpack.c.l.b16 %v1699
        %v1773 = vunpack.c.l.b16 %v1700
        %v1774 = vunpack.c.l.b16 %v1701
        %v1775 = vunpack.c.l.b16 %v1702
        %v1776 = vpack.c.b16 %v1745, %v1744
        %v1777 = vpack.c.b16 %v1747, %v1746
        %v1778 = vpack.c.b16 %v1749, %v1748
        %v1779 = vpack.c.b16 %v1751, %v1750
        %v1780 = vpack.c.b16 %v1753, %v1752
        %v1781 = vpack.c.b16 %v1755, %v1754
        %v1782 = vpack.c.b16 %v1757, %v1756
        %v1783 = vpack.c.b16 %v1759, %v1758
        %v1784 = vpack.c.b16 %v1761, %v1760
        %v1785 = vpack.c.b16 %v1763, %v1762
        %v1786 = vpack.c.b16 %v1765, %v1764
        %v1787 = vpack.c.b16 %v1767, %v1766
        %v1788 = vpack.c.b16 %v1769, %v1768
        %v1789 = vpack.c.b16 %v1771, %v1770
        %v1790 = vpack.c.b16 %v1773, %v1772
        %v1791 = vpack.c.b16 %v1775, %v1774
        %1808 = vmatprep.subr.bf16.mxu0 0
        %1809 = vmatpush1.bf16.msra.mxu0 %v1776
        %1810 = vmatprep.subr.bf16.mxu0 0
        %1811 = vmatpush1.bf16.msra.mxu0 %v1777
        %1812 = vmatprep.subr.bf16.mxu0 0
        %1813 = vmatpush1.bf16.msra.mxu0 %v1778
        %1814 = vmatprep.subr.bf16.mxu0 0
        %1815 = vmatpush1.bf16.msra.mxu0 %v1779
        %1816 = vmatprep.subr.bf16.mxu0 0
        %1817 = vmatpush1.bf16.msra.mxu0 %v1780
        %1818 = vmatprep.subr.bf16.mxu0 0
        %1819 = vmatpush1.bf16.msra.mxu0 %v1781
        %1820 = vmatprep.subr.bf16.mxu0 0
        %1821 = vmatpush1.bf16.msra.mxu0 %v1782
        %1822 = vmatprep.subr.bf16.mxu0 0
        %1823 = vmatpush1.bf16.msra.mxu0 %v1783
        %1824 = vmatprep.subr.bf16.mxu0 0
        %1825 = vmatpush1.bf16.msra.mxu0 %v1784
        %1826 = vmatprep.subr.bf16.mxu0 0
        %1827 = vmatpush1.bf16.msra.mxu0 %v1785
        %1828 = vmatprep.subr.bf16.mxu0 0
        %1829 = vmatpush1.bf16.msra.mxu0 %v1786
        %1830 = vmatprep.subr.bf16.mxu0 0
        %1831 = vmatpush1.bf16.msra.mxu0 %v1787
        %1832 = vmatprep.subr.bf16.mxu0 0
        %1833 = vmatpush1.bf16.msra.mxu0 %v1788
        %1834 = vmatprep.subr.bf16.mxu0 0
        %1835 = vmatpush1.bf16.msra.mxu0 %v1789
        %1836 = vmatprep.subr.bf16.mxu0 0
        %1837 = vmatpush1.bf16.msra.mxu0 %v1790
        %1838 = vmatprep.subr.bf16.mxu0 0
        %1839 = vmatpush1.bf16.msra.mxu0 %v1791
        %1840 = vmatprep.mubr.bf16.mxu0 %v1704
        %1841 = vmatmul.mubr.bf16.gmra.mrb[0].mxu0 %v1703
        %v1842 = vpop.f32.mrb[0].mxu0
        %v1843 = vadd.f32 %v1710, %v1842
        %v1844 = vpop.f32.mrb[0].mxu0
        %v1845 = vpop.f32.mrb[0].mxu0
        %v1846 = vpop.f32.mrb[0].mxu0
        %1847 = vdwg.mxu0
        %v1848 = vld [vmem:[%s11] sm:$0x1]
        %v1849 = vld [vmem:[%s12] sm:$0x1]
        %v1850 = vadd.f32 %v1518, %v1843
        %1851 = vadd.xlane.f32.xlu0 %v1850
        %v1852 = vpop.xlane.xlu0 %1851
        %v1853 = vmul.f32 %v1852, %v1495
        %v1854 = vsub.f32 %v1850, %v1853
        %v1855 = vmul.f32 %v1854, %v1854
        %1856 = vadd.xlane.f32.xlu0 %v1855
        %v1857 = vpop.xlane.xlu0 %1856
        %v1858 = vmul.f32 %v1857, %v1495
        %v1859 = vadd.f32 %v1858, 1e-05
        %v1860 = vrsqrt.pop %v1859
        %v1861 = vmul.f32 %v1854, %v1860
        %v1863 = vlaneseq
        %v1864 = vshrl.u32 %v1863, 7
        %v1865 = vsub.s32 0, %v1864
        %v1866 = vrot.slane %v1848, %v1865
        %v1868 = vmul.f32 %v1861, %v1866
        %v1870 = vlaneseq
        %v1871 = vshrl.u32 %v1870, 7
        %v1872 = vsub.s32 0, %v1871
        %v1873 = vrot.slane %v1849, %v1872
        %v1875 = vadd.f32 %v1868, %v1873
        %1876 = vst [vmem:[%s525] sm:$0xff] %v1875
        %s1877 = sand.u32 %s330, 1
        %s1878 = scalar_lea.sflag [#allocation4], %s1877
        %s1879 = sand.u32 %s330, 1
        %s1880 = smul.addr %s1879, 8
        %s1881 = scalar_lea.vmem [#allocation11], %s1880
        // Predicated region
        $region97: #{tpu_custom_call.1} parent=71 // pred_check
          %p1882 = pneg %p340
        $region98: #{tpu_custom_call.1} parent=71 // pred_check_branch
          %1884 = sbr.rel (%p1882) target = $region100
        $region99: #{tpu_custom_call.1} parent=71 // pred_region
          %s1886 = ssub.s32 128, 128
          %1887 = vsyncadd %s1878, %s1886
          %s1888 = smul.addr %s36, 128
          %s1889 = scalar_lea.hbm %s13, %s1888
          %s1891 = sshll.u32 %s1881, 4
          %s1892 = int_to_ptr.vmem [resolvable:$true] %s1891
          %1894 = dma.vmem_to_hbm [thread:$0]  %s1892, 128, %s1889, %s1878
        $region100: #{tpu_custom_call.1} parent=71 // pred_fallthru
          _
      $region72: #{tpu_custom_call.1} parent=5 // pred_fallthru
        _
      %p1895 = scmp.le.s32.totalorder 2, %s27
      // Predicated region
      $region101: #{tpu_custom_call.1} parent=5 // pred_check
        %p1896 = pneg %p1895
      $region102: #{tpu_custom_call.1} parent=5 // pred_check_branch
        %1898 = sbr.rel (%p1896) target = $region104
      $region103: #{tpu_custom_call.1} parent=5 // pred_region
        %s1899 = ssub.s32 %s27, 2
        // Predicated region
        $region105: #{tpu_custom_call.1} parent=103 // pred_check
          %p1900 = pneg %p346
        $region106: #{tpu_custom_call.1} parent=103 // pred_check_branch
          %1902 = sbr.rel (%p1900) target = $region108
        $region107: #{tpu_custom_call.1} parent=103 // pred_region
          %s1903 = sand.u32 %s331, 1
          %s1904 = scalar_lea.sflag [#allocation4], %s1903
          %s1905 = sand.u32 %s331, 1
          %s1906 = smul.addr %s1905, 8
          %s1907 = scalar_lea.vmem [#allocation11], %s1906
          %1908 = dma.done %s1904, 128
        $region108: #{tpu_custom_call.1} parent=103 // pred_fallthru
          _
      $region104: #{tpu_custom_call.1} parent=5 // pred_fallthru
        _
    $region6: #{tpu_custom_call.1} parent=1 // loop_footer
      %s31 = sadd.s32 1, %s27
    $region7: #{tpu_custom_call.1} parent=1 // loop_footer_branch
      %26 = sbr.rel target = $region3
    $region8: #{tpu_custom_call.1} parent=1 // loop_exit
      _
    %1909 = vsyncpa [#allocation3], 1
    %s1910 = scalar_lea.sflag [#allocation3], 1
    %1911 = vsyncpa %s1910, 1
    %1912 = vsyncpa [#allocation6], 1
    %1913 = vsyncpa [#allocation9], 1
    %1914 = vsyncpa [#allocation4], 1
    %s1915 = scalar_lea.sflag [#allocation4], 1
    %1916 = vsyncpa %s1915, 1

</llo_original>
